<compile_context>
chip_gen: v6e
topology: v6e:2x2x1
jax: 0.10.0
libtpu: 0.0.40
codegen_flags: <defaults>
</compile_context>

<pallas_src>
import functools

import jax
import jax.numpy as jnp
from jax.experimental import pallas as pl
from jax.experimental.pallas import tpu as pltpu

DIMS = [3, 128, 128, 256, 512]
BN_EPS = 1e-5


def fold_conv_bn(w, b, gamma, beta, mean, var, eps=BN_EPS):
    """Fold BatchNorm1d (eval) into a Conv1d(k=1) weight (cout, cin) and bias (cout,)."""
    scale = gamma * jax.lax.rsqrt(var + eps)        # (cout,)
    return w * scale[:, None], (b - mean) * scale + beta


def init_params(key, dims=DIMS):
    """Deterministic PyTorch-like init; BN folded with eval-default running stats.

    Layer 1 weights stay f32 (computed on the VPU); layers 2..4 weights are bf16
    (MXU operands). Biases stay f32, stored as (cout, 1) columns (channels-first).
    """
    params = []
    for li, (cin, cout) in enumerate(zip(dims[:-1], dims[1:])):
        key, kw, kb = jax.random.split(key, 3)
        bound = float(cin) ** -0.5
        # PyTorch Conv1d weight layout (cout, cin, 1) -> (cout, cin)
        w = jax.random.uniform(kw, (cout, cin), jnp.float32, -bound, bound)
        b = jax.random.uniform(kb, (cout,), jnp.float32, -bound, bound)
        # BN eval defaults: gamma=1, beta=0, running_mean=0, running_var=1.
        # Real checkpoints should pass their stats through fold_conv_bn instead.
        gamma = jnp.ones((cout,), jnp.float32)
        beta = jnp.zeros((cout,), jnp.float32)
        mean = jnp.zeros((cout,), jnp.float32)
        var = jnp.ones((cout,), jnp.float32)
        w_f, b_f = fold_conv_bn(w, b, gamma, beta, mean, var)
        w_dtype = jnp.float32 if li == 0 else jnp.bfloat16
        params.append((w_f.astype(w_dtype), b_f.reshape(cout, 1).astype(jnp.float32)))
    return params


def _pn_mlp_kernel(x_ref,
                   w1_ref, b1_ref,
                   w2_ref, b2_ref,
                   w3_ref, b3_ref,
                   w4_ref, b4_ref,
                   o_ref):
    """Per-point MLP for one (batch, point-tile): channels-first throughout.

    x_ref: (1, 3, tn) f32; weights w_k: (cout, cin); output o_ref: (1, 512, tn).
    """
    xt = x_ref[0].astype(jnp.float32)                     # (3, tn)
    w1 = w1_ref[...]                                      # (128, 3) f32

    # Layer 1 (3 -> 128) on the VPU: three broadcast FMAs, no K=3 MXU push.
    h = (w1[:, 0:1] * xt[0:1, :]
         + w1[:, 1:2] * xt[1:2, :]
         + w1[:, 2:3] * xt[2:3, :]
         + b1_ref[...])                                   # (128, tn) f32
    h = jnp.maximum(h, 0.0)

    # Layers 2-4 on the MXU: bf16 operands, f32 accumulation, f32 bias+ReLU.
    for w_ref, b_ref in ((w2_ref, b2_ref), (w3_ref, b3_ref), (w4_ref, b4_ref)):
        h = jnp.dot(w_ref[...], h.astype(jnp.bfloat16),
                    preferred_element_type=jnp.float32)   # (cout, tn) f32
        h = jnp.maximum(h + b_ref[...], 0.0)

    o_ref[0] = h.astype(o_ref.dtype)                      # (512, tn), already NCW layout


@functools.partial(jax.jit, static_argnames=("tn",))
def embeddings_forward(x, params, tn=512):
    """x: (B, N, 3) float32 -> (B, 512, N) float32 (matches the nn.Module)."""
    B, N, D = x.shape
    assert D == DIMS[0]
    assert tn % 128 == 0, "point tile must be lane-aligned (multiple of 128)"
    c_out = DIMS[-1]

    # Mirror the module's x.permute(0, 2, 1). This is a tiny (3-channel) tensor;
    # the expensive 512-channel output layout is produced directly by the kernel.
    x_t = jnp.transpose(x, (0, 2, 1))                     # (B, 3, N)

    in_specs = [pl.BlockSpec((1, D, tn), lambda b, j: (b, 0, j))]
    flat_args = [x_t]
    for w, b in params:
        # Constants: whole-array resident in VMEM, no per-step double buffering.
        in_specs.append(pl.BlockSpec(memory_space=pltpu.MemorySpace.VMEM))
        in_specs.append(pl.BlockSpec(memory_space=pltpu.MemorySpace.VMEM))
        flat_args += [w, b]

    M = B * N
    flops = 2 * M * sum(ci * co for ci, co in zip(DIMS[:-1], DIMS[1:]))
    bytes_accessed = (
        M * (D * 4 + c_out * 4)
        + sum(w.size * w.dtype.itemsize + b.size * 4 for w, b in params))

    out = pl.pallas_call(
        _pn_mlp_kernel,
        out_shape=jax.ShapeDtypeStruct((B, c_out, N), x.dtype),
        grid=(B, pl.cdiv(N, tn)),
        in_specs=in_specs,
        out_specs=pl.BlockSpec((1, c_out, tn), lambda b, j: (b, 0, j)),
        compiler_params=pltpu.CompilerParams(
            dimension_semantics=("parallel", "parallel")),
        cost_estimate=pl.CostEstimate(
            flops=flops, transcendentals=0, bytes_accessed=bytes_accessed),
    )(*flat_args)
    return out


def _reference(x, params):
    """Pure-JAX reference (f32 everywhere, same folded params)."""
    h = jnp.transpose(x, (0, 2, 1)).astype(jnp.float32)   # (B, 3, N)
    for w, b in params:
        h = jnp.einsum("oc,bcn->bon", w.astype(jnp.float32), h) + b[None, :, :]
        h = jnp.maximum(h, 0.0)
    return h


if __name__ == "__main__":
    key = jax.random.PRNGKey(0)
    k_param, k_x = jax.random.split(key)

    B, N, D = 2, 1024, 3                 # grid = (2, 2): 4 steps, keeps both v7x TCs busy
    x = jax.random.normal(k_x, (B, N, D), dtype=jnp.float32)
    params = init_params(k_param)

    out = embeddings_forward(x, params)
    out = jax.block_until_ready(out)

    assert out.shape == (B, DIMS[-1], N), out.shape
    assert out.dtype == jnp.float32
    assert bool(jnp.all(jnp.isfinite(out)))
    assert bool(jnp.all(out >= 0.0))     # final ReLU

    # Loose tolerance: kernel uses bf16 MXU operands with f32 accumulation.
    ref = _reference(x, params)
    assert bool(jnp.allclose(out, ref, rtol=1e-1, atol=1e-1)), \
        float(jnp.max(jnp.abs(out - ref)))

    print("KERNEL_OK")
</pallas_src>

<mosaic_0001>
module attributes {stable_mosaic.version = 11 : i64} {
  func.func @_pn_mlp_kernel(%arg0: i32, %arg1: i32, %arg2: memref<1x3x512xf32, #tpu.memory_space<vmem>>, %arg3: memref<128x3xf32, #tpu.memory_space<vmem>>, %arg4: memref<128x1xf32, #tpu.memory_space<vmem>>, %arg5: memref<128x128xbf16, #tpu.memory_space<vmem>>, %arg6: memref<128x1xf32, #tpu.memory_space<vmem>>, %arg7: memref<256x128xbf16, #tpu.memory_space<vmem>>, %arg8: memref<256x1xf32, #tpu.memory_space<vmem>>, %arg9: memref<512x256xbf16, #tpu.memory_space<vmem>>, %arg10: memref<512x1xf32, #tpu.memory_space<vmem>>, %arg11: memref<1x512x512xf32, #tpu.memory_space<vmem>>) attributes {dimension_semantics = [#tpu.dimension_semantics<parallel>, #tpu.dimension_semantics<parallel>], iteration_bounds = array<i64: 2, 2>, scalar_prefetch = 0 : i64, scratch_operands = 0 : i64, tpu.core_type = #tpu.core_type<tc>, window_params = [{transform_indices = @transform_0, window_bounds = array<i64: 1, 3, 512>}, {pipeline_mode = #tpu.pipeline_mode<synchronous>, transform_indices = @transform_1, window_bounds = array<i64: 128, 3>}, {pipeline_mode = #tpu.pipeline_mode<synchronous>, transform_indices = @transform_2, window_bounds = array<i64: 128, 1>}, {pipeline_mode = #tpu.pipeline_mode<synchronous>, transform_indices = @transform_3, window_bounds = array<i64: 128, 128>}, {pipeline_mode = #tpu.pipeline_mode<synchronous>, transform_indices = @transform_4, window_bounds = array<i64: 128, 1>}, {pipeline_mode = #tpu.pipeline_mode<synchronous>, transform_indices = @transform_5, window_bounds = array<i64: 256, 128>}, {pipeline_mode = #tpu.pipeline_mode<synchronous>, transform_indices = @transform_6, window_bounds = array<i64: 256, 1>}, {pipeline_mode = #tpu.pipeline_mode<synchronous>, transform_indices = @transform_7, window_bounds = array<i64: 512, 256>}, {pipeline_mode = #tpu.pipeline_mode<synchronous>, transform_indices = @transform_8, window_bounds = array<i64: 512, 1>}, {transform_indices = @transform_9, window_bounds = array<i64: 1, 512, 512>}]} {
    %c0 = arith.constant 0 : index
    %c0_0 = arith.constant 0 : index
    %c0_1 = arith.constant 0 : index
    %0 = vector.load %arg2[%c0, %c0_0, %c0_1] : memref<1x3x512xf32, #tpu.memory_space<vmem>>, vector<1x3x512xf32>
    %1 = vector.shape_cast %0 : vector<1x3x512xf32> to vector<3x512xf32>
    %c0_2 = arith.constant 0 : index
    %c0_3 = arith.constant 0 : index
    %2 = vector.load %arg3[%c0_2, %c0_3] : memref<128x3xf32, #tpu.memory_space<vmem>>, vector<128x3xf32>
    %3 = vector.extract_strided_slice %2 {offsets = [0, 0], sizes = [128, 1], strides = [1, 1]} : vector<128x3xf32> to vector<128x1xf32>
    %4 = vector.extract_strided_slice %1 {offsets = [0, 0], sizes = [1, 512], strides = [1, 1]} : vector<3x512xf32> to vector<1x512xf32>
    %5 = vector.broadcast %3 : vector<128x1xf32> to vector<128x512xf32>
    %6 = vector.broadcast %4 : vector<1x512xf32> to vector<128x512xf32>
    %7 = arith.mulf %5, %6 : vector<128x512xf32>
    %8 = vector.extract_strided_slice %2 {offsets = [0, 1], sizes = [128, 1], strides = [1, 1]} : vector<128x3xf32> to vector<128x1xf32>
    %9 = vector.extract_strided_slice %1 {offsets = [1, 0], sizes = [1, 512], strides = [1, 1]} : vector<3x512xf32> to vector<1x512xf32>
    %10 = vector.broadcast %8 : vector<128x1xf32> to vector<128x512xf32>
    %11 = vector.broadcast %9 : vector<1x512xf32> to vector<128x512xf32>
    %12 = arith.mulf %10, %11 : vector<128x512xf32>
    %13 = arith.addf %7, %12 : vector<128x512xf32>
    %14 = vector.extract_strided_slice %2 {offsets = [0, 2], sizes = [128, 1], strides = [1, 1]} : vector<128x3xf32> to vector<128x1xf32>
    %15 = vector.extract_strided_slice %1 {offsets = [2, 0], sizes = [1, 512], strides = [1, 1]} : vector<3x512xf32> to vector<1x512xf32>
    %16 = vector.broadcast %14 : vector<128x1xf32> to vector<128x512xf32>
    %17 = vector.broadcast %15 : vector<1x512xf32> to vector<128x512xf32>
    %18 = arith.mulf %16, %17 : vector<128x512xf32>
    %19 = arith.addf %13, %18 : vector<128x512xf32>
    %c0_4 = arith.constant 0 : index
    %c0_5 = arith.constant 0 : index
    %20 = vector.load %arg4[%c0_4, %c0_5] : memref<128x1xf32, #tpu.memory_space<vmem>>, vector<128x1xf32>
    %21 = vector.broadcast %20 : vector<128x1xf32> to vector<128x512xf32>
    %22 = arith.addf %19, %21 : vector<128x512xf32>
    %cst = arith.constant 0.000000e+00 : f32
    %23 = vector.broadcast %cst : f32 to vector<128x512xf32>
    %24 = arith.maximumf %22, %23 : vector<128x512xf32>
    %c0_6 = arith.constant 0 : index
    %c0_7 = arith.constant 0 : index
    %25 = vector.load %arg5[%c0_6, %c0_7] : memref<128x128xbf16, #tpu.memory_space<vmem>>, vector<128x128xbf16>
    %26 = arith.truncf %24 : vector<128x512xf32> to vector<128x512xbf16>
    %cst_8 = arith.constant dense<0.000000e+00> : vector<128x512xf32>
    %27 = tpu.matmul %25, %26, %cst_8 {dimension_numbers = #tpu.dot_dimension_numbers<[1], [0], [0], [1], [0, 0, 1, 1], [], []>} : vector<128x128xbf16>, vector<128x512xbf16>, vector<128x512xf32> -> vector<128x512xf32>
    %c0_9 = arith.constant 0 : index
    %c0_10 = arith.constant 0 : index
    %28 = vector.load %arg6[%c0_9, %c0_10] : memref<128x1xf32, #tpu.memory_space<vmem>>, vector<128x1xf32>
    %29 = vector.broadcast %28 : vector<128x1xf32> to vector<128x512xf32>
    %30 = arith.addf %27, %29 : vector<128x512xf32>
    %cst_11 = arith.constant 0.000000e+00 : f32
    %31 = vector.broadcast %cst_11 : f32 to vector<128x512xf32>
    %32 = arith.maximumf %30, %31 : vector<128x512xf32>
    %c0_12 = arith.constant 0 : index
    %c0_13 = arith.constant 0 : index
    %33 = vector.load %arg7[%c0_12, %c0_13] : memref<256x128xbf16, #tpu.memory_space<vmem>>, vector<256x128xbf16>
    %34 = arith.truncf %32 : vector<128x512xf32> to vector<128x512xbf16>
    %cst_14 = arith.constant dense<0.000000e+00> : vector<256x512xf32>
    %35 = tpu.matmul %33, %34, %cst_14 {dimension_numbers = #tpu.dot_dimension_numbers<[1], [0], [0], [1], [0, 0, 1, 1], [], []>} : vector<256x128xbf16>, vector<128x512xbf16>, vector<256x512xf32> -> vector<256x512xf32>
    %c0_15 = arith.constant 0 : index
    %c0_16 = arith.constant 0 : index
    %36 = vector.load %arg8[%c0_15, %c0_16] : memref<256x1xf32, #tpu.memory_space<vmem>>, vector<256x1xf32>
    %37 = vector.broadcast %36 : vector<256x1xf32> to vector<256x512xf32>
    %38 = arith.addf %35, %37 : vector<256x512xf32>
    %cst_17 = arith.constant 0.000000e+00 : f32
    %39 = vector.broadcast %cst_17 : f32 to vector<256x512xf32>
    %40 = arith.maximumf %38, %39 : vector<256x512xf32>
    %c0_18 = arith.constant 0 : index
    %c0_19 = arith.constant 0 : index
    %41 = vector.load %arg9[%c0_18, %c0_19] : memref<512x256xbf16, #tpu.memory_space<vmem>>, vector<512x256xbf16>
    %42 = arith.truncf %40 : vector<256x512xf32> to vector<256x512xbf16>
    %cst_20 = arith.constant dense<0.000000e+00> : vector<512x512xf32>
    %43 = tpu.matmul %41, %42, %cst_20 {dimension_numbers = #tpu.dot_dimension_numbers<[1], [0], [0], [1], [0, 0, 1, 1], [], []>} : vector<512x256xbf16>, vector<256x512xbf16>, vector<512x512xf32> -> vector<512x512xf32>
    %c0_21 = arith.constant 0 : index
    %c0_22 = arith.constant 0 : index
    %44 = vector.load %arg10[%c0_21, %c0_22] : memref<512x1xf32, #tpu.memory_space<vmem>>, vector<512x1xf32>
    %45 = vector.broadcast %44 : vector<512x1xf32> to vector<512x512xf32>
    %46 = arith.addf %43, %45 : vector<512x512xf32>
    %cst_23 = arith.constant 0.000000e+00 : f32
    %47 = vector.broadcast %cst_23 : f32 to vector<512x512xf32>
    %48 = arith.maximumf %46, %47 : vector<512x512xf32>
    %c0_24 = arith.constant 0 : index
    %c0_25 = arith.constant 0 : index
    %c0_26 = arith.constant 0 : index
    %49 = vector.load %arg11[%c0_24, %c0_25, %c0_26] : memref<1x512x512xf32, #tpu.memory_space<vmem>>, vector<1x512x512xf32>
    %50 = vector.shape_cast %49 : vector<1x512x512xf32> to vector<512x512xf32>
    %51 = vector.shape_cast %48 : vector<512x512xf32> to vector<1x512x512xf32>
    tpu.vector_store %arg11[%c0_24, %c0_25, %c0_26], %51 {strides = array<i32>} : memref<1x512x512xf32, #tpu.memory_space<vmem>>, vector<1x512x512xf32>,
    return
  }
  func.func @transform_0(%arg0: i32, %arg1: i32) -> (i32, i32, i32) {
    %c0_i32 = arith.constant 0 : i32
    %c0_i32_0 = arith.constant 0 : i32
    return %arg0, %c0_i32, %arg1 : i32, i32, i32
  }
  func.func @transform_1(%arg0: i32, %arg1: i32) -> (i32, i32) {
    %c0_i32 = arith.constant 0 : i32
    %c0_i32_0 = arith.constant 0 : i32
    %c0_i32_1 = arith.constant 0 : i32
    return %c0_i32, %c0_i32_0 : i32, i32
  }
  func.func @transform_2(%arg0: i32, %arg1: i32) -> (i32, i32) {
    %c0_i32 = arith.constant 0 : i32
    %c0_i32_0 = arith.constant 0 : i32
    %c0_i32_1 = arith.constant 0 : i32
    return %c0_i32, %c0_i32_0 : i32, i32
  }
  func.func @transform_3(%arg0: i32, %arg1: i32) -> (i32, i32) {
    %c0_i32 = arith.constant 0 : i32
    %c0_i32_0 = arith.constant 0 : i32
    %c0_i32_1 = arith.constant 0 : i32
    return %c0_i32, %c0_i32_0 : i32, i32
  }
  func.func @transform_4(%arg0: i32, %arg1: i32) -> (i32, i32) {
    %c0_i32 = arith.constant 0 : i32
    %c0_i32_0 = arith.constant 0 : i32
    %c0_i32_1 = arith.constant 0 : i32
    return %c0_i32, %c0_i32_0 : i32, i32
  }
  func.func @transform_5(%arg0: i32, %arg1: i32) -> (i32, i32) {
    %c0_i32 = arith.constant 0 : i32
    %c0_i32_0 = arith.constant 0 : i32
    %c0_i32_1 = arith.constant 0 : i32
    return %c0_i32, %c0_i32_0 : i32, i32
  }
  func.func @transform_6(%arg0: i32, %arg1: i32) -> (i32, i32) {
    %c0_i32 = arith.constant 0 : i32
    %c0_i32_0 = arith.constant 0 : i32
    %c0_i32_1 = arith.constant 0 : i32
    return %c0_i32, %c0_i32_0 : i32, i32
  }
  func.func @transform_7(%arg0: i32, %arg1: i32) -> (i32, i32) {
    %c0_i32 = arith.constant 0 : i32
    %c0_i32_0 = arith.constant 0 : i32
    %c0_i32_1 = arith.constant 0 : i32
    return %c0_i32, %c0_i32_0 : i32, i32
  }
  func.func @transform_8(%arg0: i32, %arg1: i32) -> (i32, i32) {
    %c0_i32 = arith.constant 0 : i32
    %c0_i32_0 = arith.constant 0 : i32
    %c0_i32_1 = arith.constant 0 : i32
    return %c0_i32, %c0_i32_0 : i32, i32
  }
  func.func @transform_9(%arg0: i32, %arg1: i32) -> (i32, i32, i32) {
    %c0_i32 = arith.constant 0 : i32
    %c0_i32_0 = arith.constant 0 : i32
    return %arg0, %c0_i32, %arg1 : i32, i32, i32
  }
}

</mosaic_0001>

<llo_original>
// kernel: embeddings_forward.1
$region0: #{embeddings_forward.1}
  #allocation0 [shape = 'u32[]', space=smem, size = 0x4, offset = 0x4, fixed_abs, tag = 'smem constant byte address 0x4 - core index']
  #allocation1 [shape = 'u32[144,128]{1,0:T(1,128)}', space=vmem, size = 0x12000, scoped, tag = 'internal scratch']
  %s0 = inlined_call_operand.vmem [shape: f32[2,3,1024], index: 0, kind: input, shape index: {}]
  %s1 = inlined_call_operand.vmem [shape: f32[128,3], index: 1, kind: input, shape index: {}]
  %s2 = inlined_call_operand.vmem [shape: f32[128,1], index: 2, kind: input, shape index: {}]
  %s3 = inlined_call_operand.hbm [shape: bf16[128,128], index: 3, kind: input, shape index: {}]
  %s4 = inlined_call_operand.vmem [shape: f32[128,1], index: 4, kind: input, shape index: {}]
  %s5 = inlined_call_operand.hbm [shape: bf16[256,128], index: 5, kind: input, shape index: {}]
  %s6 = inlined_call_operand.vmem [shape: f32[256,1], index: 6, kind: input, shape index: {}]
  %s7 = inlined_call_operand.hbm [shape: bf16[512,256], index: 7, kind: input, shape index: {}]
  %s8 = inlined_call_operand.vmem [shape: f32[512,1], index: 8, kind: input, shape index: {}]
  %s9 = inlined_call_operand.hbm [shape: f32[2,512,1024], index: 9, kind: output, shape index: {}]
  %s10 = sld [smem:[#allocation0]]
  $region81: #{embeddings_forward.1} parent=0
    _
  %s12 = ssub.s32 1, %s10
  %s13 = scalar_select 0, %s12, %s10
  $region1: #{embeddings_forward.1} parent=0
    #allocation2 [shape = 'u8[32768]{0}', space=vmem, size = 0x8000, scoped, tag = 'input window, operand 3, single buffered']
    #allocation3 [shape = 's32[2]{0}', space=sflag, size = 0x8, scoped, tag = 'scoped memory for embeddings_forward.1']
    #allocation4 [shape = 's32[2]{0}', space=sflag, size = 0x8, scoped, tag = 'scoped memory for embeddings_forward.1']
    #allocation5 [shape = 'u8[65536]{0}', space=vmem, size = 0x10000, scoped, tag = 'input window, operand 5, single buffered']
    #allocation6 [shape = 's32[1]{0}', space=sflag, size = 0x4, scoped, tag = 'scoped memory for embeddings_forward.1']
    #allocation7 [shape = 'u8[262144]{0}', space=vmem, size = 0x40000, scoped, tag = 'input window, operand 7, single buffered']
    #allocation8 [shape = 'u8[2097152]{0}', space=vmem, size = 0x200000, scoped, tag = 'output window, operand 0']
    %14 = vsyncpa [#allocation3], 0
    %15 = vsyncpa [#allocation6], 0
    %16 = vsyncpa [#allocation4], 0
    %s17 = scalar_lea.sflag [#allocation4], 1
    %18 = vsyncpa %s17, 0
    loop: start=0, step=1, limit=6
    $region2: #{embeddings_forward.1} parent=1 // loop_pre_header
      _
    $region3: #{embeddings_forward.1} parent=1 // loop_header
      %s20 = sphi 0, %s24
      %p21 = scmp.ge.s32.totalorder %s20, 6
      %s27 = sphi 0, %s39
      %s28 = sphi 0, %s35
      %s29 = sphi 0, %s27
      %s30 = sphi 0, %s28
      %s31 = sphi 0, %s29
      %s32 = sphi 0, %s30
      %s44 = sphi 0, %s46
      %s47 = sphi 0, %s44
      %s48 = sphi 0, %s47
      %s64 = sphi 0, %s48
      %s68 = sphi 0, %s68
      %s70 = sphi 0, %s68
      %s71 = sphi 0, %s70
      %s85 = sphi 0, %s71
      %s89 = sphi 0, %s89
      %s91 = sphi 0, %s89
      %s92 = sphi 0, %s91
      %s106 = sphi 0, %s92
      %s110 = sphi 0, %s110
      %s112 = sphi 0, %s110
      %s113 = sphi 0, %s112
      %s127 = sphi 0, %s113
      %s131 = sphi 0, %s131
      %s133 = sphi 0, %s131
      %s134 = sphi 0, %s133
      %s148 = sphi 0, %s134
      %s152 = sphi 0, %s152
      %s154 = sphi 0, %s152
      %s155 = sphi 0, %s154
      %s169 = sphi 0, %s155
      %s173 = sphi 0, %s173
      %s175 = sphi 0, %s173
      %s176 = sphi 0, %s175
      %s190 = sphi 0, %s176
      %s194 = sphi 0, %s194
      %s196 = sphi 0, %s194
      %s197 = sphi 0, %s196
      %s211 = sphi 0, %s197
      %s215 = sphi 0, %s215
      %s217 = sphi 0, %s215
      %s218 = sphi 0, %s217
      %s232 = sphi 0, %s218
      %s240 = sphi 0, %s242
      %s243 = sphi 0, %s240
      %s244 = sphi 0, %s243
      %s260 = sphi 0, %s244
    $region4: #{embeddings_forward.1} parent=1 // loop_header_branch
      %23 = sbr.rel (%p21) target = $region8
    $region5: #{embeddings_forward.1} parent=1 // loop_body
      %s25 = ssub.s32 %s20, 1
      %s26 = ssub.s32 %s20, 2
      %s33 = sadd.s32 1, %s28
      %p34 = scmp.ge.s32.totalorder %s33, 2
      %s35 = scalar_select %p34, 0, %s33
      %s36 = sadd.s32 1, %s27
      %s37 = scalar_select %p34, %s36, %s27
      %p38 = scmp.ge.s32.totalorder %s37, 2
      %s39 = scalar_select %p38, 0, %s37
      %s40 = ssub.s32 %s27, %s39
      %s41 = ssub.s32 %s28, %s35
      %s42 = sor.u32 %s40, %s41
      %p43 = scmp.eq.s32.totalorder %s42, 0
      %s45 = sadd.s32 %s44, 1
      %s46 = scalar_select %p43, %s44, %s45
      %p49 = pneg %p43
      %p50 = scmp.eq.s32.totalorder %s20, 3
      %p51 = por %p49, %p50
      %p52 = scmp.ne.s32.totalorder %s44, %s47
      %p53 = scmp.eq.s32.totalorder %s20, 0
      %p54 = por %p52, %p53
      %p55 = scmp.ne.s32.totalorder %s44, %s47
      %p56 = scmp.eq.s32.totalorder %s25, 3
      %p57 = por %p55, %p56
      %p58 = scmp.ne.s32.totalorder %s47, %s48
      %p59 = scmp.eq.s32.totalorder %s25, 0
      %p60 = por %p58, %p59
      %p61 = scmp.ne.s32.totalorder %s47, %s48
      %p62 = scmp.eq.s32.totalorder %s26, 3
      %p63 = por %p61, %p62
      %p65 = scmp.ne.s32.totalorder %s48, %s64
      %p66 = scmp.eq.s32.totalorder %s26, 0
      %p67 = por %p65, %p66
      %s69 = sadd.s32 %s68, 1
      %p72 = scmp.eq.s32.totalorder %s20, 3
      %p73 = scmp.ne.s32.totalorder %s68, %s70
      %p74 = scmp.eq.s32.totalorder %s20, 0
      %p75 = por %p73, %p74
      %p76 = scmp.ne.s32.totalorder %s68, %s70
      %p77 = scmp.eq.s32.totalorder %s25, 3
      %p78 = por %p76, %p77
      %p79 = scmp.ne.s32.totalorder %s70, %s71
      %p80 = scmp.eq.s32.totalorder %s25, 0
      %p81 = por %p79, %p80
      %p82 = scmp.ne.s32.totalorder %s70, %s71
      %p83 = scmp.eq.s32.totalorder %s26, 3
      %p84 = por %p82, %p83
      %p86 = scmp.ne.s32.totalorder %s71, %s85
      %p87 = scmp.eq.s32.totalorder %s26, 0
      %p88 = por %p86, %p87
      %s90 = sadd.s32 %s89, 1
      %p93 = scmp.eq.s32.totalorder %s20, 3
      %p94 = scmp.ne.s32.totalorder %s89, %s91
      %p95 = scmp.eq.s32.totalorder %s20, 0
      %p96 = por %p94, %p95
      %p97 = scmp.ne.s32.totalorder %s89, %s91
      %p98 = scmp.eq.s32.totalorder %s25, 3
      %p99 = por %p97, %p98
      %p100 = scmp.ne.s32.totalorder %s91, %s92
      %p101 = scmp.eq.s32.totalorder %s25, 0
      %p102 = por %p100, %p101
      %p103 = scmp.ne.s32.totalorder %s91, %s92
      %p104 = scmp.eq.s32.totalorder %s26, 3
      %p105 = por %p103, %p104
      %p107 = scmp.ne.s32.totalorder %s92, %s106
      %p108 = scmp.eq.s32.totalorder %s26, 0
      %p109 = por %p107, %p108
      %s111 = sadd.s32 %s110, 1
      %p114 = scmp.eq.s32.totalorder %s20, 3
      %p115 = scmp.ne.s32.totalorder %s110, %s112
      %p116 = scmp.eq.s32.totalorder %s20, 0
      %p117 = por %p115, %p116
      %p118 = scmp.ne.s32.totalorder %s110, %s112
      %p119 = scmp.eq.s32.totalorder %s25, 3
      %p120 = por %p118, %p119
      %p121 = scmp.ne.s32.totalorder %s112, %s113
      %p122 = scmp.eq.s32.totalorder %s25, 0
      %p123 = por %p121, %p122
      %p124 = scmp.ne.s32.totalorder %s112, %s113
      %p125 = scmp.eq.s32.totalorder %s26, 3
      %p126 = por %p124, %p125
      %p128 = scmp.ne.s32.totalorder %s113, %s127
      %p129 = scmp.eq.s32.totalorder %s26, 0
      %p130 = por %p128, %p129
      %s132 = sadd.s32 %s131, 1
      %p135 = scmp.eq.s32.totalorder %s20, 3
      %p136 = scmp.ne.s32.totalorder %s131, %s133
      %p137 = scmp.eq.s32.totalorder %s20, 0
      %p138 = por %p136, %p137
      %p139 = scmp.ne.s32.totalorder %s131, %s133
      %p140 = scmp.eq.s32.totalorder %s25, 3
      %p141 = por %p139, %p140
      %p142 = scmp.ne.s32.totalorder %s133, %s134
      %p143 = scmp.eq.s32.totalorder %s25, 0
      %p144 = por %p142, %p143
      %p145 = scmp.ne.s32.totalorder %s133, %s134
      %p146 = scmp.eq.s32.totalorder %s26, 3
      %p147 = por %p145, %p146
      %p149 = scmp.ne.s32.totalorder %s134, %s148
      %p150 = scmp.eq.s32.totalorder %s26, 0
      %p151 = por %p149, %p150
      %s153 = sadd.s32 %s152, 1
      %p156 = scmp.eq.s32.totalorder %s20, 3
      %p157 = scmp.ne.s32.totalorder %s152, %s154
      %p158 = scmp.eq.s32.totalorder %s20, 0
      %p159 = por %p157, %p158
      %p160 = scmp.ne.s32.totalorder %s152, %s154
      %p161 = scmp.eq.s32.totalorder %s25, 3
      %p162 = por %p160, %p161
      %p163 = scmp.ne.s32.totalorder %s154, %s155
      %p164 = scmp.eq.s32.totalorder %s25, 0
      %p165 = por %p163, %p164
      %p166 = scmp.ne.s32.totalorder %s154, %s155
      %p167 = scmp.eq.s32.totalorder %s26, 3
      %p168 = por %p166, %p167
      %p170 = scmp.ne.s32.totalorder %s155, %s169
      %p171 = scmp.eq.s32.totalorder %s26, 0
      %p172 = por %p170, %p171
      %s174 = sadd.s32 %s173, 1
      %p177 = scmp.eq.s32.totalorder %s20, 3
      %p178 = scmp.ne.s32.totalorder %s173, %s175
      %p179 = scmp.eq.s32.totalorder %s20, 0
      %p180 = por %p178, %p179
      %p181 = scmp.ne.s32.totalorder %s173, %s175
      %p182 = scmp.eq.s32.totalorder %s25, 3
      %p183 = por %p181, %p182
      %p184 = scmp.ne.s32.totalorder %s175, %s176
      %p185 = scmp.eq.s32.totalorder %s25, 0
      %p186 = por %p184, %p185
      %p187 = scmp.ne.s32.totalorder %s175, %s176
      %p188 = scmp.eq.s32.totalorder %s26, 3
      %p189 = por %p187, %p188
      %p191 = scmp.ne.s32.totalorder %s176, %s190
      %p192 = scmp.eq.s32.totalorder %s26, 0
      %p193 = por %p191, %p192
      %s195 = sadd.s32 %s194, 1
      %p198 = scmp.eq.s32.totalorder %s20, 3
      %p199 = scmp.ne.s32.totalorder %s194, %s196
      %p200 = scmp.eq.s32.totalorder %s20, 0
      %p201 = por %p199, %p200
      %p202 = scmp.ne.s32.totalorder %s194, %s196
      %p203 = scmp.eq.s32.totalorder %s25, 3
      %p204 = por %p202, %p203
      %p205 = scmp.ne.s32.totalorder %s196, %s197
      %p206 = scmp.eq.s32.totalorder %s25, 0
      %p207 = por %p205, %p206
      %p208 = scmp.ne.s32.totalorder %s196, %s197
      %p209 = scmp.eq.s32.totalorder %s26, 3
      %p210 = por %p208, %p209
      %p212 = scmp.ne.s32.totalorder %s197, %s211
      %p213 = scmp.eq.s32.totalorder %s26, 0
      %p214 = por %p212, %p213
      %s216 = sadd.s32 %s215, 1
      %p219 = scmp.eq.s32.totalorder %s20, 3
      %p220 = scmp.ne.s32.totalorder %s215, %s217
      %p221 = scmp.eq.s32.totalorder %s20, 0
      %p222 = por %p220, %p221
      %p223 = scmp.ne.s32.totalorder %s215, %s217
      %p224 = scmp.eq.s32.totalorder %s25, 3
      %p225 = por %p223, %p224
      %p226 = scmp.ne.s32.totalorder %s217, %s218
      %p227 = scmp.eq.s32.totalorder %s25, 0
      %p228 = por %p226, %p227
      %p229 = scmp.ne.s32.totalorder %s217, %s218
      %p230 = scmp.eq.s32.totalorder %s26, 3
      %p231 = por %p229, %p230
      %p233 = scmp.ne.s32.totalorder %s218, %s232
      %p234 = scmp.eq.s32.totalorder %s26, 0
      %p235 = por %p233, %p234
      %s236 = ssub.s32 %s27, %s39
      %s237 = ssub.s32 %s28, %s35
      %s238 = sor.u32 %s236, %s237
      %p239 = scmp.eq.s32.totalorder %s238, 0
      %s241 = sadd.s32 %s240, 1
      %s242 = scalar_select %p239, %s240, %s241
      %p245 = pneg %p239
      %p246 = scmp.eq.s32.totalorder %s20, 3
      %p247 = por %p245, %p246
      %p248 = scmp.ne.s32.totalorder %s240, %s243
      %p249 = scmp.eq.s32.totalorder %s20, 0
      %p250 = por %p248, %p249
      %p251 = scmp.ne.s32.totalorder %s240, %s243
      %p252 = scmp.eq.s32.totalorder %s25, 3
      %p253 = por %p251, %p252
      %p254 = scmp.ne.s32.totalorder %s243, %s244
      %p255 = scmp.eq.s32.totalorder %s25, 0
      %p256 = por %p254, %p255
      %p257 = scmp.ne.s32.totalorder %s243, %s244
      %p258 = scmp.eq.s32.totalorder %s26, 3
      %p259 = por %p257, %p258
      %p261 = scmp.ne.s32.totalorder %s244, %s260
      %p262 = scmp.eq.s32.totalorder %s26, 0
      %p263 = por %p261, %p262
      %p264 = scmp.le.s32.totalorder 1, %s20
      %p265 = scmp.lt.s32.totalorder %s20, 5
      %p266 = pnand %p264, %p265
      %p267 = pneg %p266
      // Predicated region
      $region9: #{embeddings_forward.1} parent=5 // pred_check
        _
      $region10: #{embeddings_forward.1} parent=5 // pred_check_branch
        %269 = sbr.rel (%p266) target = $region12
      $region11: #{embeddings_forward.1} parent=5 // pred_region
        %s270 = ssub.s32 %s20, 1
        // Predicated region
        $region13: #{embeddings_forward.1} parent=11 // pred_check
          %p271 = pneg %p81
        $region14: #{embeddings_forward.1} parent=11 // pred_check_branch
          %273 = sbr.rel (%p271) target = $region16
        $region15: #{embeddings_forward.1} parent=11 // pred_region
          _
        $region16: #{embeddings_forward.1} parent=11 // pred_fallthru
          _
        // Predicated region
        $region17: #{embeddings_forward.1} parent=11 // pred_check
          %p274 = pneg %p102
        $region18: #{embeddings_forward.1} parent=11 // pred_check_branch
          %276 = sbr.rel (%p274) target = $region20
        $region19: #{embeddings_forward.1} parent=11 // pred_region
          _
        $region20: #{embeddings_forward.1} parent=11 // pred_fallthru
          _
        // Predicated region
        $region21: #{embeddings_forward.1} parent=11 // pred_check
          %p277 = pneg %p123
        $region22: #{embeddings_forward.1} parent=11 // pred_check_branch
          %279 = sbr.rel (%p277) target = $region24
        $region23: #{embeddings_forward.1} parent=11 // pred_region
          %s281 = ssub.s32 1024, 1024
          %282 = vsyncadd [#allocation3], %s281
          %s283 = sshll.u32 [#allocation2], 4
          %s284 = int_to_ptr.vmem [resolvable:$true] %s283
          %289 = dma.hbm_to_vmem [thread:$0]  %s3, 1024, %s284, [#allocation3], 64, 64, 4
        $region24: #{embeddings_forward.1} parent=11 // pred_fallthru
          _
        // Predicated region
        $region25: #{embeddings_forward.1} parent=11 // pred_check
          %p290 = pneg %p144
        $region26: #{embeddings_forward.1} parent=11 // pred_check_branch
          %292 = sbr.rel (%p290) target = $region28
        $region27: #{embeddings_forward.1} parent=11 // pred_region
          _
        $region28: #{embeddings_forward.1} parent=11 // pred_fallthru
          _
        // Predicated region
        $region29: #{embeddings_forward.1} parent=11 // pred_check
          %p293 = pneg %p165
        $region30: #{embeddings_forward.1} parent=11 // pred_check_branch
          %295 = sbr.rel (%p293) target = $region32
        $region31: #{embeddings_forward.1} parent=11 // pred_region
          %s297 = ssub.s32 2048, 2048
          %298 = vsyncadd [#allocation6], %s297
          %s299 = sshll.u32 [#allocation5], 4
          %s300 = int_to_ptr.vmem [resolvable:$true] %s299
          %305 = dma.hbm_to_vmem [thread:$0]  %s5, 2048, %s300, [#allocation6], 64, 64, 4
        $region32: #{embeddings_forward.1} parent=11 // pred_fallthru
          _
        // Predicated region
        $region33: #{embeddings_forward.1} parent=11 // pred_check
          %p306 = pneg %p186
        $region34: #{embeddings_forward.1} parent=11 // pred_check_branch
          %308 = sbr.rel (%p306) target = $region36
        $region35: #{embeddings_forward.1} parent=11 // pred_region
          _
        $region36: #{embeddings_forward.1} parent=11 // pred_fallthru
          _
        // Predicated region
        $region37: #{embeddings_forward.1} parent=11 // pred_check
          %p309 = pneg %p207
        $region38: #{embeddings_forward.1} parent=11 // pred_check_branch
          %311 = sbr.rel (%p309) target = $region40
        $region39: #{embeddings_forward.1} parent=11 // pred_region
          %s313 = ssub.s32 8192, 8192
          %314 = vsyncadd [#allocation6], %s313
          %s315 = sshll.u32 [#allocation7], 4
          %s316 = int_to_ptr.vmem [resolvable:$true] %s315
          %321 = dma.hbm_to_vmem [thread:$0]  %s7, 8192, %s316, [#allocation6], 128, 128, 8
        $region40: #{embeddings_forward.1} parent=11 // pred_fallthru
          _
        // Predicated region
        $region41: #{embeddings_forward.1} parent=11 // pred_check
          %p322 = pneg %p228
        $region42: #{embeddings_forward.1} parent=11 // pred_check_branch
          %324 = sbr.rel (%p322) target = $region44
        $region43: #{embeddings_forward.1} parent=11 // pred_region
          _
        $region44: #{embeddings_forward.1} parent=11 // pred_fallthru
          _
      $region12: #{embeddings_forward.1} parent=5 // pred_fallthru
        _
      %p325 = scmp.lt.s32.totalorder %s20, 4
      // Predicated region
      $region45: #{embeddings_forward.1} parent=5 // pred_check
        %p326 = pneg %p325
      $region46: #{embeddings_forward.1} parent=5 // pred_check_branch
        %328 = sbr.rel (%p326) target = $region48
      $region47: #{embeddings_forward.1} parent=5 // pred_region
        // Predicated region
        $region49: #{embeddings_forward.1} parent=47 // pred_check
          %p329 = pneg %p54
        $region50: #{embeddings_forward.1} parent=47 // pred_check_branch
          %331 = sbr.rel (%p329) target = $region52
        $region51: #{embeddings_forward.1} parent=47 // pred_region
          %s332 = smul.u32 4, %s28
          %p333 = scmp.lt.s32.totalorder %s27, 1
          %s334 = scalar_select %p333, %s27, 1
          %p335 = scmp.lt.s32.totalorder %s332, 7
          %s336 = scalar_select %p335, %s332, 7
          %s337 = smul.addr %s334, 8
          %s338 = sadd.s32 %s336, %s337
          %s339 = smul.addr %s338, 4
          %s340 = scalar_lea.vmem %s0, %s339
          %s341 = smul.u32 4, %s28
        $region52: #{embeddings_forward.1} parent=47 // pred_fallthru
          _
      $region48: #{embeddings_forward.1} parent=5 // pred_fallthru
        _
      %p342 = scmp.le.s32.totalorder 1, %s20
      %p343 = scmp.lt.s32.totalorder %s20, 5
      %p344 = pnand %p342, %p343
      %p345 = pneg %p344
      // Predicated region
      $region53: #{embeddings_forward.1} parent=5 // pred_check
        _
      $region54: #{embeddings_forward.1} parent=5 // pred_check_branch
        %347 = sbr.rel (%p344) target = $region56
      $region55: #{embeddings_forward.1} parent=5 // pred_region
        %s348 = ssub.s32 %s20, 1
        // Predicated region
        $region57: #{embeddings_forward.1} parent=55 // pred_check
          %p349 = pneg %p123
        $region58: #{embeddings_forward.1} parent=55 // pred_check_branch
          %351 = sbr.rel (%p349) target = $region60
        $region59: #{embeddings_forward.1} parent=55 // pred_region
          %352 = dma.done [#allocation3], 1024
        $region60: #{embeddings_forward.1} parent=55 // pred_fallthru
          _
        // Predicated region
        $region61: #{embeddings_forward.1} parent=55 // pred_check
          %p353 = pneg %p165
        $region62: #{embeddings_forward.1} parent=55 // pred_check_branch
          %355 = sbr.rel (%p353) target = $region64
        $region63: #{embeddings_forward.1} parent=55 // pred_region
          %356 = dma.done [#allocation6], 2048
        $region64: #{embeddings_forward.1} parent=55 // pred_fallthru
          _
        // Predicated region
        $region65: #{embeddings_forward.1} parent=55 // pred_check
          %p357 = pneg %p207
        $region66: #{embeddings_forward.1} parent=55 // pred_check_branch
          %359 = sbr.rel (%p357) target = $region68
        $region67: #{embeddings_forward.1} parent=55 // pred_region
          %360 = dma.done [#allocation6], 8192
        $region68: #{embeddings_forward.1} parent=55 // pred_fallthru
          _
        %s361 = smul.u32 4, %s30
        %p362 = scmp.lt.s32.totalorder %s29, 1
        %s363 = scalar_select %p362, %s29, 1
        %p364 = scmp.lt.s32.totalorder %s361, 7
        %s365 = scalar_select %p364, %s361, 7
        %s366 = smul.addr %s363, 8
        %s367 = sadd.s32 %s365, %s366
        %s368 = smul.addr %s367, 4
        %s369 = scalar_lea.vmem %s0, %s368
        %p370 = pneg %p60
        %p371 = pneg %p57
        %p372 = pneg %p81
        %p373 = pneg %p78
        %p374 = pneg %p102
        %p375 = pneg %p99
        %p376 = pneg %p123
        %p377 = pneg %p120
        %p378 = pneg %p144
        %p379 = pneg %p141
        %p380 = pneg %p165
        %p381 = pneg %p162
        %p382 = pneg %p186
        %p383 = pneg %p183
        %p384 = pneg %p207
        %p385 = pneg %p204
        %p386 = pneg %p228
        %p387 = pneg %p225
        %p388 = pneg %p256
        %p389 = pneg %p253
        %s390 = sand.u32 %s243, 1
        %s391 = scalar_lea.sflag [#allocation4], %s390
        %s392 = sand.u32 %s243, 1
        %s393 = smul.addr %s392, 2048
        %s394 = scalar_lea.vmem [#allocation8], %s393
        %s395 = smul.u32 4, %s30
        %p396 = scmp.lt.s32.totalorder %s29, 1
        %s397 = scalar_select %p396, %s29, 1
        %p398 = scmp.lt.s32.totalorder %s395, 7
        %s399 = scalar_select %p398, %s395, 7
        %s400 = smul.addr %s397, 8
        %s401 = sadd.s32 %s399, %s400
        %s402 = smul.addr %s401, 4
        %s403 = scalar_lea.vmem %s0, %s402
        %s404 = smul.u32 4, %s30
        %s405 = smul.u32 4, %s30
        %v407 = vld [vmem:[%s403] sm:$0x77]
        %v408 = vld [vmem:[%s403 + $0x8] sm:$0x77]
        %v409 = vld [vmem:[%s1] sm:$0xff]
        %v410 = vld [vmem:[%s1 + $0x8] sm:$0xff]
        %v411 = vld [vmem:[%s1 + $0x10] sm:$0xff]
        %v412 = vld [vmem:[%s1 + $0x18] sm:$0xff]
        %v413 = vld [vmem:[%s1 + $0x20] sm:$0xff]
        %v414 = vld [vmem:[%s1 + $0x28] sm:$0xff]
        %v415 = vld [vmem:[%s1 + $0x30] sm:$0xff]
        %v416 = vld [vmem:[%s1 + $0x38] sm:$0xff]
        %v417 = vld [vmem:[%s1 + $0x40] sm:$0xff]
        %v418 = vld [vmem:[%s1 + $0x48] sm:$0xff]
        %v419 = vld [vmem:[%s1 + $0x50] sm:$0xff]
        %v420 = vld [vmem:[%s1 + $0x58] sm:$0xff]
        %v421 = vld [vmem:[%s1 + $0x60] sm:$0xff]
        %v422 = vld [vmem:[%s1 + $0x68] sm:$0xff]
        %v423 = vld [vmem:[%s1 + $0x70] sm:$0xff]
        %v424 = vld [vmem:[%s1 + $0x78] sm:$0xff]
        %426 = vset.pattern.permute.xlu0 0
        %427 = vperm.xlu0 %426, %v409
        %v428 = vpop.permute.xlu0 %427
        %431 = vset.pattern.permute.xlu0 0
        %432 = vperm.xlu0 %431, %v410
        %v433 = vpop.permute.xlu0 %432
        %436 = vset.pattern.permute.xlu0 0
        %437 = vperm.xlu0 %436, %v411
        %v438 = vpop.permute.xlu0 %437
        %441 = vset.pattern.permute.xlu0 0
        %442 = vperm.xlu0 %441, %v412
        %v443 = vpop.permute.xlu0 %442
        %446 = vset.pattern.permute.xlu0 0
        %447 = vperm.xlu0 %446, %v413
        %v448 = vpop.permute.xlu0 %447
        %451 = vset.pattern.permute.xlu0 0
        %452 = vperm.xlu0 %451, %v414
        %v453 = vpop.permute.xlu0 %452
        %456 = vset.pattern.permute.xlu0 0
        %457 = vperm.xlu0 %456, %v415
        %v458 = vpop.permute.xlu0 %457
        %461 = vset.pattern.permute.xlu0 0
        %462 = vperm.xlu0 %461, %v416
        %v463 = vpop.permute.xlu0 %462
        %466 = vset.pattern.permute.xlu0 0
        %467 = vperm.xlu0 %466, %v417
        %v468 = vpop.permute.xlu0 %467
        %471 = vset.pattern.permute.xlu0 0
        %472 = vperm.xlu0 %471, %v418
        %v473 = vpop.permute.xlu0 %472
        %476 = vset.pattern.permute.xlu0 0
        %477 = vperm.xlu0 %476, %v419
        %v478 = vpop.permute.xlu0 %477
        %481 = vset.pattern.permute.xlu0 0
        %482 = vperm.xlu0 %481, %v420
        %v483 = vpop.permute.xlu0 %482
        %486 = vset.pattern.permute.xlu0 0
        %487 = vperm.xlu0 %486, %v421
        %v488 = vpop.permute.xlu0 %487
        %491 = vset.pattern.permute.xlu0 0
        %492 = vperm.xlu0 %491, %v422
        %v493 = vpop.permute.xlu0 %492
        %496 = vset.pattern.permute.xlu0 0
        %497 = vperm.xlu0 %496, %v423
        %v498 = vpop.permute.xlu0 %497
        %501 = vset.pattern.permute.xlu0 0
        %502 = vperm.xlu0 %501, %v424
        %v503 = vpop.permute.xlu0 %502
        %v507 = vlaneseq
        %v508 = vshrl.u32 %v507, 7
        %v509 = vsub.s32 0, %v508
        %v510 = vrot.slane %v407, %v509
        %v511 = vlaneseq
        %v512 = vshrl.u32 %v511, 7
        %v513 = vsub.s32 4, %v512
        %v514 = vrot.slane %v407, %v513
        %v515 = vlaneseq
        %v516 = vshrl.u32 %v515, 7
        %v517 = vsub.s32 0, %v516
        %v518 = vrot.slane %v408, %v517
        %v519 = vlaneseq
        %v520 = vshrl.u32 %v519, 7
        %v521 = vsub.s32 4, %v520
        %v522 = vrot.slane %v408, %v521
        %v527 = vlaneseq
        %v528 = vshrl.u32 %v527, 7
        %v529 = vsub.s32 0, %v528
        %v530 = vrot.slane %v510, %v529
        %v531 = vlaneseq
        %v532 = vshrl.u32 %v531, 7
        %v533 = vsub.s32 0, %v532
        %v534 = vrot.slane %v514, %v533
        %v535 = vlaneseq
        %v536 = vshrl.u32 %v535, 7
        %v537 = vsub.s32 0, %v536
        %v538 = vrot.slane %v518, %v537
        %v539 = vlaneseq
        %v540 = vshrl.u32 %v539, 7
        %v541 = vsub.s32 0, %v540
        %v542 = vrot.slane %v522, %v541
        %v543 = vmul.f32 %v428, %v530
        %v544 = vmul.f32 %v428, %v534
        %v545 = vmul.f32 %v428, %v538
        %v546 = vmul.f32 %v428, %v542
        %v547 = vmul.f32 %v433, %v530
        %v548 = vmul.f32 %v433, %v534
        %v549 = vmul.f32 %v433, %v538
        %v550 = vmul.f32 %v433, %v542
        %v551 = vmul.f32 %v438, %v530
        %v552 = vmul.f32 %v438, %v534
        %v553 = vmul.f32 %v438, %v538
        %v554 = vmul.f32 %v438, %v542
        %v555 = vmul.f32 %v443, %v530
        %v556 = vmul.f32 %v443, %v534
        %v557 = vmul.f32 %v443, %v538
        %v558 = vmul.f32 %v443, %v542
        %v559 = vmul.f32 %v448, %v530
        %v560 = vmul.f32 %v448, %v534
        %v561 = vmul.f32 %v448, %v538
        %v562 = vmul.f32 %v448, %v542
        %v563 = vmul.f32 %v453, %v530
        %v564 = vmul.f32 %v453, %v534
        %v565 = vmul.f32 %v453, %v538
        %v566 = vmul.f32 %v453, %v542
        %v567 = vmul.f32 %v458, %v530
        %v568 = vmul.f32 %v458, %v534
        %v569 = vmul.f32 %v458, %v538
        %v570 = vmul.f32 %v458, %v542
        %v571 = vmul.f32 %v463, %v530
        %v572 = vmul.f32 %v463, %v534
        %v573 = vmul.f32 %v463, %v538
        %v574 = vmul.f32 %v463, %v542
        %v575 = vmul.f32 %v468, %v530
        %v576 = vmul.f32 %v468, %v534
        %v577 = vmul.f32 %v468, %v538
        %v578 = vmul.f32 %v468, %v542
        %v579 = vmul.f32 %v473, %v530
        %v580 = vmul.f32 %v473, %v534
        %v581 = vmul.f32 %v473, %v538
        %v582 = vmul.f32 %v473, %v542
        %v583 = vmul.f32 %v478, %v530
        %v584 = vmul.f32 %v478, %v534
        %v585 = vmul.f32 %v478, %v538
        %v586 = vmul.f32 %v478, %v542
        %v587 = vmul.f32 %v483, %v530
        %v588 = vmul.f32 %v483, %v534
        %v589 = vmul.f32 %v483, %v538
        %v590 = vmul.f32 %v483, %v542
        %v591 = vmul.f32 %v488, %v530
        %v592 = vmul.f32 %v488, %v534
        %v593 = vmul.f32 %v488, %v538
        %v594 = vmul.f32 %v488, %v542
        %v595 = vmul.f32 %v493, %v530
        %v596 = vmul.f32 %v493, %v534
        %v597 = vmul.f32 %v493, %v538
        %v598 = vmul.f32 %v493, %v542
        %v599 = vmul.f32 %v498, %v530
        %v600 = vmul.f32 %v498, %v534
        %v601 = vmul.f32 %v498, %v538
        %v602 = vmul.f32 %v498, %v542
        %v603 = vmul.f32 %v503, %v530
        %v604 = vmul.f32 %v503, %v534
        %v605 = vmul.f32 %v503, %v538
        %v606 = vmul.f32 %v503, %v542
        %607 = vset.pattern.permute.xlu0 1
        %608 = vperm.xlu0 %607, %v409
        %v609 = vpop.permute.xlu0 %608
        %611 = vset.pattern.permute.xlu0 1
        %612 = vperm.xlu0 %611, %v410
        %v613 = vpop.permute.xlu0 %612
        %615 = vset.pattern.permute.xlu0 1
        %616 = vperm.xlu0 %615, %v411
        %v617 = vpop.permute.xlu0 %616
        %619 = vset.pattern.permute.xlu0 1
        %620 = vperm.xlu0 %619, %v412
        %v621 = vpop.permute.xlu0 %620
        %623 = vset.pattern.permute.xlu0 1
        %624 = vperm.xlu0 %623, %v413
        %v625 = vpop.permute.xlu0 %624
        %627 = vset.pattern.permute.xlu0 1
        %628 = vperm.xlu0 %627, %v414
        %v629 = vpop.permute.xlu0 %628
        %631 = vset.pattern.permute.xlu0 1
        %632 = vperm.xlu0 %631, %v415
        %v633 = vpop.permute.xlu0 %632
        %635 = vset.pattern.permute.xlu0 1
        %636 = vperm.xlu0 %635, %v416
        %v637 = vpop.permute.xlu0 %636
        %639 = vset.pattern.permute.xlu0 1
        %640 = vperm.xlu0 %639, %v417
        %v641 = vpop.permute.xlu0 %640
        %643 = vset.pattern.permute.xlu0 1
        %644 = vperm.xlu0 %643, %v418
        %v645 = vpop.permute.xlu0 %644
        %647 = vset.pattern.permute.xlu0 1
        %648 = vperm.xlu0 %647, %v419
        %v649 = vpop.permute.xlu0 %648
        %651 = vset.pattern.permute.xlu0 1
        %652 = vperm.xlu0 %651, %v420
        %v653 = vpop.permute.xlu0 %652
        %655 = vset.pattern.permute.xlu0 1
        %656 = vperm.xlu0 %655, %v421
        %v657 = vpop.permute.xlu0 %656
        %659 = vset.pattern.permute.xlu0 1
        %660 = vperm.xlu0 %659, %v422
        %v661 = vpop.permute.xlu0 %660
        %663 = vset.pattern.permute.xlu0 1
        %664 = vperm.xlu0 %663, %v423
        %v665 = vpop.permute.xlu0 %664
        %667 = vset.pattern.permute.xlu0 1
        %668 = vperm.xlu0 %667, %v424
        %v669 = vpop.permute.xlu0 %668
        %v671 = vlaneseq
        %v672 = vshrl.u32 %v671, 7
        %v673 = vsub.s32 1, %v672
        %v674 = vrot.slane %v407, %v673
        %v675 = vlaneseq
        %v676 = vshrl.u32 %v675, 7
        %v677 = vsub.s32 5, %v676
        %v678 = vrot.slane %v407, %v677
        %v679 = vlaneseq
        %v680 = vshrl.u32 %v679, 7
        %v681 = vsub.s32 1, %v680
        %v682 = vrot.slane %v408, %v681
        %v683 = vlaneseq
        %v684 = vshrl.u32 %v683, 7
        %v685 = vsub.s32 5, %v684
        %v686 = vrot.slane %v408, %v685
        %v691 = vlaneseq
        %v692 = vshrl.u32 %v691, 7
        %v693 = vsub.s32 1, %v692
        %v694 = vrot.slane %v674, %v693
        %v695 = vlaneseq
        %v696 = vshrl.u32 %v695, 7
        %v697 = vsub.s32 1, %v696
        %v698 = vrot.slane %v678, %v697
        %v699 = vlaneseq
        %v700 = vshrl.u32 %v699, 7
        %v701 = vsub.s32 1, %v700
        %v702 = vrot.slane %v682, %v701
        %v703 = vlaneseq
        %v704 = vshrl.u32 %v703, 7
        %v705 = vsub.s32 1, %v704
        %v706 = vrot.slane %v686, %v705
        %v707 = vmul.f32 %v609, %v694
        %v708 = vmul.f32 %v609, %v698
        %v709 = vmul.f32 %v609, %v702
        %v710 = vmul.f32 %v609, %v706
        %v711 = vmul.f32 %v613, %v694
        %v712 = vmul.f32 %v613, %v698
        %v713 = vmul.f32 %v613, %v702
        %v714 = vmul.f32 %v613, %v706
        %v715 = vmul.f32 %v617, %v694
        %v716 = vmul.f32 %v617, %v698
        %v717 = vmul.f32 %v617, %v702
        %v718 = vmul.f32 %v617, %v706
        %v719 = vmul.f32 %v621, %v694
        %v720 = vmul.f32 %v621, %v698
        %v721 = vmul.f32 %v621, %v702
        %v722 = vmul.f32 %v621, %v706
        %v723 = vmul.f32 %v625, %v694
        %v724 = vmul.f32 %v625, %v698
        %v725 = vmul.f32 %v625, %v702
        %v726 = vmul.f32 %v625, %v706
        %v727 = vmul.f32 %v629, %v694
        %v728 = vmul.f32 %v629, %v698
        %v729 = vmul.f32 %v629, %v702
        %v730 = vmul.f32 %v629, %v706
        %v731 = vmul.f32 %v633, %v694
        %v732 = vmul.f32 %v633, %v698
        %v733 = vmul.f32 %v633, %v702
        %v734 = vmul.f32 %v633, %v706
        %v735 = vmul.f32 %v637, %v694
        %v736 = vmul.f32 %v637, %v698
        %v737 = vmul.f32 %v637, %v702
        %v738 = vmul.f32 %v637, %v706
        %v739 = vmul.f32 %v641, %v694
        %v740 = vmul.f32 %v641, %v698
        %v741 = vmul.f32 %v641, %v702
        %v742 = vmul.f32 %v641, %v706
        %v743 = vmul.f32 %v645, %v694
        %v744 = vmul.f32 %v645, %v698
        %v745 = vmul.f32 %v645, %v702
        %v746 = vmul.f32 %v645, %v706
        %v747 = vmul.f32 %v649, %v694
        %v748 = vmul.f32 %v649, %v698
        %v749 = vmul.f32 %v649, %v702
        %v750 = vmul.f32 %v649, %v706
        %v751 = vmul.f32 %v653, %v694
        %v752 = vmul.f32 %v653, %v698
        %v753 = vmul.f32 %v653, %v702
        %v754 = vmul.f32 %v653, %v706
        %v755 = vmul.f32 %v657, %v694
        %v756 = vmul.f32 %v657, %v698
        %v757 = vmul.f32 %v657, %v702
        %v758 = vmul.f32 %v657, %v706
        %v759 = vmul.f32 %v661, %v694
        %v760 = vmul.f32 %v661, %v698
        %v761 = vmul.f32 %v661, %v702
        %v762 = vmul.f32 %v661, %v706
        %v763 = vmul.f32 %v665, %v694
        %v764 = vmul.f32 %v665, %v698
        %v765 = vmul.f32 %v665, %v702
        %v766 = vmul.f32 %v665, %v706
        %v767 = vmul.f32 %v669, %v694
        %v768 = vmul.f32 %v669, %v698
        %v769 = vmul.f32 %v669, %v702
        %v770 = vmul.f32 %v669, %v706
        %v771 = vadd.f32 %v543, %v707
        %v772 = vadd.f32 %v544, %v708
        %v773 = vadd.f32 %v545, %v709
        %v774 = vadd.f32 %v546, %v710
        %v775 = vadd.f32 %v547, %v711
        %v776 = vadd.f32 %v548, %v712
        %v777 = vadd.f32 %v549, %v713
        %v778 = vadd.f32 %v550, %v714
        %v779 = vadd.f32 %v551, %v715
        %v780 = vadd.f32 %v552, %v716
        %v781 = vadd.f32 %v553, %v717
        %v782 = vadd.f32 %v554, %v718
        %v783 = vadd.f32 %v555, %v719
        %v784 = vadd.f32 %v556, %v720
        %v785 = vadd.f32 %v557, %v721
        %v786 = vadd.f32 %v558, %v722
        %v787 = vadd.f32 %v559, %v723
        %v788 = vadd.f32 %v560, %v724
        %v789 = vadd.f32 %v561, %v725
        %v790 = vadd.f32 %v562, %v726
        %v791 = vadd.f32 %v563, %v727
        %v792 = vadd.f32 %v564, %v728
        %v793 = vadd.f32 %v565, %v729
        %v794 = vadd.f32 %v566, %v730
        %v795 = vadd.f32 %v567, %v731
        %v796 = vadd.f32 %v568, %v732
        %v797 = vadd.f32 %v569, %v733
        %v798 = vadd.f32 %v570, %v734
        %v799 = vadd.f32 %v571, %v735
        %v800 = vadd.f32 %v572, %v736
        %v801 = vadd.f32 %v573, %v737
        %v802 = vadd.f32 %v574, %v738
        %v803 = vadd.f32 %v575, %v739
        %v804 = vadd.f32 %v576, %v740
        %v805 = vadd.f32 %v577, %v741
        %v806 = vadd.f32 %v578, %v742
        %v807 = vadd.f32 %v579, %v743
        %v808 = vadd.f32 %v580, %v744
        %v809 = vadd.f32 %v581, %v745
        %v810 = vadd.f32 %v582, %v746
        %v811 = vadd.f32 %v583, %v747
        %v812 = vadd.f32 %v584, %v748
        %v813 = vadd.f32 %v585, %v749
        %v814 = vadd.f32 %v586, %v750
        %v815 = vadd.f32 %v587, %v751
        %v816 = vadd.f32 %v588, %v752
        %v817 = vadd.f32 %v589, %v753
        %v818 = vadd.f32 %v590, %v754
        %v819 = vadd.f32 %v591, %v755
        %v820 = vadd.f32 %v592, %v756
        %v821 = vadd.f32 %v593, %v757
        %v822 = vadd.f32 %v594, %v758
        %v823 = vadd.f32 %v595, %v759
        %v824 = vadd.f32 %v596, %v760
        %v825 = vadd.f32 %v597, %v761
        %v826 = vadd.f32 %v598, %v762
        %v827 = vadd.f32 %v599, %v763
        %v828 = vadd.f32 %v600, %v764
        %v829 = vadd.f32 %v601, %v765
        %v830 = vadd.f32 %v602, %v766
        %v831 = vadd.f32 %v603, %v767
        %v832 = vadd.f32 %v604, %v768
        %v833 = vadd.f32 %v605, %v769
        %v834 = vadd.f32 %v606, %v770
        %835 = vset.pattern.permute.xlu0 2
        %836 = vperm.xlu0 %835, %v409
        %v837 = vpop.permute.xlu0 %836
        %839 = vset.pattern.permute.xlu0 2
        %840 = vperm.xlu0 %839, %v410
        %v841 = vpop.permute.xlu0 %840
        %843 = vset.pattern.permute.xlu0 2
        %844 = vperm.xlu0 %843, %v411
        %v845 = vpop.permute.xlu0 %844
        %847 = vset.pattern.permute.xlu0 2
        %848 = vperm.xlu0 %847, %v412
        %v849 = vpop.permute.xlu0 %848
        %851 = vset.pattern.permute.xlu0 2
        %852 = vperm.xlu0 %851, %v413
        %v853 = vpop.permute.xlu0 %852
        %855 = vset.pattern.permute.xlu0 2
        %856 = vperm.xlu0 %855, %v414
        %v857 = vpop.permute.xlu0 %856
        %859 = vset.pattern.permute.xlu0 2
        %860 = vperm.xlu0 %859, %v415
        %v861 = vpop.permute.xlu0 %860
        %863 = vset.pattern.permute.xlu0 2
        %864 = vperm.xlu0 %863, %v416
        %v865 = vpop.permute.xlu0 %864
        %867 = vset.pattern.permute.xlu0 2
        %868 = vperm.xlu0 %867, %v417
        %v869 = vpop.permute.xlu0 %868
        %871 = vset.pattern.permute.xlu0 2
        %872 = vperm.xlu0 %871, %v418
        %v873 = vpop.permute.xlu0 %872
        %875 = vset.pattern.permute.xlu0 2
        %876 = vperm.xlu0 %875, %v419
        %v877 = vpop.permute.xlu0 %876
        %879 = vset.pattern.permute.xlu0 2
        %880 = vperm.xlu0 %879, %v420
        %v881 = vpop.permute.xlu0 %880
        %883 = vset.pattern.permute.xlu0 2
        %884 = vperm.xlu0 %883, %v421
        %v885 = vpop.permute.xlu0 %884
        %887 = vset.pattern.permute.xlu0 2
        %888 = vperm.xlu0 %887, %v422
        %v889 = vpop.permute.xlu0 %888
        %891 = vset.pattern.permute.xlu0 2
        %892 = vperm.xlu0 %891, %v423
        %v893 = vpop.permute.xlu0 %892
        %895 = vset.pattern.permute.xlu0 2
        %896 = vperm.xlu0 %895, %v424
        %v897 = vpop.permute.xlu0 %896
        %v899 = vlaneseq
        %v900 = vshrl.u32 %v899, 7
        %v901 = vsub.s32 2, %v900
        %v902 = vrot.slane %v407, %v901
        %v903 = vlaneseq
        %v904 = vshrl.u32 %v903, 7
        %v905 = vsub.s32 6, %v904
        %v906 = vrot.slane %v407, %v905
        %v907 = vlaneseq
        %v908 = vshrl.u32 %v907, 7
        %v909 = vsub.s32 2, %v908
        %v910 = vrot.slane %v408, %v909
        %v911 = vlaneseq
        %v912 = vshrl.u32 %v911, 7
        %v913 = vsub.s32 6, %v912
        %v914 = vrot.slane %v408, %v913
        %v919 = vlaneseq
        %v920 = vshrl.u32 %v919, 7
        %v921 = vsub.s32 2, %v920
        %v922 = vrot.slane %v902, %v921
        %v923 = vlaneseq
        %v924 = vshrl.u32 %v923, 7
        %v925 = vsub.s32 2, %v924
        %v926 = vrot.slane %v906, %v925
        %v927 = vlaneseq
        %v928 = vshrl.u32 %v927, 7
        %v929 = vsub.s32 2, %v928
        %v930 = vrot.slane %v910, %v929
        %v931 = vlaneseq
        %v932 = vshrl.u32 %v931, 7
        %v933 = vsub.s32 2, %v932
        %v934 = vrot.slane %v914, %v933
        %v935 = vmul.f32 %v837, %v922
        %v936 = vmul.f32 %v837, %v926
        %v937 = vmul.f32 %v837, %v930
        %v938 = vmul.f32 %v837, %v934
        %v939 = vmul.f32 %v841, %v922
        %v940 = vmul.f32 %v841, %v926
        %v941 = vmul.f32 %v841, %v930
        %v942 = vmul.f32 %v841, %v934
        %v943 = vmul.f32 %v845, %v922
        %v944 = vmul.f32 %v845, %v926
        %v945 = vmul.f32 %v845, %v930
        %v946 = vmul.f32 %v845, %v934
        %v947 = vmul.f32 %v849, %v922
        %v948 = vmul.f32 %v849, %v926
        %v949 = vmul.f32 %v849, %v930
        %v950 = vmul.f32 %v849, %v934
        %v951 = vmul.f32 %v853, %v922
        %v952 = vmul.f32 %v853, %v926
        %v953 = vmul.f32 %v853, %v930
        %v954 = vmul.f32 %v853, %v934
        %v955 = vmul.f32 %v857, %v922
        %v956 = vmul.f32 %v857, %v926
        %v957 = vmul.f32 %v857, %v930
        %v958 = vmul.f32 %v857, %v934
        %v959 = vmul.f32 %v861, %v922
        %v960 = vmul.f32 %v861, %v926
        %v961 = vmul.f32 %v861, %v930
        %v962 = vmul.f32 %v861, %v934
        %v963 = vmul.f32 %v865, %v922
        %v964 = vmul.f32 %v865, %v926
        %v965 = vmul.f32 %v865, %v930
        %v966 = vmul.f32 %v865, %v934
        %v967 = vmul.f32 %v869, %v922
        %v968 = vmul.f32 %v869, %v926
        %v969 = vmul.f32 %v869, %v930
        %v970 = vmul.f32 %v869, %v934
        %v971 = vmul.f32 %v873, %v922
        %v972 = vmul.f32 %v873, %v926
        %v973 = vmul.f32 %v873, %v930
        %v974 = vmul.f32 %v873, %v934
        %v975 = vmul.f32 %v877, %v922
        %v976 = vmul.f32 %v877, %v926
        %v977 = vmul.f32 %v877, %v930
        %v978 = vmul.f32 %v877, %v934
        %v979 = vmul.f32 %v881, %v922
        %v980 = vmul.f32 %v881, %v926
        %v981 = vmul.f32 %v881, %v930
        %v982 = vmul.f32 %v881, %v934
        %v983 = vmul.f32 %v885, %v922
        %v984 = vmul.f32 %v885, %v926
        %v985 = vmul.f32 %v885, %v930
        %v986 = vmul.f32 %v885, %v934
        %v987 = vmul.f32 %v889, %v922
        %v988 = vmul.f32 %v889, %v926
        %v989 = vmul.f32 %v889, %v930
        %v990 = vmul.f32 %v889, %v934
        %v991 = vmul.f32 %v893, %v922
        %v992 = vmul.f32 %v893, %v926
        %v993 = vmul.f32 %v893, %v930
        %v994 = vmul.f32 %v893, %v934
        %v995 = vmul.f32 %v897, %v922
        %v996 = vmul.f32 %v897, %v926
        %v997 = vmul.f32 %v897, %v930
        %v998 = vmul.f32 %v897, %v934
        %v999 = vadd.f32 %v771, %v935
        %v1000 = vadd.f32 %v772, %v936
        %v1001 = vadd.f32 %v773, %v937
        %v1002 = vadd.f32 %v774, %v938
        %v1003 = vadd.f32 %v775, %v939
        %v1004 = vadd.f32 %v776, %v940
        %v1005 = vadd.f32 %v777, %v941
        %v1006 = vadd.f32 %v778, %v942
        %v1007 = vadd.f32 %v779, %v943
        %v1008 = vadd.f32 %v780, %v944
        %v1009 = vadd.f32 %v781, %v945
        %v1010 = vadd.f32 %v782, %v946
        %v1011 = vadd.f32 %v783, %v947
        %v1012 = vadd.f32 %v784, %v948
        %v1013 = vadd.f32 %v785, %v949
        %v1014 = vadd.f32 %v786, %v950
        %v1015 = vadd.f32 %v787, %v951
        %v1016 = vadd.f32 %v788, %v952
        %v1017 = vadd.f32 %v789, %v953
        %v1018 = vadd.f32 %v790, %v954
        %v1019 = vadd.f32 %v791, %v955
        %v1020 = vadd.f32 %v792, %v956
        %v1021 = vadd.f32 %v793, %v957
        %v1022 = vadd.f32 %v794, %v958
        %v1023 = vadd.f32 %v795, %v959
        %v1024 = vadd.f32 %v796, %v960
        %v1025 = vadd.f32 %v797, %v961
        %v1026 = vadd.f32 %v798, %v962
        %v1027 = vadd.f32 %v799, %v963
        %v1028 = vadd.f32 %v800, %v964
        %v1029 = vadd.f32 %v801, %v965
        %v1030 = vadd.f32 %v802, %v966
        %v1031 = vadd.f32 %v803, %v967
        %v1032 = vadd.f32 %v804, %v968
        %v1033 = vadd.f32 %v805, %v969
        %v1034 = vadd.f32 %v806, %v970
        %v1035 = vadd.f32 %v807, %v971
        %v1036 = vadd.f32 %v808, %v972
        %v1037 = vadd.f32 %v809, %v973
        %v1038 = vadd.f32 %v810, %v974
        %v1039 = vadd.f32 %v811, %v975
        %v1040 = vadd.f32 %v812, %v976
        %v1041 = vadd.f32 %v813, %v977
        %v1042 = vadd.f32 %v814, %v978
        %v1043 = vadd.f32 %v815, %v979
        %v1044 = vadd.f32 %v816, %v980
        %v1045 = vadd.f32 %v817, %v981
        %v1046 = vadd.f32 %v818, %v982
        %v1047 = vadd.f32 %v819, %v983
        %v1048 = vadd.f32 %v820, %v984
        %v1049 = vadd.f32 %v821, %v985
        %v1050 = vadd.f32 %v822, %v986
        %v1051 = vadd.f32 %v823, %v987
        %v1052 = vadd.f32 %v824, %v988
        %v1053 = vadd.f32 %v825, %v989
        %v1054 = vadd.f32 %v826, %v990
        %v1055 = vadd.f32 %v827, %v991
        %v1056 = vadd.f32 %v828, %v992
        %v1057 = vadd.f32 %v829, %v993
        %v1058 = vadd.f32 %v830, %v994
        %v1059 = vadd.f32 %v831, %v995
        %v1060 = vadd.f32 %v832, %v996
        %v1061 = vadd.f32 %v833, %v997
        %v1062 = vadd.f32 %v834, %v998
        %v1063 = vld [vmem:[%s2] sm:$0xff]
        %v1064 = vld [vmem:[%s2 + $0x8] sm:$0xff]
        %v1065 = vld [vmem:[%s2 + $0x10] sm:$0xff]
        %v1066 = vld [vmem:[%s2 + $0x18] sm:$0xff]
        %v1067 = vld [vmem:[%s2 + $0x20] sm:$0xff]
        %v1068 = vld [vmem:[%s2 + $0x28] sm:$0xff]
        %v1069 = vld [vmem:[%s2 + $0x30] sm:$0xff]
        %v1070 = vld [vmem:[%s2 + $0x38] sm:$0xff]
        %v1071 = vld [vmem:[%s2 + $0x40] sm:$0xff]
        %v1072 = vld [vmem:[%s2 + $0x48] sm:$0xff]
        %v1073 = vld [vmem:[%s2 + $0x50] sm:$0xff]
        %v1074 = vld [vmem:[%s2 + $0x58] sm:$0xff]
        %v1075 = vld [vmem:[%s2 + $0x60] sm:$0xff]
        %v1076 = vld [vmem:[%s2 + $0x68] sm:$0xff]
        %v1077 = vld [vmem:[%s2 + $0x70] sm:$0xff]
        %v1078 = vld [vmem:[%s2 + $0x78] sm:$0xff]
        %1080 = vset.pattern.permute.xlu0 0
        %1081 = vperm.xlu0 %1080, %v1063
        %v1082 = vpop.permute.xlu0 %1081
        %1085 = vset.pattern.permute.xlu0 0
        %1086 = vperm.xlu0 %1085, %v1064
        %v1087 = vpop.permute.xlu0 %1086
        %1090 = vset.pattern.permute.xlu0 0
        %1091 = vperm.xlu0 %1090, %v1065
        %v1092 = vpop.permute.xlu0 %1091
        %1095 = vset.pattern.permute.xlu0 0
        %1096 = vperm.xlu0 %1095, %v1066
        %v1097 = vpop.permute.xlu0 %1096
        %1100 = vset.pattern.permute.xlu0 0
        %1101 = vperm.xlu0 %1100, %v1067
        %v1102 = vpop.permute.xlu0 %1101
        %1105 = vset.pattern.permute.xlu0 0
        %1106 = vperm.xlu0 %1105, %v1068
        %v1107 = vpop.permute.xlu0 %1106
        %1110 = vset.pattern.permute.xlu0 0
        %1111 = vperm.xlu0 %1110, %v1069
        %v1112 = vpop.permute.xlu0 %1111
        %1115 = vset.pattern.permute.xlu0 0
        %1116 = vperm.xlu0 %1115, %v1070
        %v1117 = vpop.permute.xlu0 %1116
        %1120 = vset.pattern.permute.xlu0 0
        %1121 = vperm.xlu0 %1120, %v1071
        %v1122 = vpop.permute.xlu0 %1121
        %1125 = vset.pattern.permute.xlu0 0
        %1126 = vperm.xlu0 %1125, %v1072
        %v1127 = vpop.permute.xlu0 %1126
        %1130 = vset.pattern.permute.xlu0 0
        %1131 = vperm.xlu0 %1130, %v1073
        %v1132 = vpop.permute.xlu0 %1131
        %1135 = vset.pattern.permute.xlu0 0
        %1136 = vperm.xlu0 %1135, %v1074
        %v1137 = vpop.permute.xlu0 %1136
        %1140 = vset.pattern.permute.xlu0 0
        %1141 = vperm.xlu0 %1140, %v1075
        %v1142 = vpop.permute.xlu0 %1141
        %1145 = vset.pattern.permute.xlu0 0
        %1146 = vperm.xlu0 %1145, %v1076
        %v1147 = vpop.permute.xlu0 %1146
        %1150 = vset.pattern.permute.xlu0 0
        %1151 = vperm.xlu0 %1150, %v1077
        %v1152 = vpop.permute.xlu0 %1151
        %1155 = vset.pattern.permute.xlu0 0
        %1156 = vperm.xlu0 %1155, %v1078
        %v1157 = vpop.permute.xlu0 %1156
        %v1159 = vadd.f32 %v999, %v1082
        %v1160 = vadd.f32 %v1000, %v1082
        %v1161 = vadd.f32 %v1001, %v1082
        %v1162 = vadd.f32 %v1002, %v1082
        %v1163 = vadd.f32 %v1003, %v1087
        %v1164 = vadd.f32 %v1004, %v1087
        %v1165 = vadd.f32 %v1005, %v1087
        %v1166 = vadd.f32 %v1006, %v1087
        %v1167 = vadd.f32 %v1007, %v1092
        %v1168 = vadd.f32 %v1008, %v1092
        %v1169 = vadd.f32 %v1009, %v1092
        %v1170 = vadd.f32 %v1010, %v1092
        %v1171 = vadd.f32 %v1011, %v1097
        %v1172 = vadd.f32 %v1012, %v1097
        %v1173 = vadd.f32 %v1013, %v1097
        %v1174 = vadd.f32 %v1014, %v1097
        %v1175 = vadd.f32 %v1015, %v1102
        %v1176 = vadd.f32 %v1016, %v1102
        %v1177 = vadd.f32 %v1017, %v1102
        %v1178 = vadd.f32 %v1018, %v1102
        %v1179 = vadd.f32 %v1019, %v1107
        %v1180 = vadd.f32 %v1020, %v1107
        %v1181 = vadd.f32 %v1021, %v1107
        %v1182 = vadd.f32 %v1022, %v1107
        %v1183 = vadd.f32 %v1023, %v1112
        %v1184 = vadd.f32 %v1024, %v1112
        %v1185 = vadd.f32 %v1025, %v1112
        %v1186 = vadd.f32 %v1026, %v1112
        %v1187 = vadd.f32 %v1027, %v1117
        %v1188 = vadd.f32 %v1028, %v1117
        %v1189 = vadd.f32 %v1029, %v1117
        %v1190 = vadd.f32 %v1030, %v1117
        %v1191 = vadd.f32 %v1031, %v1122
        %v1192 = vadd.f32 %v1032, %v1122
        %v1193 = vadd.f32 %v1033, %v1122
        %v1194 = vadd.f32 %v1034, %v1122
        %v1195 = vadd.f32 %v1035, %v1127
        %v1196 = vadd.f32 %v1036, %v1127
        %v1197 = vadd.f32 %v1037, %v1127
        %v1198 = vadd.f32 %v1038, %v1127
        %v1199 = vadd.f32 %v1039, %v1132
        %v1200 = vadd.f32 %v1040, %v1132
        %v1201 = vadd.f32 %v1041, %v1132
        %v1202 = vadd.f32 %v1042, %v1132
        %v1203 = vadd.f32 %v1043, %v1137
        %v1204 = vadd.f32 %v1044, %v1137
        %v1205 = vadd.f32 %v1045, %v1137
        %v1206 = vadd.f32 %v1046, %v1137
        %v1207 = vadd.f32 %v1047, %v1142
        %v1208 = vadd.f32 %v1048, %v1142
        %v1209 = vadd.f32 %v1049, %v1142
        %v1210 = vadd.f32 %v1050, %v1142
        %v1211 = vadd.f32 %v1051, %v1147
        %v1212 = vadd.f32 %v1052, %v1147
        %v1213 = vadd.f32 %v1053, %v1147
        %v1214 = vadd.f32 %v1054, %v1147
        %v1215 = vadd.f32 %v1055, %v1152
        %v1216 = vadd.f32 %v1056, %v1152
        %v1217 = vadd.f32 %v1057, %v1152
        %v1218 = vadd.f32 %v1058, %v1152
        %v1219 = vadd.f32 %v1059, %v1157
        %v1220 = vadd.f32 %v1060, %v1157
        %v1221 = vadd.f32 %v1061, %v1157
        %v1222 = vadd.f32 %v1062, %v1157
        %v1223 = vmax.f32 %v1159, 0.0
        %v1224 = vmax.f32 %v1160, 0.0
        %v1225 = vmax.f32 %v1161, 0.0
        %v1226 = vmax.f32 %v1162, 0.0
        %v1227 = vmax.f32 %v1163, 0.0
        %v1228 = vmax.f32 %v1164, 0.0
        %v1229 = vmax.f32 %v1165, 0.0
        %v1230 = vmax.f32 %v1166, 0.0
        %v1231 = vmax.f32 %v1167, 0.0
        %v1232 = vmax.f32 %v1168, 0.0
        %v1233 = vmax.f32 %v1169, 0.0
        %v1234 = vmax.f32 %v1170, 0.0
        %v1235 = vmax.f32 %v1171, 0.0
        %v1236 = vmax.f32 %v1172, 0.0
        %v1237 = vmax.f32 %v1173, 0.0
        %v1238 = vmax.f32 %v1174, 0.0
        %v1239 = vmax.f32 %v1175, 0.0
        %v1240 = vmax.f32 %v1176, 0.0
        %v1241 = vmax.f32 %v1177, 0.0
        %v1242 = vmax.f32 %v1178, 0.0
        %v1243 = vmax.f32 %v1179, 0.0
        %v1244 = vmax.f32 %v1180, 0.0
        %v1245 = vmax.f32 %v1181, 0.0
        %v1246 = vmax.f32 %v1182, 0.0
        %v1247 = vmax.f32 %v1183, 0.0
        %v1248 = vmax.f32 %v1184, 0.0
        %v1249 = vmax.f32 %v1185, 0.0
        %v1250 = vmax.f32 %v1186, 0.0
        %v1251 = vmax.f32 %v1187, 0.0
        %v1252 = vmax.f32 %v1188, 0.0
        %v1253 = vmax.f32 %v1189, 0.0
        %v1254 = vmax.f32 %v1190, 0.0
        %v1255 = vmax.f32 %v1191, 0.0
        %v1256 = vmax.f32 %v1192, 0.0
        %v1257 = vmax.f32 %v1193, 0.0
        %v1258 = vmax.f32 %v1194, 0.0
        %v1259 = vmax.f32 %v1195, 0.0
        %v1260 = vmax.f32 %v1196, 0.0
        %v1261 = vmax.f32 %v1197, 0.0
        %v1262 = vmax.f32 %v1198, 0.0
        %v1263 = vmax.f32 %v1199, 0.0
        %v1264 = vmax.f32 %v1200, 0.0
        %v1265 = vmax.f32 %v1201, 0.0
        %v1266 = vmax.f32 %v1202, 0.0
        %v1267 = vmax.f32 %v1203, 0.0
        %v1268 = vmax.f32 %v1204, 0.0
        %v1269 = vmax.f32 %v1205, 0.0
        %v1270 = vmax.f32 %v1206, 0.0
        %v1271 = vmax.f32 %v1207, 0.0
        %v1272 = vmax.f32 %v1208, 0.0
        %v1273 = vmax.f32 %v1209, 0.0
        %v1274 = vmax.f32 %v1210, 0.0
        %v1275 = vmax.f32 %v1211, 0.0
        %v1276 = vmax.f32 %v1212, 0.0
        %v1277 = vmax.f32 %v1213, 0.0
        %v1278 = vmax.f32 %v1214, 0.0
        %v1279 = vmax.f32 %v1215, 0.0
        %v1280 = vmax.f32 %v1216, 0.0
        %v1281 = vmax.f32 %v1217, 0.0
        %v1282 = vmax.f32 %v1218, 0.0
        %v1283 = vmax.f32 %v1219, 0.0
        %v1284 = vmax.f32 %v1220, 0.0
        %v1285 = vmax.f32 %v1221, 0.0
        %v1286 = vmax.f32 %v1222, 0.0
        %v1287 = vld [vmem:[#allocation2] sm:$0xf]
        %v1288 = vld [vmem:[#allocation2 + $0x4] sm:$0xf]
        %v1289 = vld [vmem:[#allocation2 + $0x8] sm:$0xf]
        %v1290 = vld [vmem:[#allocation2 + $0xc] sm:$0xf]
        %v1291 = vld [vmem:[#allocation2 + $0x10] sm:$0xf]
        %v1292 = vld [vmem:[#allocation2 + $0x14] sm:$0xf]
        %v1293 = vld [vmem:[#allocation2 + $0x18] sm:$0xf]
        %v1294 = vld [vmem:[#allocation2 + $0x1c] sm:$0xf]
        %v1295 = vld [vmem:[#allocation2 + $0x20] sm:$0xf]
        %v1296 = vld [vmem:[#allocation2 + $0x24] sm:$0xf]
        %v1297 = vld [vmem:[#allocation2 + $0x28] sm:$0xf]
        %v1298 = vld [vmem:[#allocation2 + $0x2c] sm:$0xf]
        %v1299 = vld [vmem:[#allocation2 + $0x30] sm:$0xf]
        %v1300 = vld [vmem:[#allocation2 + $0x34] sm:$0xf]
        %v1301 = vld [vmem:[#allocation2 + $0x38] sm:$0xf]
        %v1302 = vld [vmem:[#allocation2 + $0x3c] sm:$0xf]
        %v1303 = vpack.c.bf16 %v1227, %v1223
        %v1304 = vpack.c.bf16 %v1228, %v1224
        %v1305 = vpack.c.bf16 %v1229, %v1225
        %v1306 = vpack.c.bf16 %v1230, %v1226
        %v1307 = vpack.c.bf16 %v1235, %v1231
        %v1308 = vpack.c.bf16 %v1236, %v1232
        %v1309 = vpack.c.bf16 %v1237, %v1233
        %v1310 = vpack.c.bf16 %v1238, %v1234
        %v1311 = vpack.c.bf16 %v1243, %v1239
        %v1312 = vpack.c.bf16 %v1244, %v1240
        %v1313 = vpack.c.bf16 %v1245, %v1241
        %v1314 = vpack.c.bf16 %v1246, %v1242
        %v1315 = vpack.c.bf16 %v1251, %v1247
        %v1316 = vpack.c.bf16 %v1252, %v1248
        %v1317 = vpack.c.bf16 %v1253, %v1249
        %v1318 = vpack.c.bf16 %v1254, %v1250
        %v1319 = vpack.c.bf16 %v1259, %v1255
        %v1320 = vpack.c.bf16 %v1260, %v1256
        %v1321 = vpack.c.bf16 %v1261, %v1257
        %v1322 = vpack.c.bf16 %v1262, %v1258
        %v1323 = vpack.c.bf16 %v1267, %v1263
        %v1324 = vpack.c.bf16 %v1268, %v1264
        %v1325 = vpack.c.bf16 %v1269, %v1265
        %v1326 = vpack.c.bf16 %v1270, %v1266
        %v1327 = vpack.c.bf16 %v1275, %v1271
        %v1328 = vpack.c.bf16 %v1276, %v1272
        %v1329 = vpack.c.bf16 %v1277, %v1273
        %v1330 = vpack.c.bf16 %v1278, %v1274
        %v1331 = vpack.c.bf16 %v1283, %v1279
        %v1332 = vpack.c.bf16 %v1284, %v1280
        %v1333 = vpack.c.bf16 %v1285, %v1281
        %v1334 = vpack.c.bf16 %v1286, %v1282
        %v1335 = vld [vmem:[%s4] sm:$0xff]
        %v1336 = vld [vmem:[%s4 + $0x8] sm:$0xff]
        %v1337 = vld [vmem:[%s4 + $0x10] sm:$0xff]
        %v1338 = vld [vmem:[%s4 + $0x18] sm:$0xff]
        %v1339 = vld [vmem:[%s4 + $0x20] sm:$0xff]
        %v1340 = vld [vmem:[%s4 + $0x28] sm:$0xff]
        %v1341 = vld [vmem:[%s4 + $0x30] sm:$0xff]
        %v1342 = vld [vmem:[%s4 + $0x38] sm:$0xff]
        %v1343 = vld [vmem:[%s4 + $0x40] sm:$0xff]
        %v1344 = vld [vmem:[%s4 + $0x48] sm:$0xff]
        %v1345 = vld [vmem:[%s4 + $0x50] sm:$0xff]
        %v1346 = vld [vmem:[%s4 + $0x58] sm:$0xff]
        %v1347 = vld [vmem:[%s4 + $0x60] sm:$0xff]
        %v1348 = vld [vmem:[%s4 + $0x68] sm:$0xff]
        %v1349 = vld [vmem:[%s4 + $0x70] sm:$0xff]
        %v1350 = vld [vmem:[%s4 + $0x78] sm:$0xff]
        %1352 = vset.pattern.permute.xlu0 0
        %1353 = vperm.xlu0 %1352, %v1335
        %v1354 = vpop.permute.xlu0 %1353
        %1357 = vset.pattern.permute.xlu0 0
        %1358 = vperm.xlu0 %1357, %v1336
        %v1359 = vpop.permute.xlu0 %1358
        %1362 = vset.pattern.permute.xlu0 0
        %1363 = vperm.xlu0 %1362, %v1337
        %v1364 = vpop.permute.xlu0 %1363
        %1367 = vset.pattern.permute.xlu0 0
        %1368 = vperm.xlu0 %1367, %v1338
        %v1369 = vpop.permute.xlu0 %1368
        %1372 = vset.pattern.permute.xlu0 0
        %1373 = vperm.xlu0 %1372, %v1339
        %v1374 = vpop.permute.xlu0 %1373
        %1377 = vset.pattern.permute.xlu0 0
        %1378 = vperm.xlu0 %1377, %v1340
        %v1379 = vpop.permute.xlu0 %1378
        %1382 = vset.pattern.permute.xlu0 0
        %1383 = vperm.xlu0 %1382, %v1341
        %v1384 = vpop.permute.xlu0 %1383
        %1387 = vset.pattern.permute.xlu0 0
        %1388 = vperm.xlu0 %1387, %v1342
        %v1389 = vpop.permute.xlu0 %1388
        %1392 = vset.pattern.permute.xlu0 0
        %1393 = vperm.xlu0 %1392, %v1343
        %v1394 = vpop.permute.xlu0 %1393
        %1397 = vset.pattern.permute.xlu0 0
        %1398 = vperm.xlu0 %1397, %v1344
        %v1399 = vpop.permute.xlu0 %1398
        %1402 = vset.pattern.permute.xlu0 0
        %1403 = vperm.xlu0 %1402, %v1345
        %v1404 = vpop.permute.xlu0 %1403
        %1407 = vset.pattern.permute.xlu0 0
        %1408 = vperm.xlu0 %1407, %v1346
        %v1409 = vpop.permute.xlu0 %1408
        %1412 = vset.pattern.permute.xlu0 0
        %1413 = vperm.xlu0 %1412, %v1347
        %v1414 = vpop.permute.xlu0 %1413
        %1417 = vset.pattern.permute.xlu0 0
        %1418 = vperm.xlu0 %1417, %v1348
        %v1419 = vpop.permute.xlu0 %1418
        %1422 = vset.pattern.permute.xlu0 0
        %1423 = vperm.xlu0 %1422, %v1349
        %v1424 = vpop.permute.xlu0 %1423
        %1427 = vset.pattern.permute.xlu0 0
        %1428 = vperm.xlu0 %1427, %v1350
        %v1429 = vpop.permute.xlu0 %1428
        %v1447 = vunpack.c.l.b16 %v1287
        %v1448 = vunpack.c.l.b16 %v1288
        %v1449 = vunpack.c.l.b16 %v1289
        %v1450 = vunpack.c.l.b16 %v1290
        %v1451 = vunpack.c.l.b16 %v1291
        %v1452 = vunpack.c.l.b16 %v1292
        %v1453 = vunpack.c.l.b16 %v1293
        %v1454 = vunpack.c.l.b16 %v1294
        %v1455 = vunpack.c.l.b16 %v1295
        %v1456 = vunpack.c.l.b16 %v1296
        %v1457 = vunpack.c.l.b16 %v1297
        %v1458 = vunpack.c.l.b16 %v1298
        %v1459 = vunpack.c.l.b16 %v1299
        %v1460 = vunpack.c.l.b16 %v1300
        %v1461 = vunpack.c.l.b16 %v1301
        %v1462 = vunpack.c.l.b16 %v1302
        %v1463 = vpack.c.b16 %v1448, %v1447
        %v1464 = vpack.c.b16 %v1450, %v1449
        %v1465 = vpack.c.b16 %v1452, %v1451
        %v1466 = vpack.c.b16 %v1454, %v1453
        %v1467 = vpack.c.b16 %v1456, %v1455
        %v1468 = vpack.c.b16 %v1458, %v1457
        %v1469 = vpack.c.b16 %v1460, %v1459
        %v1470 = vpack.c.b16 %v1462, %v1461
        %1479 = vmatprep.subr.bf16.mxu0 %v1332
        %1480 = vmatpush1.bf16.msra.mxu0 %v1331
        %1481 = vmatprep.subr.bf16.mxu0 %v1328
        %1482 = vmatpush1.bf16.msra.mxu0 %v1327
        %1483 = vmatprep.subr.bf16.mxu0 %v1324
        %1484 = vmatpush1.bf16.msra.mxu0 %v1323
        %1485 = vmatprep.subr.bf16.mxu0 %v1320
        %1486 = vmatpush1.bf16.msra.mxu0 %v1319
        %1487 = vmatprep.subr.bf16.mxu0 %v1316
        %1488 = vmatpush1.bf16.msra.mxu0 %v1315
        %1489 = vmatprep.subr.bf16.mxu0 %v1312
        %1490 = vmatpush1.bf16.msra.mxu0 %v1311
        %1491 = vmatprep.subr.bf16.mxu0 %v1308
        %1492 = vmatpush1.bf16.msra.mxu0 %v1307
        %1493 = vmatprep.subr.bf16.mxu0 %v1304
        %1494 = vmatpush1.bf16.msra.mxu0 %v1303
        %1495 = vmatprep.subr.bf16.mxu0 0
        %1496 = vmatpush2.bf16.msra.mxu0 0
        %1497 = vmatprep.subr.bf16.mxu0 0
        %1498 = vmatpush2.bf16.msra.mxu0 0
        %1499 = vmatprep.subr.bf16.mxu0 0
        %1500 = vmatpush2.bf16.msra.mxu0 0
        %1501 = vmatprep.subr.bf16.mxu0 0
        %1502 = vmatpush2.bf16.msra.mxu0 0
        %1503 = vmatprep.subr.bf16.mxu0 0
        %1504 = vmatpush2.bf16.msra.mxu0 0
        %1505 = vmatprep.subr.bf16.mxu0 0
        %1506 = vmatpush2.bf16.msra.mxu0 0
        %1507 = vmatprep.subr.bf16.mxu0 0
        %1508 = vmatpush2.bf16.msra.mxu0 0
        %1509 = vmatprep.subr.bf16.mxu0 0
        %1510 = vmatpush2.bf16.msra.mxu0 0
        %1511 = vmatprep.mubr.bf16.mxu0 0
        %1512 = vmatmul.mubr.bf16.gmra.mxu0 %v1463
        %v1513 = vpop.f32.mrf.mxu0
        %v1514 = vadd.f32 %v1354, %v1513
        %v1515 = vpop.f32.mrf.mxu0
        %v1516 = vadd.f32 %v1354, %v1515
        %v1517 = vpop.f32.mrf.mxu0
        %v1518 = vadd.f32 %v1359, %v1517
        %v1519 = vpop.f32.mrf.mxu0
        %v1520 = vadd.f32 %v1359, %v1519
        %1521 = vmatprep.mubr.bf16.mxu0 0
        %1522 = vmatmul.mubr.bf16.gmra.mxu0 %v1464
        %v1523 = vpop.f32.mrf.mxu0
        %v1524 = vadd.f32 %v1364, %v1523
        %v1525 = vpop.f32.mrf.mxu0
        %v1526 = vadd.f32 %v1364, %v1525
        %v1527 = vpop.f32.mrf.mxu0
        %v1528 = vadd.f32 %v1369, %v1527
        %v1529 = vpop.f32.mrf.mxu0
        %v1530 = vadd.f32 %v1369, %v1529
        %1531 = vmatprep.mubr.bf16.mxu0 0
        %1532 = vmatmul.mubr.bf16.gmra.mxu0 %v1465
        %v1533 = vpop.f32.mrf.mxu0
        %v1534 = vadd.f32 %v1374, %v1533
        %v1535 = vpop.f32.mrf.mxu0
        %v1536 = vadd.f32 %v1374, %v1535
        %v1537 = vpop.f32.mrf.mxu0
        %v1538 = vadd.f32 %v1379, %v1537
        %v1539 = vpop.f32.mrf.mxu0
        %v1540 = vadd.f32 %v1379, %v1539
        %1541 = vmatprep.mubr.bf16.mxu0 0
        %1542 = vmatmul.mubr.bf16.gmra.mxu0 %v1466
        %v1543 = vpop.f32.mrf.mxu0
        %v1544 = vadd.f32 %v1384, %v1543
        %v1545 = vpop.f32.mrf.mxu0
        %v1546 = vadd.f32 %v1384, %v1545
        %v1547 = vpop.f32.mrf.mxu0
        %v1548 = vadd.f32 %v1389, %v1547
        %v1549 = vpop.f32.mrf.mxu0
        %v1550 = vadd.f32 %v1389, %v1549
        %1551 = vmatprep.mubr.bf16.mxu0 0
        %1552 = vmatmul.mubr.bf16.gmra.mxu0 %v1467
        %v1553 = vpop.f32.mrf.mxu0
        %v1554 = vadd.f32 %v1394, %v1553
        %v1555 = vpop.f32.mrf.mxu0
        %v1556 = vadd.f32 %v1394, %v1555
        %v1557 = vpop.f32.mrf.mxu0
        %v1558 = vadd.f32 %v1399, %v1557
        %v1559 = vpop.f32.mrf.mxu0
        %v1560 = vadd.f32 %v1399, %v1559
        %1561 = vmatprep.mubr.bf16.mxu0 0
        %1562 = vmatmul.mubr.bf16.gmra.mxu0 %v1468
        %v1563 = vpop.f32.mrf.mxu0
        %v1564 = vadd.f32 %v1404, %v1563
        %v1565 = vpop.f32.mrf.mxu0
        %v1566 = vadd.f32 %v1404, %v1565
        %v1567 = vpop.f32.mrf.mxu0
        %v1568 = vadd.f32 %v1409, %v1567
        %v1569 = vpop.f32.mrf.mxu0
        %v1570 = vadd.f32 %v1409, %v1569
        %1571 = vmatprep.mubr.bf16.mxu0 0
        %1572 = vmatmul.mubr.bf16.gmra.mxu0 %v1469
        %v1573 = vpop.f32.mrf.mxu0
        %v1574 = vadd.f32 %v1414, %v1573
        %v1575 = vpop.f32.mrf.mxu0
        %v1576 = vadd.f32 %v1414, %v1575
        %v1577 = vpop.f32.mrf.mxu0
        %v1578 = vadd.f32 %v1419, %v1577
        %v1579 = vpop.f32.mrf.mxu0
        %v1580 = vadd.f32 %v1419, %v1579
        %1581 = vmatprep.mubr.bf16.mxu0 0
        %1582 = vmatmul.mubr.bf16.gmra.mxu0 %v1470
        %v1583 = vpop.f32.mrf.mxu0
        %v1584 = vadd.f32 %v1424, %v1583
        %v1585 = vpop.f32.mrf.mxu0
        %v1586 = vadd.f32 %v1424, %v1585
        %v1587 = vpop.f32.mrf.mxu0
        %v1588 = vadd.f32 %v1429, %v1587
        %v1589 = vpop.f32.mrf.mxu0
        %v1590 = vadd.f32 %v1429, %v1589
        %1591 = vdwg.mxu0
        %1592 = vmatprep.subr.bf16.mxu0 %v1334
        %1593 = vmatpush1.bf16.msra.mxu0 %v1333
        %1594 = vmatprep.subr.bf16.mxu0 %v1330
        %1595 = vmatpush1.bf16.msra.mxu0 %v1329
        %1596 = vmatprep.subr.bf16.mxu0 %v1326
        %1597 = vmatpush1.bf16.msra.mxu0 %v1325
        %1598 = vmatprep.subr.bf16.mxu0 %v1322
        %1599 = vmatpush1.bf16.msra.mxu0 %v1321
        %1600 = vmatprep.subr.bf16.mxu0 %v1318
        %1601 = vmatpush1.bf16.msra.mxu0 %v1317
        %1602 = vmatprep.subr.bf16.mxu0 %v1314
        %1603 = vmatpush1.bf16.msra.mxu0 %v1313
        %1604 = vmatprep.subr.bf16.mxu0 %v1310
        %1605 = vmatpush1.bf16.msra.mxu0 %v1309
        %1606 = vmatprep.subr.bf16.mxu0 %v1306
        %1607 = vmatpush1.bf16.msra.mxu0 %v1305
        %1608 = vmatprep.subr.bf16.mxu0 0
        %1609 = vmatpush2.bf16.msra.mxu0 0
        %1610 = vmatprep.subr.bf16.mxu0 0
        %1611 = vmatpush2.bf16.msra.mxu0 0
        %1612 = vmatprep.subr.bf16.mxu0 0
        %1613 = vmatpush2.bf16.msra.mxu0 0
        %1614 = vmatprep.subr.bf16.mxu0 0
        %1615 = vmatpush2.bf16.msra.mxu0 0
        %1616 = vmatprep.subr.bf16.mxu0 0
        %1617 = vmatpush2.bf16.msra.mxu0 0
        %1618 = vmatprep.subr.bf16.mxu0 0
        %1619 = vmatpush2.bf16.msra.mxu0 0
        %1620 = vmatprep.subr.bf16.mxu0 0
        %1621 = vmatpush2.bf16.msra.mxu0 0
        %1622 = vmatprep.subr.bf16.mxu0 0
        %1623 = vmatpush2.bf16.msra.mxu0 0
        %1624 = vmatprep.mubr.bf16.mxu0 0
        %1625 = vmatmul.mubr.bf16.gmra.mxu0 %v1463
        %v1626 = vpop.f32.mrf.mxu0
        %v1627 = vadd.f32 %v1354, %v1626
        %v1628 = vpop.f32.mrf.mxu0
        %v1629 = vadd.f32 %v1354, %v1628
        %v1630 = vpop.f32.mrf.mxu0
        %v1631 = vadd.f32 %v1359, %v1630
        %v1632 = vpop.f32.mrf.mxu0
        %v1633 = vadd.f32 %v1359, %v1632
        %1634 = vmatprep.mubr.bf16.mxu0 0
        %1635 = vmatmul.mubr.bf16.gmra.mxu0 %v1464
        %v1636 = vpop.f32.mrf.mxu0
        %v1637 = vadd.f32 %v1364, %v1636
        %v1638 = vpop.f32.mrf.mxu0
        %v1639 = vadd.f32 %v1364, %v1638
        %v1640 = vpop.f32.mrf.mxu0
        %v1641 = vadd.f32 %v1369, %v1640
        %v1642 = vpop.f32.mrf.mxu0
        %v1643 = vadd.f32 %v1369, %v1642
        %1644 = vmatprep.mubr.bf16.mxu0 0
        %1645 = vmatmul.mubr.bf16.gmra.mxu0 %v1465
        %v1646 = vpop.f32.mrf.mxu0
        %v1647 = vadd.f32 %v1374, %v1646
        %v1648 = vpop.f32.mrf.mxu0
        %v1649 = vadd.f32 %v1374, %v1648
        %v1650 = vpop.f32.mrf.mxu0
        %v1651 = vadd.f32 %v1379, %v1650
        %v1652 = vpop.f32.mrf.mxu0
        %v1653 = vadd.f32 %v1379, %v1652
        %1654 = vmatprep.mubr.bf16.mxu0 0
        %1655 = vmatmul.mubr.bf16.gmra.mxu0 %v1466
        %v1656 = vpop.f32.mrf.mxu0
        %v1657 = vadd.f32 %v1384, %v1656
        %v1658 = vpop.f32.mrf.mxu0
        %v1659 = vadd.f32 %v1384, %v1658
        %v1660 = vpop.f32.mrf.mxu0
        %v1661 = vadd.f32 %v1389, %v1660
        %v1662 = vpop.f32.mrf.mxu0
        %v1663 = vadd.f32 %v1389, %v1662
        %1664 = vmatprep.mubr.bf16.mxu0 0
        %1665 = vmatmul.mubr.bf16.gmra.mxu0 %v1467
        %v1666 = vpop.f32.mrf.mxu0
        %v1667 = vadd.f32 %v1394, %v1666
        %v1668 = vpop.f32.mrf.mxu0
        %v1669 = vadd.f32 %v1394, %v1668
        %v1670 = vpop.f32.mrf.mxu0
        %v1671 = vadd.f32 %v1399, %v1670
        %v1672 = vpop.f32.mrf.mxu0
        %v1673 = vadd.f32 %v1399, %v1672
        %1674 = vmatprep.mubr.bf16.mxu0 0
        %1675 = vmatmul.mubr.bf16.gmra.mxu0 %v1468
        %v1676 = vpop.f32.mrf.mxu0
        %v1677 = vadd.f32 %v1404, %v1676
        %v1678 = vpop.f32.mrf.mxu0
        %v1679 = vadd.f32 %v1404, %v1678
        %v1680 = vpop.f32.mrf.mxu0
        %v1681 = vadd.f32 %v1409, %v1680
        %v1682 = vpop.f32.mrf.mxu0
        %v1683 = vadd.f32 %v1409, %v1682
        %1684 = vmatprep.mubr.bf16.mxu0 0
        %1685 = vmatmul.mubr.bf16.gmra.mxu0 %v1469
        %v1686 = vpop.f32.mrf.mxu0
        %v1687 = vadd.f32 %v1414, %v1686
        %v1688 = vpop.f32.mrf.mxu0
        %v1689 = vadd.f32 %v1414, %v1688
        %v1690 = vpop.f32.mrf.mxu0
        %v1691 = vadd.f32 %v1419, %v1690
        %v1692 = vpop.f32.mrf.mxu0
        %v1693 = vadd.f32 %v1419, %v1692
        %1694 = vmatprep.mubr.bf16.mxu0 0
        %1695 = vmatmul.mubr.bf16.gmra.mxu0 %v1470
        %v1696 = vpop.f32.mrf.mxu0
        %v1697 = vadd.f32 %v1424, %v1696
        %v1698 = vpop.f32.mrf.mxu0
        %v1699 = vadd.f32 %v1424, %v1698
        %v1700 = vpop.f32.mrf.mxu0
        %v1701 = vadd.f32 %v1429, %v1700
        %v1702 = vpop.f32.mrf.mxu0
        %v1703 = vadd.f32 %v1429, %v1702
        %1704 = vdwg.mxu0
        %v1705 = vmax.f32 %v1514, 0.0
        %v1706 = vmax.f32 %v1516, 0.0
        %v1707 = vmax.f32 %v1627, 0.0
        %v1708 = vmax.f32 %v1629, 0.0
        %v1709 = vmax.f32 %v1518, 0.0
        %v1710 = vmax.f32 %v1520, 0.0
        %v1711 = vmax.f32 %v1631, 0.0
        %v1712 = vmax.f32 %v1633, 0.0
        %v1713 = vmax.f32 %v1524, 0.0
        %v1714 = vmax.f32 %v1526, 0.0
        %v1715 = vmax.f32 %v1637, 0.0
        %v1716 = vmax.f32 %v1639, 0.0
        %v1717 = vmax.f32 %v1528, 0.0
        %v1718 = vmax.f32 %v1530, 0.0
        %v1719 = vmax.f32 %v1641, 0.0
        %v1720 = vmax.f32 %v1643, 0.0
        %v1721 = vmax.f32 %v1534, 0.0
        %v1722 = vmax.f32 %v1536, 0.0
        %v1723 = vmax.f32 %v1647, 0.0
        %v1724 = vmax.f32 %v1649, 0.0
        %v1725 = vmax.f32 %v1538, 0.0
        %v1726 = vmax.f32 %v1540, 0.0
        %v1727 = vmax.f32 %v1651, 0.0
        %v1728 = vmax.f32 %v1653, 0.0
        %v1729 = vmax.f32 %v1544, 0.0
        %v1730 = vmax.f32 %v1546, 0.0
        %v1731 = vmax.f32 %v1657, 0.0
        %v1732 = vmax.f32 %v1659, 0.0
        %v1733 = vmax.f32 %v1548, 0.0
        %v1734 = vmax.f32 %v1550, 0.0
        %v1735 = vmax.f32 %v1661, 0.0
        %v1736 = vmax.f32 %v1663, 0.0
        %v1737 = vmax.f32 %v1554, 0.0
        %v1738 = vmax.f32 %v1556, 0.0
        %v1739 = vmax.f32 %v1667, 0.0
        %v1740 = vmax.f32 %v1669, 0.0
        %v1741 = vmax.f32 %v1558, 0.0
        %v1742 = vmax.f32 %v1560, 0.0
        %v1743 = vmax.f32 %v1671, 0.0
        %v1744 = vmax.f32 %v1673, 0.0
        %v1745 = vmax.f32 %v1564, 0.0
        %v1746 = vmax.f32 %v1566, 0.0
        %v1747 = vmax.f32 %v1677, 0.0
        %v1748 = vmax.f32 %v1679, 0.0
        %v1749 = vmax.f32 %v1568, 0.0
        %v1750 = vmax.f32 %v1570, 0.0
        %v1751 = vmax.f32 %v1681, 0.0
        %v1752 = vmax.f32 %v1683, 0.0
        %v1753 = vmax.f32 %v1574, 0.0
        %v1754 = vmax.f32 %v1576, 0.0
        %v1755 = vmax.f32 %v1687, 0.0
        %v1756 = vmax.f32 %v1689, 0.0
        %v1757 = vmax.f32 %v1578, 0.0
        %v1758 = vmax.f32 %v1580, 0.0
        %v1759 = vmax.f32 %v1691, 0.0
        %v1760 = vmax.f32 %v1693, 0.0
        %v1761 = vmax.f32 %v1584, 0.0
        %v1762 = vmax.f32 %v1586, 0.0
        %v1763 = vmax.f32 %v1697, 0.0
        %v1764 = vmax.f32 %v1699, 0.0
        %v1765 = vmax.f32 %v1588, 0.0
        %v1766 = vmax.f32 %v1590, 0.0
        %v1767 = vmax.f32 %v1701, 0.0
        %v1768 = vmax.f32 %v1703, 0.0
        %v1769 = vld [vmem:[#allocation5] sm:$0xf]
        %v1770 = vld [vmem:[#allocation5 + $0x4] sm:$0xf]
        %v1771 = vld [vmem:[#allocation5 + $0x8] sm:$0xf]
        %v1772 = vld [vmem:[#allocation5 + $0xc] sm:$0xf]
        %v1773 = vld [vmem:[#allocation5 + $0x10] sm:$0xf]
        %v1774 = vld [vmem:[#allocation5 + $0x14] sm:$0xf]
        %v1775 = vld [vmem:[#allocation5 + $0x18] sm:$0xf]
        %v1776 = vld [vmem:[#allocation5 + $0x1c] sm:$0xf]
        %v1777 = vld [vmem:[#allocation5 + $0x20] sm:$0xf]
        %v1778 = vld [vmem:[#allocation5 + $0x24] sm:$0xf]
        %v1779 = vld [vmem:[#allocation5 + $0x28] sm:$0xf]
        %v1780 = vld [vmem:[#allocation5 + $0x2c] sm:$0xf]
        %v1781 = vld [vmem:[#allocation5 + $0x30] sm:$0xf]
        %v1782 = vld [vmem:[#allocation5 + $0x34] sm:$0xf]
        %v1783 = vld [vmem:[#allocation5 + $0x38] sm:$0xf]
        %v1784 = vld [vmem:[#allocation5 + $0x3c] sm:$0xf]
        %v1785 = vld [vmem:[#allocation5 + $0x40] sm:$0xf]
        %v1786 = vld [vmem:[#allocation5 + $0x44] sm:$0xf]
        %v1787 = vld [vmem:[#allocation5 + $0x48] sm:$0xf]
        %v1788 = vld [vmem:[#allocation5 + $0x4c] sm:$0xf]
        %v1789 = vld [vmem:[#allocation5 + $0x50] sm:$0xf]
        %v1790 = vld [vmem:[#allocation5 + $0x54] sm:$0xf]
        %v1791 = vld [vmem:[#allocation5 + $0x58] sm:$0xf]
        %v1792 = vld [vmem:[#allocation5 + $0x5c] sm:$0xf]
        %v1793 = vld [vmem:[#allocation5 + $0x60] sm:$0xf]
        %v1794 = vld [vmem:[#allocation5 + $0x64] sm:$0xf]
        %v1795 = vld [vmem:[#allocation5 + $0x68] sm:$0xf]
        %v1796 = vld [vmem:[#allocation5 + $0x6c] sm:$0xf]
        %v1797 = vld [vmem:[#allocation5 + $0x70] sm:$0xf]
        %v1798 = vld [vmem:[#allocation5 + $0x74] sm:$0xf]
        %v1799 = vld [vmem:[#allocation5 + $0x78] sm:$0xf]
        %v1800 = vld [vmem:[#allocation5 + $0x7c] sm:$0xf]
        %v1801 = vpack.c.bf16 %v1709, %v1705
        %v1802 = vpack.c.bf16 %v1710, %v1706
        %v1803 = vpack.c.bf16 %v1711, %v1707
        %v1804 = vpack.c.bf16 %v1712, %v1708
        %v1805 = vpack.c.bf16 %v1717, %v1713
        %v1806 = vpack.c.bf16 %v1718, %v1714
        %v1807 = vpack.c.bf16 %v1719, %v1715
        %v1808 = vpack.c.bf16 %v1720, %v1716
        %v1809 = vpack.c.bf16 %v1725, %v1721
        %v1810 = vpack.c.bf16 %v1726, %v1722
        %v1811 = vpack.c.bf16 %v1727, %v1723
        %v1812 = vpack.c.bf16 %v1728, %v1724
        %v1813 = vpack.c.bf16 %v1733, %v1729
        %v1814 = vpack.c.bf16 %v1734, %v1730
        %v1815 = vpack.c.bf16 %v1735, %v1731
        %v1816 = vpack.c.bf16 %v1736, %v1732
        %v1817 = vpack.c.bf16 %v1741, %v1737
        %v1818 = vpack.c.bf16 %v1742, %v1738
        %v1819 = vpack.c.bf16 %v1743, %v1739
        %v1820 = vpack.c.bf16 %v1744, %v1740
        %v1821 = vpack.c.bf16 %v1749, %v1745
        %v1822 = vpack.c.bf16 %v1750, %v1746
        %v1823 = vpack.c.bf16 %v1751, %v1747
        %v1824 = vpack.c.bf16 %v1752, %v1748
        %v1825 = vpack.c.bf16 %v1757, %v1753
        %v1826 = vpack.c.bf16 %v1758, %v1754
        %v1827 = vpack.c.bf16 %v1759, %v1755
        %v1828 = vpack.c.bf16 %v1760, %v1756
        %v1829 = vpack.c.bf16 %v1765, %v1761
        %v1830 = vpack.c.bf16 %v1766, %v1762
        %v1831 = vpack.c.bf16 %v1767, %v1763
        %v1832 = vpack.c.bf16 %v1768, %v1764
        %v1833 = vld [vmem:[%s6] sm:$0xff]
        %v1834 = vld [vmem:[%s6 + $0x8] sm:$0xff]
        %v1835 = vld [vmem:[%s6 + $0x10] sm:$0xff]
        %v1836 = vld [vmem:[%s6 + $0x18] sm:$0xff]
        %v1837 = vld [vmem:[%s6 + $0x20] sm:$0xff]
        %v1838 = vld [vmem:[%s6 + $0x28] sm:$0xff]
        %v1839 = vld [vmem:[%s6 + $0x30] sm:$0xff]
        %v1840 = vld [vmem:[%s6 + $0x38] sm:$0xff]
        %v1841 = vld [vmem:[%s6 + $0x40] sm:$0xff]
        %v1842 = vld [vmem:[%s6 + $0x48] sm:$0xff]
        %v1843 = vld [vmem:[%s6 + $0x50] sm:$0xff]
        %v1844 = vld [vmem:[%s6 + $0x58] sm:$0xff]
        %v1845 = vld [vmem:[%s6 + $0x60] sm:$0xff]
        %v1846 = vld [vmem:[%s6 + $0x68] sm:$0xff]
        %v1847 = vld [vmem:[%s6 + $0x70] sm:$0xff]
        %v1848 = vld [vmem:[%s6 + $0x78] sm:$0xff]
        %v1849 = vld [vmem:[%s6 + $0x80] sm:$0xff]
        %v1850 = vld [vmem:[%s6 + $0x88] sm:$0xff]
        %v1851 = vld [vmem:[%s6 + $0x90] sm:$0xff]
        %v1852 = vld [vmem:[%s6 + $0x98] sm:$0xff]
        %v1853 = vld [vmem:[%s6 + $0xa0] sm:$0xff]
        %v1854 = vld [vmem:[%s6 + $0xa8] sm:$0xff]
        %v1855 = vld [vmem:[%s6 + $0xb0] sm:$0xff]
        %v1856 = vld [vmem:[%s6 + $0xb8] sm:$0xff]
        %v1857 = vld [vmem:[%s6 + $0xc0] sm:$0xff]
        %v1858 = vld [vmem:[%s6 + $0xc8] sm:$0xff]
        %v1859 = vld [vmem:[%s6 + $0xd0] sm:$0xff]
        %v1860 = vld [vmem:[%s6 + $0xd8] sm:$0xff]
        %v1861 = vld [vmem:[%s6 + $0xe0] sm:$0xff]
        %v1862 = vld [vmem:[%s6 + $0xe8] sm:$0xff]
        %v1863 = vld [vmem:[%s6 + $0xf0] sm:$0xff]
        %v1864 = vld [vmem:[%s6 + $0xf8] sm:$0xff]
        %1866 = vset.pattern.permute.xlu0 0
        %1867 = vperm.xlu0 %1866, %v1833
        %v1868 = vpop.permute.xlu0 %1867
        %1871 = vset.pattern.permute.xlu0 0
        %1872 = vperm.xlu0 %1871, %v1834
        %v1873 = vpop.permute.xlu0 %1872
        %1876 = vset.pattern.permute.xlu0 0
        %1877 = vperm.xlu0 %1876, %v1835
        %v1878 = vpop.permute.xlu0 %1877
        %1881 = vset.pattern.permute.xlu0 0
        %1882 = vperm.xlu0 %1881, %v1836
        %v1883 = vpop.permute.xlu0 %1882
        %1886 = vset.pattern.permute.xlu0 0
        %1887 = vperm.xlu0 %1886, %v1837
        %v1888 = vpop.permute.xlu0 %1887
        %1891 = vset.pattern.permute.xlu0 0
        %1892 = vperm.xlu0 %1891, %v1838
        %v1893 = vpop.permute.xlu0 %1892
        %1896 = vset.pattern.permute.xlu0 0
        %1897 = vperm.xlu0 %1896, %v1839
        %v1898 = vpop.permute.xlu0 %1897
        %1901 = vset.pattern.permute.xlu0 0
        %1902 = vperm.xlu0 %1901, %v1840
        %v1903 = vpop.permute.xlu0 %1902
        %1906 = vset.pattern.permute.xlu0 0
        %1907 = vperm.xlu0 %1906, %v1841
        %v1908 = vpop.permute.xlu0 %1907
        %1911 = vset.pattern.permute.xlu0 0
        %1912 = vperm.xlu0 %1911, %v1842
        %v1913 = vpop.permute.xlu0 %1912
        %1916 = vset.pattern.permute.xlu0 0
        %1917 = vperm.xlu0 %1916, %v1843
        %v1918 = vpop.permute.xlu0 %1917
        %1921 = vset.pattern.permute.xlu0 0
        %1922 = vperm.xlu0 %1921, %v1844
        %v1923 = vpop.permute.xlu0 %1922
        %1926 = vset.pattern.permute.xlu0 0
        %1927 = vperm.xlu0 %1926, %v1845
        %v1928 = vpop.permute.xlu0 %1927
        %1931 = vset.pattern.permute.xlu0 0
        %1932 = vperm.xlu0 %1931, %v1846
        %v1933 = vpop.permute.xlu0 %1932
        %1936 = vset.pattern.permute.xlu0 0
        %1937 = vperm.xlu0 %1936, %v1847
        %v1938 = vpop.permute.xlu0 %1937
        %1941 = vset.pattern.permute.xlu0 0
        %1942 = vperm.xlu0 %1941, %v1848
        %v1943 = vpop.permute.xlu0 %1942
        %1946 = vset.pattern.permute.xlu0 0
        %1947 = vperm.xlu0 %1946, %v1849
        %v1948 = vpop.permute.xlu0 %1947
        %1951 = vset.pattern.permute.xlu0 0
        %1952 = vperm.xlu0 %1951, %v1850
        %v1953 = vpop.permute.xlu0 %1952
        %1956 = vset.pattern.permute.xlu0 0
        %1957 = vperm.xlu0 %1956, %v1851
        %v1958 = vpop.permute.xlu0 %1957
        %1961 = vset.pattern.permute.xlu0 0
        %1962 = vperm.xlu0 %1961, %v1852
        %v1963 = vpop.permute.xlu0 %1962
        %1966 = vset.pattern.permute.xlu0 0
        %1967 = vperm.xlu0 %1966, %v1853
        %v1968 = vpop.permute.xlu0 %1967
        %1971 = vset.pattern.permute.xlu0 0
        %1972 = vperm.xlu0 %1971, %v1854
        %v1973 = vpop.permute.xlu0 %1972
        %1976 = vset.pattern.permute.xlu0 0
        %1977 = vperm.xlu0 %1976, %v1855
        %v1978 = vpop.permute.xlu0 %1977
        %1981 = vset.pattern.permute.xlu0 0
        %1982 = vperm.xlu0 %1981, %v1856
        %v1983 = vpop.permute.xlu0 %1982
        %1986 = vset.pattern.permute.xlu0 0
        %1987 = vperm.xlu0 %1986, %v1857
        %v1988 = vpop.permute.xlu0 %1987
        %1991 = vset.pattern.permute.xlu0 0
        %1992 = vperm.xlu0 %1991, %v1858
        %v1993 = vpop.permute.xlu0 %1992
        %1996 = vset.pattern.permute.xlu0 0
        %1997 = vperm.xlu0 %1996, %v1859
        %v1998 = vpop.permute.xlu0 %1997
        %2001 = vset.pattern.permute.xlu0 0
        %2002 = vperm.xlu0 %2001, %v1860
        %v2003 = vpop.permute.xlu0 %2002
        %2006 = vset.pattern.permute.xlu0 0
        %2007 = vperm.xlu0 %2006, %v1861
        %v2008 = vpop.permute.xlu0 %2007
        %2011 = vset.pattern.permute.xlu0 0
        %2012 = vperm.xlu0 %2011, %v1862
        %v2013 = vpop.permute.xlu0 %2012
        %2016 = vset.pattern.permute.xlu0 0
        %2017 = vperm.xlu0 %2016, %v1863
        %v2018 = vpop.permute.xlu0 %2017
        %2021 = vset.pattern.permute.xlu0 0
        %2022 = vperm.xlu0 %2021, %v1864
        %v2023 = vpop.permute.xlu0 %2022
        %v2057 = vunpack.c.l.b16 %v1769
        %v2058 = vunpack.c.l.b16 %v1770
        %v2059 = vunpack.c.l.b16 %v1771
        %v2060 = vunpack.c.l.b16 %v1772
        %v2061 = vunpack.c.l.b16 %v1773
        %v2062 = vunpack.c.l.b16 %v1774
        %v2063 = vunpack.c.l.b16 %v1775
        %v2064 = vunpack.c.l.b16 %v1776
        %v2065 = vunpack.c.l.b16 %v1777
        %v2066 = vunpack.c.l.b16 %v1778
        %v2067 = vunpack.c.l.b16 %v1779
        %v2068 = vunpack.c.l.b16 %v1780
        %v2069 = vunpack.c.l.b16 %v1781
        %v2070 = vunpack.c.l.b16 %v1782
        %v2071 = vunpack.c.l.b16 %v1783
        %v2072 = vunpack.c.l.b16 %v1784
        %v2073 = vunpack.c.l.b16 %v1785
        %v2074 = vunpack.c.l.b16 %v1786
        %v2075 = vunpack.c.l.b16 %v1787
        %v2076 = vunpack.c.l.b16 %v1788
        %v2077 = vunpack.c.l.b16 %v1789
        %v2078 = vunpack.c.l.b16 %v1790
        %v2079 = vunpack.c.l.b16 %v1791
        %v2080 = vunpack.c.l.b16 %v1792
        %v2081 = vunpack.c.l.b16 %v1793
        %v2082 = vunpack.c.l.b16 %v1794
        %v2083 = vunpack.c.l.b16 %v1795
        %v2084 = vunpack.c.l.b16 %v1796
        %v2085 = vunpack.c.l.b16 %v1797
        %v2086 = vunpack.c.l.b16 %v1798
        %v2087 = vunpack.c.l.b16 %v1799
        %v2088 = vunpack.c.l.b16 %v1800
        %v2089 = vpack.c.b16 %v2058, %v2057
        %v2090 = vpack.c.b16 %v2060, %v2059
        %v2091 = vpack.c.b16 %v2062, %v2061
        %v2092 = vpack.c.b16 %v2064, %v2063
        %v2093 = vpack.c.b16 %v2066, %v2065
        %v2094 = vpack.c.b16 %v2068, %v2067
        %v2095 = vpack.c.b16 %v2070, %v2069
        %v2096 = vpack.c.b16 %v2072, %v2071
        %v2097 = vpack.c.b16 %v2074, %v2073
        %v2098 = vpack.c.b16 %v2076, %v2075
        %v2099 = vpack.c.b16 %v2078, %v2077
        %v2100 = vpack.c.b16 %v2080, %v2079
        %v2101 = vpack.c.b16 %v2082, %v2081
        %v2102 = vpack.c.b16 %v2084, %v2083
        %v2103 = vpack.c.b16 %v2086, %v2085
        %v2104 = vpack.c.b16 %v2088, %v2087
        %2121 = vmatprep.subr.bf16.mxu0 %v1830
        %2122 = vmatpush1.bf16.msra.mxu0 %v1829
        %2123 = vmatprep.subr.bf16.mxu0 %v1826
        %2124 = vmatpush1.bf16.msra.mxu0 %v1825
        %2125 = vmatprep.subr.bf16.mxu0 %v1822
        %2126 = vmatpush1.bf16.msra.mxu0 %v1821
        %2127 = vmatprep.subr.bf16.mxu0 %v1818
        %2128 = vmatpush1.bf16.msra.mxu0 %v1817
        %2129 = vmatprep.subr.bf16.mxu0 %v1814
        %2130 = vmatpush1.bf16.msra.mxu0 %v1813
        %2131 = vmatprep.subr.bf16.mxu0 %v1810
        %2132 = vmatpush1.bf16.msra.mxu0 %v1809
        %2133 = vmatprep.subr.bf16.mxu0 %v1806
        %2134 = vmatpush1.bf16.msra.mxu0 %v1805
        %2135 = vmatprep.subr.bf16.mxu0 %v1802
        %2136 = vmatpush1.bf16.msra.mxu0 %v1801
        %2137 = vmatprep.subr.bf16.mxu0 0
        %2138 = vmatpush2.bf16.msra.mxu0 0
        %2139 = vmatprep.subr.bf16.mxu0 0
        %2140 = vmatpush2.bf16.msra.mxu0 0
        %2141 = vmatprep.subr.bf16.mxu0 0
        %2142 = vmatpush2.bf16.msra.mxu0 0
        %2143 = vmatprep.subr.bf16.mxu0 0
        %2144 = vmatpush2.bf16.msra.mxu0 0
        %2145 = vmatprep.subr.bf16.mxu0 0
        %2146 = vmatpush2.bf16.msra.mxu0 0
        %2147 = vmatprep.subr.bf16.mxu0 0
        %2148 = vmatpush2.bf16.msra.mxu0 0
        %2149 = vmatprep.subr.bf16.mxu0 0
        %2150 = vmatpush2.bf16.msra.mxu0 0
        %2151 = vmatprep.subr.bf16.mxu0 0
        %2152 = vmatpush2.bf16.msra.mxu0 0
        %2153 = vmatprep.mubr.bf16.mxu0 0
        %2154 = vmatmul.mubr.bf16.gmra.mxu0 %v2089
        %v2155 = vpop.f32.mrf.mxu0
        %v2156 = vadd.f32 %v1868, %v2155
        %v2157 = vpop.f32.mrf.mxu0
        %v2158 = vadd.f32 %v1868, %v2157
        %v2159 = vpop.f32.mrf.mxu0
        %v2160 = vadd.f32 %v1873, %v2159
        %v2161 = vpop.f32.mrf.mxu0
        %v2162 = vadd.f32 %v1873, %v2161
        %2163 = vmatprep.mubr.bf16.mxu0 0
        %2164 = vmatmul.mubr.bf16.gmra.mxu0 %v2090
        %v2165 = vpop.f32.mrf.mxu0
        %v2166 = vadd.f32 %v1878, %v2165
        %v2167 = vpop.f32.mrf.mxu0
        %v2168 = vadd.f32 %v1878, %v2167
        %v2169 = vpop.f32.mrf.mxu0
        %v2170 = vadd.f32 %v1883, %v2169
        %v2171 = vpop.f32.mrf.mxu0
        %v2172 = vadd.f32 %v1883, %v2171
        %2173 = vmatprep.mubr.bf16.mxu0 0
        %2174 = vmatmul.mubr.bf16.gmra.mxu0 %v2091
        %v2175 = vpop.f32.mrf.mxu0
        %v2176 = vadd.f32 %v1888, %v2175
        %v2177 = vpop.f32.mrf.mxu0
        %v2178 = vadd.f32 %v1888, %v2177
        %v2179 = vpop.f32.mrf.mxu0
        %v2180 = vadd.f32 %v1893, %v2179
        %v2181 = vpop.f32.mrf.mxu0
        %v2182 = vadd.f32 %v1893, %v2181
        %2183 = vmatprep.mubr.bf16.mxu0 0
        %2184 = vmatmul.mubr.bf16.gmra.mxu0 %v2092
        %v2185 = vpop.f32.mrf.mxu0
        %v2186 = vadd.f32 %v1898, %v2185
        %v2187 = vpop.f32.mrf.mxu0
        %v2188 = vadd.f32 %v1898, %v2187
        %v2189 = vpop.f32.mrf.mxu0
        %v2190 = vadd.f32 %v1903, %v2189
        %v2191 = vpop.f32.mrf.mxu0
        %v2192 = vadd.f32 %v1903, %v2191
        %2193 = vmatprep.mubr.bf16.mxu0 0
        %2194 = vmatmul.mubr.bf16.gmra.mxu0 %v2093
        %v2195 = vpop.f32.mrf.mxu0
        %v2196 = vadd.f32 %v1908, %v2195
        %v2197 = vpop.f32.mrf.mxu0
        %v2198 = vadd.f32 %v1908, %v2197
        %v2199 = vpop.f32.mrf.mxu0
        %v2200 = vadd.f32 %v1913, %v2199
        %v2201 = vpop.f32.mrf.mxu0
        %v2202 = vadd.f32 %v1913, %v2201
        %2203 = vmatprep.mubr.bf16.mxu0 0
        %2204 = vmatmul.mubr.bf16.gmra.mxu0 %v2094
        %v2205 = vpop.f32.mrf.mxu0
        %v2206 = vadd.f32 %v1918, %v2205
        %v2207 = vpop.f32.mrf.mxu0
        %v2208 = vadd.f32 %v1918, %v2207
        %v2209 = vpop.f32.mrf.mxu0
        %v2210 = vadd.f32 %v1923, %v2209
        %v2211 = vpop.f32.mrf.mxu0
        %v2212 = vadd.f32 %v1923, %v2211
        %2213 = vmatprep.mubr.bf16.mxu0 0
        %2214 = vmatmul.mubr.bf16.gmra.mxu0 %v2095
        %v2215 = vpop.f32.mrf.mxu0
        %v2216 = vadd.f32 %v1928, %v2215
        %v2217 = vpop.f32.mrf.mxu0
        %v2218 = vadd.f32 %v1928, %v2217
        %v2219 = vpop.f32.mrf.mxu0
        %v2220 = vadd.f32 %v1933, %v2219
        %v2221 = vpop.f32.mrf.mxu0
        %v2222 = vadd.f32 %v1933, %v2221
        %2223 = vmatprep.mubr.bf16.mxu0 0
        %2224 = vmatmul.mubr.bf16.gmra.mxu0 %v2096
        %v2225 = vpop.f32.mrf.mxu0
        %v2226 = vadd.f32 %v1938, %v2225
        %v2227 = vpop.f32.mrf.mxu0
        %v2228 = vadd.f32 %v1938, %v2227
        %v2229 = vpop.f32.mrf.mxu0
        %v2230 = vadd.f32 %v1943, %v2229
        %v2231 = vpop.f32.mrf.mxu0
        %v2232 = vadd.f32 %v1943, %v2231
        %2233 = vmatprep.mubr.bf16.mxu0 0
        %2234 = vmatmul.mubr.bf16.gmra.mxu0 %v2097
        %v2235 = vpop.f32.mrf.mxu0
        %v2236 = vadd.f32 %v1948, %v2235
        %v2237 = vpop.f32.mrf.mxu0
        %v2238 = vadd.f32 %v1948, %v2237
        %v2239 = vpop.f32.mrf.mxu0
        %v2240 = vadd.f32 %v1953, %v2239
        %v2241 = vpop.f32.mrf.mxu0
        %v2242 = vadd.f32 %v1953, %v2241
        %2243 = vmatprep.mubr.bf16.mxu0 0
        %2244 = vmatmul.mubr.bf16.gmra.mxu0 %v2098
        %v2245 = vpop.f32.mrf.mxu0
        %v2246 = vadd.f32 %v1958, %v2245
        %v2247 = vpop.f32.mrf.mxu0
        %v2248 = vadd.f32 %v1958, %v2247
        %v2249 = vpop.f32.mrf.mxu0
        %v2250 = vadd.f32 %v1963, %v2249
        %v2251 = vpop.f32.mrf.mxu0
        %v2252 = vadd.f32 %v1963, %v2251
        %2253 = vmatprep.mubr.bf16.mxu0 0
        %2254 = vmatmul.mubr.bf16.gmra.mxu0 %v2099
        %v2255 = vpop.f32.mrf.mxu0
        %v2256 = vadd.f32 %v1968, %v2255
        %v2257 = vpop.f32.mrf.mxu0
        %v2258 = vadd.f32 %v1968, %v2257
        %v2259 = vpop.f32.mrf.mxu0
        %v2260 = vadd.f32 %v1973, %v2259
        %v2261 = vpop.f32.mrf.mxu0
        %v2262 = vadd.f32 %v1973, %v2261
        %2263 = vmatprep.mubr.bf16.mxu0 0
        %2264 = vmatmul.mubr.bf16.gmra.mxu0 %v2100
        %v2265 = vpop.f32.mrf.mxu0
        %v2266 = vadd.f32 %v1978, %v2265
        %v2267 = vpop.f32.mrf.mxu0
        %v2268 = vadd.f32 %v1978, %v2267
        %v2269 = vpop.f32.mrf.mxu0
        %v2270 = vadd.f32 %v1983, %v2269
        %v2271 = vpop.f32.mrf.mxu0
        %v2272 = vadd.f32 %v1983, %v2271
        %2273 = vmatprep.mubr.bf16.mxu0 0
        %2274 = vmatmul.mubr.bf16.gmra.mxu0 %v2101
        %v2275 = vpop.f32.mrf.mxu0
        %v2276 = vadd.f32 %v1988, %v2275
        %v2277 = vpop.f32.mrf.mxu0
        %v2278 = vadd.f32 %v1988, %v2277
        %v2279 = vpop.f32.mrf.mxu0
        %v2280 = vadd.f32 %v1993, %v2279
        %v2281 = vpop.f32.mrf.mxu0
        %v2282 = vadd.f32 %v1993, %v2281
        %2283 = vmatprep.mubr.bf16.mxu0 0
        %2284 = vmatmul.mubr.bf16.gmra.mxu0 %v2102
        %v2285 = vpop.f32.mrf.mxu0
        %v2286 = vadd.f32 %v1998, %v2285
        %v2287 = vpop.f32.mrf.mxu0
        %v2288 = vadd.f32 %v1998, %v2287
        %v2289 = vpop.f32.mrf.mxu0
        %v2290 = vadd.f32 %v2003, %v2289
        %v2291 = vpop.f32.mrf.mxu0
        %v2292 = vadd.f32 %v2003, %v2291
        %2293 = vmatprep.mubr.bf16.mxu0 0
        %2294 = vmatmul.mubr.bf16.gmra.mxu0 %v2103
        %v2295 = vpop.f32.mrf.mxu0
        %v2296 = vadd.f32 %v2008, %v2295
        %v2297 = vpop.f32.mrf.mxu0
        %v2298 = vadd.f32 %v2008, %v2297
        %v2299 = vpop.f32.mrf.mxu0
        %v2300 = vadd.f32 %v2013, %v2299
        %v2301 = vpop.f32.mrf.mxu0
        %v2302 = vadd.f32 %v2013, %v2301
        %2303 = vmatprep.mubr.bf16.mxu0 0
        %2304 = vmatmul.mubr.bf16.gmra.mxu0 %v2104
        %v2305 = vpop.f32.mrf.mxu0
        %v2306 = vadd.f32 %v2018, %v2305
        %v2307 = vpop.f32.mrf.mxu0
        %v2308 = vadd.f32 %v2018, %v2307
        %v2309 = vpop.f32.mrf.mxu0
        %v2310 = vadd.f32 %v2023, %v2309
        %v2311 = vpop.f32.mrf.mxu0
        %v2312 = vadd.f32 %v2023, %v2311
        %2313 = vdwg.mxu0
        %2314 = vmatprep.subr.bf16.mxu0 %v1832
        %2315 = vmatpush1.bf16.msra.mxu0 %v1831
        %2316 = vmatprep.subr.bf16.mxu0 %v1828
        %2317 = vmatpush1.bf16.msra.mxu0 %v1827
        %2318 = vmatprep.subr.bf16.mxu0 %v1824
        %2319 = vmatpush1.bf16.msra.mxu0 %v1823
        %2320 = vmatprep.subr.bf16.mxu0 %v1820
        %2321 = vmatpush1.bf16.msra.mxu0 %v1819
        %2322 = vmatprep.subr.bf16.mxu0 %v1816
        %2323 = vmatpush1.bf16.msra.mxu0 %v1815
        %2324 = vmatprep.subr.bf16.mxu0 %v1812
        %2325 = vmatpush1.bf16.msra.mxu0 %v1811
        %2326 = vmatprep.subr.bf16.mxu0 %v1808
        %2327 = vmatpush1.bf16.msra.mxu0 %v1807
        %2328 = vmatprep.subr.bf16.mxu0 %v1804
        %2329 = vmatpush1.bf16.msra.mxu0 %v1803
        %2330 = vmatprep.subr.bf16.mxu0 0
        %2331 = vmatpush2.bf16.msra.mxu0 0
        %2332 = vmatprep.subr.bf16.mxu0 0
        %2333 = vmatpush2.bf16.msra.mxu0 0
        %2334 = vmatprep.subr.bf16.mxu0 0
        %2335 = vmatpush2.bf16.msra.mxu0 0
        %2336 = vmatprep.subr.bf16.mxu0 0
        %2337 = vmatpush2.bf16.msra.mxu0 0
        %2338 = vmatprep.subr.bf16.mxu0 0
        %2339 = vmatpush2.bf16.msra.mxu0 0
        %2340 = vmatprep.subr.bf16.mxu0 0
        %2341 = vmatpush2.bf16.msra.mxu0 0
        %2342 = vmatprep.subr.bf16.mxu0 0
        %2343 = vmatpush2.bf16.msra.mxu0 0
        %2344 = vmatprep.subr.bf16.mxu0 0
        %2345 = vmatpush2.bf16.msra.mxu0 0
        %2346 = vmatprep.mubr.bf16.mxu0 0
        %2347 = vmatmul.mubr.bf16.gmra.mxu0 %v2089
        %v2348 = vpop.f32.mrf.mxu0
        %v2349 = vadd.f32 %v1868, %v2348
        %v2350 = vpop.f32.mrf.mxu0
        %v2351 = vadd.f32 %v1868, %v2350
        %v2352 = vpop.f32.mrf.mxu0
        %v2353 = vadd.f32 %v1873, %v2352
        %v2354 = vpop.f32.mrf.mxu0
        %v2355 = vadd.f32 %v1873, %v2354
        %2356 = vmatprep.mubr.bf16.mxu0 0
        %2357 = vmatmul.mubr.bf16.gmra.mxu0 %v2090
        %v2358 = vpop.f32.mrf.mxu0
        %v2359 = vadd.f32 %v1878, %v2358
        %v2360 = vpop.f32.mrf.mxu0
        %v2361 = vadd.f32 %v1878, %v2360
        %v2362 = vpop.f32.mrf.mxu0
        %v2363 = vadd.f32 %v1883, %v2362
        %v2364 = vpop.f32.mrf.mxu0
        %v2365 = vadd.f32 %v1883, %v2364
        %2366 = vmatprep.mubr.bf16.mxu0 0
        %2367 = vmatmul.mubr.bf16.gmra.mxu0 %v2091
        %v2368 = vpop.f32.mrf.mxu0
        %v2369 = vadd.f32 %v1888, %v2368
        %v2370 = vpop.f32.mrf.mxu0
        %v2371 = vadd.f32 %v1888, %v2370
        %v2372 = vpop.f32.mrf.mxu0
        %v2373 = vadd.f32 %v1893, %v2372
        %v2374 = vpop.f32.mrf.mxu0
        %v2375 = vadd.f32 %v1893, %v2374
        %2376 = vmatprep.mubr.bf16.mxu0 0
        %2377 = vmatmul.mubr.bf16.gmra.mxu0 %v2092
        %v2378 = vpop.f32.mrf.mxu0
        %v2379 = vadd.f32 %v1898, %v2378
        %v2380 = vpop.f32.mrf.mxu0
        %v2381 = vadd.f32 %v1898, %v2380
        %v2382 = vpop.f32.mrf.mxu0
        %v2383 = vadd.f32 %v1903, %v2382
        %v2384 = vpop.f32.mrf.mxu0
        %v2385 = vadd.f32 %v1903, %v2384
        %2386 = vmatprep.mubr.bf16.mxu0 0
        %2387 = vmatmul.mubr.bf16.gmra.mxu0 %v2093
        %v2388 = vpop.f32.mrf.mxu0
        %v2389 = vadd.f32 %v1908, %v2388
        %v2390 = vpop.f32.mrf.mxu0
        %v2391 = vadd.f32 %v1908, %v2390
        %v2392 = vpop.f32.mrf.mxu0
        %v2393 = vadd.f32 %v1913, %v2392
        %v2394 = vpop.f32.mrf.mxu0
        %v2395 = vadd.f32 %v1913, %v2394
        %2396 = vmatprep.mubr.bf16.mxu0 0
        %2397 = vmatmul.mubr.bf16.gmra.mxu0 %v2094
        %v2398 = vpop.f32.mrf.mxu0
        %v2399 = vadd.f32 %v1918, %v2398
        %v2400 = vpop.f32.mrf.mxu0
        %v2401 = vadd.f32 %v1918, %v2400
        %v2402 = vpop.f32.mrf.mxu0
        %v2403 = vadd.f32 %v1923, %v2402
        %v2404 = vpop.f32.mrf.mxu0
        %v2405 = vadd.f32 %v1923, %v2404
        %2406 = vmatprep.mubr.bf16.mxu0 0
        %2407 = vmatmul.mubr.bf16.gmra.mxu0 %v2095
        %v2408 = vpop.f32.mrf.mxu0
        %v2409 = vadd.f32 %v1928, %v2408
        %v2410 = vpop.f32.mrf.mxu0
        %v2411 = vadd.f32 %v1928, %v2410
        %v2412 = vpop.f32.mrf.mxu0
        %v2413 = vadd.f32 %v1933, %v2412
        %v2414 = vpop.f32.mrf.mxu0
        %v2415 = vadd.f32 %v1933, %v2414
        %2416 = vmatprep.mubr.bf16.mxu0 0
        %2417 = vmatmul.mubr.bf16.gmra.mxu0 %v2096
        %v2418 = vpop.f32.mrf.mxu0
        %v2419 = vadd.f32 %v1938, %v2418
        %v2420 = vpop.f32.mrf.mxu0
        %v2421 = vadd.f32 %v1938, %v2420
        %v2422 = vpop.f32.mrf.mxu0
        %v2423 = vadd.f32 %v1943, %v2422
        %v2424 = vpop.f32.mrf.mxu0
        %v2425 = vadd.f32 %v1943, %v2424
        %2426 = vmatprep.mubr.bf16.mxu0 0
        %2427 = vmatmul.mubr.bf16.gmra.mxu0 %v2097
        %v2428 = vpop.f32.mrf.mxu0
        %v2429 = vadd.f32 %v1948, %v2428
        %v2430 = vpop.f32.mrf.mxu0
        %v2431 = vadd.f32 %v1948, %v2430
        %v2432 = vpop.f32.mrf.mxu0
        %v2433 = vadd.f32 %v1953, %v2432
        %v2434 = vpop.f32.mrf.mxu0
        %v2435 = vadd.f32 %v1953, %v2434
        %2436 = vmatprep.mubr.bf16.mxu0 0
        %2437 = vmatmul.mubr.bf16.gmra.mxu0 %v2098
        %v2438 = vpop.f32.mrf.mxu0
        %v2439 = vadd.f32 %v1958, %v2438
        %v2440 = vpop.f32.mrf.mxu0
        %v2441 = vadd.f32 %v1958, %v2440
        %v2442 = vpop.f32.mrf.mxu0
        %v2443 = vadd.f32 %v1963, %v2442
        %v2444 = vpop.f32.mrf.mxu0
        %v2445 = vadd.f32 %v1963, %v2444
        %2446 = vmatprep.mubr.bf16.mxu0 0
        %2447 = vmatmul.mubr.bf16.gmra.mxu0 %v2099
        %v2448 = vpop.f32.mrf.mxu0
        %v2449 = vadd.f32 %v1968, %v2448
        %v2450 = vpop.f32.mrf.mxu0
        %v2451 = vadd.f32 %v1968, %v2450
        %v2452 = vpop.f32.mrf.mxu0
        %v2453 = vadd.f32 %v1973, %v2452
        %v2454 = vpop.f32.mrf.mxu0
        %v2455 = vadd.f32 %v1973, %v2454
        %2456 = vmatprep.mubr.bf16.mxu0 0
        %2457 = vmatmul.mubr.bf16.gmra.mxu0 %v2100
        %v2458 = vpop.f32.mrf.mxu0
        %v2459 = vadd.f32 %v1978, %v2458
        %v2460 = vpop.f32.mrf.mxu0
        %v2461 = vadd.f32 %v1978, %v2460
        %v2462 = vpop.f32.mrf.mxu0
        %v2463 = vadd.f32 %v1983, %v2462
        %v2464 = vpop.f32.mrf.mxu0
        %v2465 = vadd.f32 %v1983, %v2464
        %2466 = vmatprep.mubr.bf16.mxu0 0
        %2467 = vmatmul.mubr.bf16.gmra.mxu0 %v2101
        %v2468 = vpop.f32.mrf.mxu0
        %v2469 = vadd.f32 %v1988, %v2468
        %v2470 = vpop.f32.mrf.mxu0
        %v2471 = vadd.f32 %v1988, %v2470
        %v2472 = vpop.f32.mrf.mxu0
        %v2473 = vadd.f32 %v1993, %v2472
        %v2474 = vpop.f32.mrf.mxu0
        %v2475 = vadd.f32 %v1993, %v2474
        %2476 = vmatprep.mubr.bf16.mxu0 0
        %2477 = vmatmul.mubr.bf16.gmra.mxu0 %v2102
        %v2478 = vpop.f32.mrf.mxu0
        %v2479 = vadd.f32 %v1998, %v2478
        %v2480 = vpop.f32.mrf.mxu0
        %v2481 = vadd.f32 %v1998, %v2480
        %v2482 = vpop.f32.mrf.mxu0
        %v2483 = vadd.f32 %v2003, %v2482
        %v2484 = vpop.f32.mrf.mxu0
        %v2485 = vadd.f32 %v2003, %v2484
        %2486 = vmatprep.mubr.bf16.mxu0 0
        %2487 = vmatmul.mubr.bf16.gmra.mxu0 %v2103
        %v2488 = vpop.f32.mrf.mxu0
        %v2489 = vadd.f32 %v2008, %v2488
        %v2490 = vpop.f32.mrf.mxu0
        %v2491 = vadd.f32 %v2008, %v2490
        %v2492 = vpop.f32.mrf.mxu0
        %v2493 = vadd.f32 %v2013, %v2492
        %v2494 = vpop.f32.mrf.mxu0
        %v2495 = vadd.f32 %v2013, %v2494
        %2496 = vmatprep.mubr.bf16.mxu0 0
        %2497 = vmatmul.mubr.bf16.gmra.mxu0 %v2104
        %v2498 = vpop.f32.mrf.mxu0
        %v2499 = vadd.f32 %v2018, %v2498
        %v2500 = vpop.f32.mrf.mxu0
        %v2501 = vadd.f32 %v2018, %v2500
        %v2502 = vpop.f32.mrf.mxu0
        %v2503 = vadd.f32 %v2023, %v2502
        %v2504 = vpop.f32.mrf.mxu0
        %v2505 = vadd.f32 %v2023, %v2504
        %2506 = vdwg.mxu0
        %v2507 = vmax.f32 %v2156, 0.0
        %v2508 = vmax.f32 %v2158, 0.0
        %v2509 = vmax.f32 %v2349, 0.0
        %v2510 = vmax.f32 %v2351, 0.0
        %v2511 = vmax.f32 %v2160, 0.0
        %v2512 = vmax.f32 %v2162, 0.0
        %v2513 = vmax.f32 %v2353, 0.0
        %v2514 = vmax.f32 %v2355, 0.0
        %v2515 = vmax.f32 %v2166, 0.0
        %v2516 = vmax.f32 %v2168, 0.0
        %v2517 = vmax.f32 %v2359, 0.0
        %v2518 = vmax.f32 %v2361, 0.0
        %v2519 = vmax.f32 %v2170, 0.0
        %v2520 = vmax.f32 %v2172, 0.0
        %v2521 = vmax.f32 %v2363, 0.0
        %v2522 = vmax.f32 %v2365, 0.0
        %v2523 = vmax.f32 %v2176, 0.0
        %v2524 = vmax.f32 %v2178, 0.0
        %v2525 = vmax.f32 %v2369, 0.0
        %v2526 = vmax.f32 %v2371, 0.0
        %v2527 = vmax.f32 %v2180, 0.0
        %v2528 = vmax.f32 %v2182, 0.0
        %v2529 = vmax.f32 %v2373, 0.0
        %v2530 = vmax.f32 %v2375, 0.0
        %v2531 = vmax.f32 %v2186, 0.0
        %v2532 = vmax.f32 %v2188, 0.0
        %v2533 = vmax.f32 %v2379, 0.0
        %v2534 = vmax.f32 %v2381, 0.0
        %v2535 = vmax.f32 %v2190, 0.0
        %v2536 = vmax.f32 %v2192, 0.0
        %v2537 = vmax.f32 %v2383, 0.0
        %v2538 = vmax.f32 %v2385, 0.0
        %v2539 = vmax.f32 %v2196, 0.0
        %v2540 = vmax.f32 %v2198, 0.0
        %v2541 = vmax.f32 %v2389, 0.0
        %v2542 = vmax.f32 %v2391, 0.0
        %v2543 = vmax.f32 %v2200, 0.0
        %v2544 = vmax.f32 %v2202, 0.0
        %v2545 = vmax.f32 %v2393, 0.0
        %v2546 = vmax.f32 %v2395, 0.0
        %v2547 = vmax.f32 %v2206, 0.0
        %v2548 = vmax.f32 %v2208, 0.0
        %v2549 = vmax.f32 %v2399, 0.0
        %v2550 = vmax.f32 %v2401, 0.0
        %v2551 = vmax.f32 %v2210, 0.0
        %v2552 = vmax.f32 %v2212, 0.0
        %v2553 = vmax.f32 %v2403, 0.0
        %v2554 = vmax.f32 %v2405, 0.0
        %v2555 = vmax.f32 %v2216, 0.0
        %v2556 = vmax.f32 %v2218, 0.0
        %v2557 = vmax.f32 %v2409, 0.0
        %v2558 = vmax.f32 %v2411, 0.0
        %v2559 = vmax.f32 %v2220, 0.0
        %v2560 = vmax.f32 %v2222, 0.0
        %v2561 = vmax.f32 %v2413, 0.0
        %v2562 = vmax.f32 %v2415, 0.0
        %v2563 = vmax.f32 %v2226, 0.0
        %v2564 = vmax.f32 %v2228, 0.0
        %v2565 = vmax.f32 %v2419, 0.0
        %v2566 = vmax.f32 %v2421, 0.0
        %v2567 = vmax.f32 %v2230, 0.0
        %v2568 = vmax.f32 %v2232, 0.0
        %v2569 = vmax.f32 %v2423, 0.0
        %v2570 = vmax.f32 %v2425, 0.0
        %v2571 = vmax.f32 %v2236, 0.0
        %v2572 = vmax.f32 %v2238, 0.0
        %v2573 = vmax.f32 %v2429, 0.0
        %v2574 = vmax.f32 %v2431, 0.0
        %v2575 = vmax.f32 %v2240, 0.0
        %v2576 = vmax.f32 %v2242, 0.0
        %v2577 = vmax.f32 %v2433, 0.0
        %v2578 = vmax.f32 %v2435, 0.0
        %v2579 = vmax.f32 %v2246, 0.0
        %v2580 = vmax.f32 %v2248, 0.0
        %v2581 = vmax.f32 %v2439, 0.0
        %v2582 = vmax.f32 %v2441, 0.0
        %v2583 = vmax.f32 %v2250, 0.0
        %v2584 = vmax.f32 %v2252, 0.0
        %v2585 = vmax.f32 %v2443, 0.0
        %v2586 = vmax.f32 %v2445, 0.0
        %v2587 = vmax.f32 %v2256, 0.0
        %v2588 = vmax.f32 %v2258, 0.0
        %v2589 = vmax.f32 %v2449, 0.0
        %v2590 = vmax.f32 %v2451, 0.0
        %v2591 = vmax.f32 %v2260, 0.0
        %v2592 = vmax.f32 %v2262, 0.0
        %v2593 = vmax.f32 %v2453, 0.0
        %v2594 = vmax.f32 %v2455, 0.0
        %v2595 = vmax.f32 %v2266, 0.0
        %v2596 = vmax.f32 %v2268, 0.0
        %v2597 = vmax.f32 %v2459, 0.0
        %v2598 = vmax.f32 %v2461, 0.0
        %v2599 = vmax.f32 %v2270, 0.0
        %v2600 = vmax.f32 %v2272, 0.0
        %v2601 = vmax.f32 %v2463, 0.0
        %v2602 = vmax.f32 %v2465, 0.0
        %v2603 = vmax.f32 %v2276, 0.0
        %v2604 = vmax.f32 %v2278, 0.0
        %v2605 = vmax.f32 %v2469, 0.0
        %v2606 = vmax.f32 %v2471, 0.0
        %v2607 = vmax.f32 %v2280, 0.0
        %v2608 = vmax.f32 %v2282, 0.0
        %v2609 = vmax.f32 %v2473, 0.0
        %v2610 = vmax.f32 %v2475, 0.0
        %v2611 = vmax.f32 %v2286, 0.0
        %v2612 = vmax.f32 %v2288, 0.0
        %v2613 = vmax.f32 %v2479, 0.0
        %v2614 = vmax.f32 %v2481, 0.0
        %v2615 = vmax.f32 %v2290, 0.0
        %v2616 = vmax.f32 %v2292, 0.0
        %v2617 = vmax.f32 %v2483, 0.0
        %v2618 = vmax.f32 %v2485, 0.0
        %v2619 = vmax.f32 %v2296, 0.0
        %v2620 = vmax.f32 %v2298, 0.0
        %v2621 = vmax.f32 %v2489, 0.0
        %v2622 = vmax.f32 %v2491, 0.0
        %v2623 = vmax.f32 %v2300, 0.0
        %v2624 = vmax.f32 %v2302, 0.0
        %v2625 = vmax.f32 %v2493, 0.0
        %v2626 = vmax.f32 %v2495, 0.0
        %v2627 = vmax.f32 %v2306, 0.0
        %v2628 = vmax.f32 %v2308, 0.0
        %v2629 = vmax.f32 %v2499, 0.0
        %v2630 = vmax.f32 %v2501, 0.0
        %v2631 = vmax.f32 %v2310, 0.0
        %v2632 = vmax.f32 %v2312, 0.0
        %v2633 = vmax.f32 %v2503, 0.0
        %v2634 = vmax.f32 %v2505, 0.0
        %v2635 = vld [vmem:[#allocation7] sm:$0xff]
        %v2636 = vld [vmem:[#allocation7 + $0x8] sm:$0xff]
        %v2637 = vld [vmem:[#allocation7 + $0x10] sm:$0xff]
        %v2638 = vld [vmem:[#allocation7 + $0x18] sm:$0xff]
        %v2639 = vld [vmem:[#allocation7 + $0x20] sm:$0xff]
        %v2640 = vld [vmem:[#allocation7 + $0x28] sm:$0xff]
        %v2641 = vld [vmem:[#allocation7 + $0x30] sm:$0xff]
        %v2642 = vld [vmem:[#allocation7 + $0x38] sm:$0xff]
        %v2643 = vld [vmem:[#allocation7 + $0x40] sm:$0xff]
        %v2644 = vld [vmem:[#allocation7 + $0x48] sm:$0xff]
        %v2645 = vld [vmem:[#allocation7 + $0x50] sm:$0xff]
        %v2646 = vld [vmem:[#allocation7 + $0x58] sm:$0xff]
        %v2647 = vld [vmem:[#allocation7 + $0x60] sm:$0xff]
        %v2648 = vld [vmem:[#allocation7 + $0x68] sm:$0xff]
        %v2649 = vld [vmem:[#allocation7 + $0x70] sm:$0xff]
        %v2650 = vld [vmem:[#allocation7 + $0x78] sm:$0xff]
        %v2651 = vld [vmem:[#allocation7 + $0x80] sm:$0xff]
        %v2652 = vld [vmem:[#allocation7 + $0x88] sm:$0xff]
        %v2653 = vld [vmem:[#allocation7 + $0x90] sm:$0xff]
        %v2654 = vld [vmem:[#allocation7 + $0x98] sm:$0xff]
        %v2655 = vld [vmem:[#allocation7 + $0xa0] sm:$0xff]
        %v2656 = vld [vmem:[#allocation7 + $0xa8] sm:$0xff]
        %v2657 = vld [vmem:[#allocation7 + $0xb0] sm:$0xff]
        %v2658 = vld [vmem:[#allocation7 + $0xb8] sm:$0xff]
        %v2659 = vld [vmem:[#allocation7 + $0xc0] sm:$0xff]
        %v2660 = vld [vmem:[#allocation7 + $0xc8] sm:$0xff]
        %v2661 = vld [vmem:[#allocation7 + $0xd0] sm:$0xff]
        %v2662 = vld [vmem:[#allocation7 + $0xd8] sm:$0xff]
        %v2663 = vld [vmem:[#allocation7 + $0xe0] sm:$0xff]
        %v2664 = vld [vmem:[#allocation7 + $0xe8] sm:$0xff]
        %v2665 = vld [vmem:[#allocation7 + $0xf0] sm:$0xff]
        %v2666 = vld [vmem:[#allocation7 + $0xf8] sm:$0xff]
        %v2667 = vld [vmem:[#allocation7 + $0x100] sm:$0xff]
        %v2668 = vld [vmem:[#allocation7 + $0x108] sm:$0xff]
        %v2669 = vld [vmem:[#allocation7 + $0x110] sm:$0xff]
        %v2670 = vld [vmem:[#allocation7 + $0x118] sm:$0xff]
        %v2671 = vld [vmem:[#allocation7 + $0x120] sm:$0xff]
        %v2672 = vld [vmem:[#allocation7 + $0x128] sm:$0xff]
        %v2673 = vld [vmem:[#allocation7 + $0x130] sm:$0xff]
        %v2674 = vld [vmem:[#allocation7 + $0x138] sm:$0xff]
        %v2675 = vld [vmem:[#allocation7 + $0x140] sm:$0xff]
        %v2676 = vld [vmem:[#allocation7 + $0x148] sm:$0xff]
        %v2677 = vld [vmem:[#allocation7 + $0x150] sm:$0xff]
        %v2678 = vld [vmem:[#allocation7 + $0x158] sm:$0xff]
        %v2679 = vld [vmem:[#allocation7 + $0x160] sm:$0xff]
        %v2680 = vld [vmem:[#allocation7 + $0x168] sm:$0xff]
        %v2681 = vld [vmem:[#allocation7 + $0x170] sm:$0xff]
        %v2682 = vld [vmem:[#allocation7 + $0x178] sm:$0xff]
        %v2683 = vld [vmem:[#allocation7 + $0x180] sm:$0xff]
        %v2684 = vld [vmem:[#allocation7 + $0x188] sm:$0xff]
        %v2685 = vld [vmem:[#allocation7 + $0x190] sm:$0xff]
        %v2686 = vld [vmem:[#allocation7 + $0x198] sm:$0xff]
        %v2687 = vld [vmem:[#allocation7 + $0x1a0] sm:$0xff]
        %v2688 = vld [vmem:[#allocation7 + $0x1a8] sm:$0xff]
        %v2689 = vld [vmem:[#allocation7 + $0x1b0] sm:$0xff]
        %v2690 = vld [vmem:[#allocation7 + $0x1b8] sm:$0xff]
        %v2691 = vld [vmem:[#allocation7 + $0x1c0] sm:$0xff]
        %v2692 = vld [vmem:[#allocation7 + $0x1c8] sm:$0xff]
        %v2693 = vld [vmem:[#allocation7 + $0x1d0] sm:$0xff]
        %v2694 = vld [vmem:[#allocation7 + $0x1d8] sm:$0xff]
        %v2695 = vld [vmem:[#allocation7 + $0x1e0] sm:$0xff]
        %v2696 = vld [vmem:[#allocation7 + $0x1e8] sm:$0xff]
        %v2697 = vld [vmem:[#allocation7 + $0x1f0] sm:$0xff]
        %v2698 = vld [vmem:[#allocation7 + $0x1f8] sm:$0xff]
        %v2699 = vpack.c.bf16 %v2511, %v2507
        %v2700 = vpack.c.bf16 %v2512, %v2508
        %v2701 = vpack.c.bf16 %v2513, %v2509
        %v2702 = vpack.c.bf16 %v2514, %v2510
        %v2703 = vpack.c.bf16 %v2519, %v2515
        %v2704 = vpack.c.bf16 %v2520, %v2516
        %v2705 = vpack.c.bf16 %v2521, %v2517
        %v2706 = vpack.c.bf16 %v2522, %v2518
        %v2707 = vpack.c.bf16 %v2527, %v2523
        %v2708 = vpack.c.bf16 %v2528, %v2524
        %v2709 = vpack.c.bf16 %v2529, %v2525
        %v2710 = vpack.c.bf16 %v2530, %v2526
        %v2711 = vpack.c.bf16 %v2535, %v2531
        %v2712 = vpack.c.bf16 %v2536, %v2532
        %v2713 = vpack.c.bf16 %v2537, %v2533
        %v2714 = vpack.c.bf16 %v2538, %v2534
        %v2715 = vpack.c.bf16 %v2543, %v2539
        %v2716 = vpack.c.bf16 %v2544, %v2540
        %v2717 = vpack.c.bf16 %v2545, %v2541
        %v2718 = vpack.c.bf16 %v2546, %v2542
        %v2719 = vpack.c.bf16 %v2551, %v2547
        %v2720 = vpack.c.bf16 %v2552, %v2548
        %v2721 = vpack.c.bf16 %v2553, %v2549
        %v2722 = vpack.c.bf16 %v2554, %v2550
        %v2723 = vpack.c.bf16 %v2559, %v2555
        %v2724 = vpack.c.bf16 %v2560, %v2556
        %v2725 = vpack.c.bf16 %v2561, %v2557
        %v2726 = vpack.c.bf16 %v2562, %v2558
        %v2727 = vpack.c.bf16 %v2567, %v2563
        %v2728 = vpack.c.bf16 %v2568, %v2564
        %v2729 = vpack.c.bf16 %v2569, %v2565
        %v2730 = vpack.c.bf16 %v2570, %v2566
        %v2731 = vpack.c.bf16 %v2575, %v2571
        %v2732 = vpack.c.bf16 %v2576, %v2572
        %v2733 = vpack.c.bf16 %v2577, %v2573
        %v2734 = vpack.c.bf16 %v2578, %v2574
        %v2735 = vpack.c.bf16 %v2583, %v2579
        %v2736 = vpack.c.bf16 %v2584, %v2580
        %v2737 = vpack.c.bf16 %v2585, %v2581
        %v2738 = vpack.c.bf16 %v2586, %v2582
        %v2739 = vpack.c.bf16 %v2591, %v2587
        %v2740 = vpack.c.bf16 %v2592, %v2588
        %v2741 = vpack.c.bf16 %v2593, %v2589
        %v2742 = vpack.c.bf16 %v2594, %v2590
        %v2743 = vpack.c.bf16 %v2599, %v2595
        %v2744 = vpack.c.bf16 %v2600, %v2596
        %v2745 = vpack.c.bf16 %v2601, %v2597
        %v2746 = vpack.c.bf16 %v2602, %v2598
        %v2747 = vpack.c.bf16 %v2607, %v2603
        %v2748 = vpack.c.bf16 %v2608, %v2604
        %v2749 = vpack.c.bf16 %v2609, %v2605
        %v2750 = vpack.c.bf16 %v2610, %v2606
        %v2751 = vpack.c.bf16 %v2615, %v2611
        %v2752 = vpack.c.bf16 %v2616, %v2612
        %v2753 = vpack.c.bf16 %v2617, %v2613
        %v2754 = vpack.c.bf16 %v2618, %v2614
        %v2755 = vpack.c.bf16 %v2623, %v2619
        %v2756 = vpack.c.bf16 %v2624, %v2620
        %v2757 = vpack.c.bf16 %v2625, %v2621
        %v2758 = vpack.c.bf16 %v2626, %v2622
        %v2759 = vpack.c.bf16 %v2631, %v2627
        %v2760 = vpack.c.bf16 %v2632, %v2628
        %v2761 = vpack.c.bf16 %v2633, %v2629
        %v2762 = vpack.c.bf16 %v2634, %v2630
        %v2763 = vld [vmem:[%s8] sm:$0xff]
        %v2764 = vld [vmem:[%s8 + $0x8] sm:$0xff]
        %v2765 = vld [vmem:[%s8 + $0x10] sm:$0xff]
        %v2766 = vld [vmem:[%s8 + $0x18] sm:$0xff]
        %v2767 = vld [vmem:[%s8 + $0x20] sm:$0xff]
        %v2768 = vld [vmem:[%s8 + $0x28] sm:$0xff]
        %v2769 = vld [vmem:[%s8 + $0x30] sm:$0xff]
        %v2770 = vld [vmem:[%s8 + $0x38] sm:$0xff]
        %v2771 = vld [vmem:[%s8 + $0x40] sm:$0xff]
        %v2772 = vld [vmem:[%s8 + $0x48] sm:$0xff]
        %v2773 = vld [vmem:[%s8 + $0x50] sm:$0xff]
        %v2774 = vld [vmem:[%s8 + $0x58] sm:$0xff]
        %v2775 = vld [vmem:[%s8 + $0x60] sm:$0xff]
        %v2776 = vld [vmem:[%s8 + $0x68] sm:$0xff]
        %v2777 = vld [vmem:[%s8 + $0x70] sm:$0xff]
        %v2778 = vld [vmem:[%s8 + $0x78] sm:$0xff]
        %v2779 = vld [vmem:[%s8 + $0x80] sm:$0xff]
        %v2780 = vld [vmem:[%s8 + $0x88] sm:$0xff]
        %v2781 = vld [vmem:[%s8 + $0x90] sm:$0xff]
        %v2782 = vld [vmem:[%s8 + $0x98] sm:$0xff]
        %v2783 = vld [vmem:[%s8 + $0xa0] sm:$0xff]
        %v2784 = vld [vmem:[%s8 + $0xa8] sm:$0xff]
        %v2785 = vld [vmem:[%s8 + $0xb0] sm:$0xff]
        %v2786 = vld [vmem:[%s8 + $0xb8] sm:$0xff]
        %v2787 = vld [vmem:[%s8 + $0xc0] sm:$0xff]
        %v2788 = vld [vmem:[%s8 + $0xc8] sm:$0xff]
        %v2789 = vld [vmem:[%s8 + $0xd0] sm:$0xff]
        %v2790 = vld [vmem:[%s8 + $0xd8] sm:$0xff]
        %v2791 = vld [vmem:[%s8 + $0xe0] sm:$0xff]
        %v2792 = vld [vmem:[%s8 + $0xe8] sm:$0xff]
        %v2793 = vld [vmem:[%s8 + $0xf0] sm:$0xff]
        %v2794 = vld [vmem:[%s8 + $0xf8] sm:$0xff]
        %v2795 = vld [vmem:[%s8 + $0x100] sm:$0xff]
        %v2796 = vld [vmem:[%s8 + $0x108] sm:$0xff]
        %v2797 = vld [vmem:[%s8 + $0x110] sm:$0xff]
        %v2798 = vld [vmem:[%s8 + $0x118] sm:$0xff]
        %v2799 = vld [vmem:[%s8 + $0x120] sm:$0xff]
        %v2800 = vld [vmem:[%s8 + $0x128] sm:$0xff]
        %v2801 = vld [vmem:[%s8 + $0x130] sm:$0xff]
        %v2802 = vld [vmem:[%s8 + $0x138] sm:$0xff]
        %v2803 = vld [vmem:[%s8 + $0x140] sm:$0xff]
        %v2804 = vld [vmem:[%s8 + $0x148] sm:$0xff]
        %v2805 = vld [vmem:[%s8 + $0x150] sm:$0xff]
        %v2806 = vld [vmem:[%s8 + $0x158] sm:$0xff]
        %v2807 = vld [vmem:[%s8 + $0x160] sm:$0xff]
        %v2808 = vld [vmem:[%s8 + $0x168] sm:$0xff]
        %v2809 = vld [vmem:[%s8 + $0x170] sm:$0xff]
        %v2810 = vld [vmem:[%s8 + $0x178] sm:$0xff]
        %v2811 = vld [vmem:[%s8 + $0x180] sm:$0xff]
        %v2812 = vld [vmem:[%s8 + $0x188] sm:$0xff]
        %v2813 = vld [vmem:[%s8 + $0x190] sm:$0xff]
        %v2814 = vld [vmem:[%s8 + $0x198] sm:$0xff]
        %v2815 = vld [vmem:[%s8 + $0x1a0] sm:$0xff]
        %v2816 = vld [vmem:[%s8 + $0x1a8] sm:$0xff]
        %v2817 = vld [vmem:[%s8 + $0x1b0] sm:$0xff]
        %v2818 = vld [vmem:[%s8 + $0x1b8] sm:$0xff]
        %v2819 = vld [vmem:[%s8 + $0x1c0] sm:$0xff]
        %v2820 = vld [vmem:[%s8 + $0x1c8] sm:$0xff]
        %v2821 = vld [vmem:[%s8 + $0x1d0] sm:$0xff]
        %v2822 = vld [vmem:[%s8 + $0x1d8] sm:$0xff]
        %v2823 = vld [vmem:[%s8 + $0x1e0] sm:$0xff]
        %v2824 = vld [vmem:[%s8 + $0x1e8] sm:$0xff]
        %v2825 = vld [vmem:[%s8 + $0x1f0] sm:$0xff]
        %v2826 = vld [vmem:[%s8 + $0x1f8] sm:$0xff]
        %2828 = vset.pattern.permute.xlu0 0
        %2829 = vperm.xlu0 %2828, %v2763
        %v2830 = vpop.permute.xlu0 %2829
        %2833 = vset.pattern.permute.xlu0 0
        %2834 = vperm.xlu0 %2833, %v2764
        %v2835 = vpop.permute.xlu0 %2834
        %2838 = vset.pattern.permute.xlu0 0
        %2839 = vperm.xlu0 %2838, %v2765
        %v2840 = vpop.permute.xlu0 %2839
        %2843 = vset.pattern.permute.xlu0 0
        %2844 = vperm.xlu0 %2843, %v2766
        %v2845 = vpop.permute.xlu0 %2844
        %2848 = vset.pattern.permute.xlu0 0
        %2849 = vperm.xlu0 %2848, %v2767
        %v2850 = vpop.permute.xlu0 %2849
        %2853 = vset.pattern.permute.xlu0 0
        %2854 = vperm.xlu0 %2853, %v2768
        %v2855 = vpop.permute.xlu0 %2854
        %2858 = vset.pattern.permute.xlu0 0
        %2859 = vperm.xlu0 %2858, %v2769
        %v2860 = vpop.permute.xlu0 %2859
        %2863 = vset.pattern.permute.xlu0 0
        %2864 = vperm.xlu0 %2863, %v2770
        %v2865 = vpop.permute.xlu0 %2864
        %2868 = vset.pattern.permute.xlu0 0
        %2869 = vperm.xlu0 %2868, %v2771
        %v2870 = vpop.permute.xlu0 %2869
        %2873 = vset.pattern.permute.xlu0 0
        %2874 = vperm.xlu0 %2873, %v2772
        %v2875 = vpop.permute.xlu0 %2874
        %2878 = vset.pattern.permute.xlu0 0
        %2879 = vperm.xlu0 %2878, %v2773
        %v2880 = vpop.permute.xlu0 %2879
        %2883 = vset.pattern.permute.xlu0 0
        %2884 = vperm.xlu0 %2883, %v2774
        %v2885 = vpop.permute.xlu0 %2884
        %2888 = vset.pattern.permute.xlu0 0
        %2889 = vperm.xlu0 %2888, %v2775
        %v2890 = vpop.permute.xlu0 %2889
        %2893 = vset.pattern.permute.xlu0 0
        %2894 = vperm.xlu0 %2893, %v2776
        %v2895 = vpop.permute.xlu0 %2894
        %2898 = vset.pattern.permute.xlu0 0
        %2899 = vperm.xlu0 %2898, %v2777
        %v2900 = vpop.permute.xlu0 %2899
        %2903 = vset.pattern.permute.xlu0 0
        %2904 = vperm.xlu0 %2903, %v2778
        %v2905 = vpop.permute.xlu0 %2904
        %2908 = vset.pattern.permute.xlu0 0
        %2909 = vperm.xlu0 %2908, %v2779
        %v2910 = vpop.permute.xlu0 %2909
        %2913 = vset.pattern.permute.xlu0 0
        %2914 = vperm.xlu0 %2913, %v2780
        %v2915 = vpop.permute.xlu0 %2914
        %2918 = vset.pattern.permute.xlu0 0
        %2919 = vperm.xlu0 %2918, %v2781
        %v2920 = vpop.permute.xlu0 %2919
        %2923 = vset.pattern.permute.xlu0 0
        %2924 = vperm.xlu0 %2923, %v2782
        %v2925 = vpop.permute.xlu0 %2924
        %2928 = vset.pattern.permute.xlu0 0
        %2929 = vperm.xlu0 %2928, %v2783
        %v2930 = vpop.permute.xlu0 %2929
        %2933 = vset.pattern.permute.xlu0 0
        %2934 = vperm.xlu0 %2933, %v2784
        %v2935 = vpop.permute.xlu0 %2934
        %2938 = vset.pattern.permute.xlu0 0
        %2939 = vperm.xlu0 %2938, %v2785
        %v2940 = vpop.permute.xlu0 %2939
        %2943 = vset.pattern.permute.xlu0 0
        %2944 = vperm.xlu0 %2943, %v2786
        %v2945 = vpop.permute.xlu0 %2944
        %2948 = vset.pattern.permute.xlu0 0
        %2949 = vperm.xlu0 %2948, %v2787
        %v2950 = vpop.permute.xlu0 %2949
        %2953 = vset.pattern.permute.xlu0 0
        %2954 = vperm.xlu0 %2953, %v2788
        %v2955 = vpop.permute.xlu0 %2954
        %2958 = vset.pattern.permute.xlu0 0
        %2959 = vperm.xlu0 %2958, %v2789
        %v2960 = vpop.permute.xlu0 %2959
        %2963 = vset.pattern.permute.xlu0 0
        %2964 = vperm.xlu0 %2963, %v2790
        %v2965 = vpop.permute.xlu0 %2964
        %2968 = vset.pattern.permute.xlu0 0
        %2969 = vperm.xlu0 %2968, %v2791
        %v2970 = vpop.permute.xlu0 %2969
        %2973 = vset.pattern.permute.xlu0 0
        %2974 = vperm.xlu0 %2973, %v2792
        %v2975 = vpop.permute.xlu0 %2974
        %2978 = vset.pattern.permute.xlu0 0
        %2979 = vperm.xlu0 %2978, %v2793
        %v2980 = vpop.permute.xlu0 %2979
        %2983 = vset.pattern.permute.xlu0 0
        %2984 = vperm.xlu0 %2983, %v2794
        %v2985 = vpop.permute.xlu0 %2984
        %2988 = vset.pattern.permute.xlu0 0
        %2989 = vperm.xlu0 %2988, %v2795
        %v2990 = vpop.permute.xlu0 %2989
        %2993 = vset.pattern.permute.xlu0 0
        %2994 = vperm.xlu0 %2993, %v2796
        %v2995 = vpop.permute.xlu0 %2994
        %2998 = vset.pattern.permute.xlu0 0
        %2999 = vperm.xlu0 %2998, %v2797
        %v3000 = vpop.permute.xlu0 %2999
        %3003 = vset.pattern.permute.xlu0 0
        %3004 = vperm.xlu0 %3003, %v2798
        %v3005 = vpop.permute.xlu0 %3004
        %3008 = vset.pattern.permute.xlu0 0
        %3009 = vperm.xlu0 %3008, %v2799
        %v3010 = vpop.permute.xlu0 %3009
        %3013 = vset.pattern.permute.xlu0 0
        %3014 = vperm.xlu0 %3013, %v2800
        %v3015 = vpop.permute.xlu0 %3014
        %3018 = vset.pattern.permute.xlu0 0
        %3019 = vperm.xlu0 %3018, %v2801
        %v3020 = vpop.permute.xlu0 %3019
        %3023 = vset.pattern.permute.xlu0 0
        %3024 = vperm.xlu0 %3023, %v2802
        %v3025 = vpop.permute.xlu0 %3024
        %3028 = vset.pattern.permute.xlu0 0
        %3029 = vperm.xlu0 %3028, %v2803
        %v3030 = vpop.permute.xlu0 %3029
        %3033 = vset.pattern.permute.xlu0 0
        %3034 = vperm.xlu0 %3033, %v2804
        %v3035 = vpop.permute.xlu0 %3034
        %3038 = vset.pattern.permute.xlu0 0
        %3039 = vperm.xlu0 %3038, %v2805
        %v3040 = vpop.permute.xlu0 %3039
        %3043 = vset.pattern.permute.xlu0 0
        %3044 = vperm.xlu0 %3043, %v2806
        %v3045 = vpop.permute.xlu0 %3044
        %3048 = vset.pattern.permute.xlu0 0
        %3049 = vperm.xlu0 %3048, %v2807
        %v3050 = vpop.permute.xlu0 %3049
        %3053 = vset.pattern.permute.xlu0 0
        %3054 = vperm.xlu0 %3053, %v2808
        %v3055 = vpop.permute.xlu0 %3054
        %3058 = vset.pattern.permute.xlu0 0
        %3059 = vperm.xlu0 %3058, %v2809
        %v3060 = vpop.permute.xlu0 %3059
        %3063 = vset.pattern.permute.xlu0 0
        %3064 = vperm.xlu0 %3063, %v2810
        %v3065 = vpop.permute.xlu0 %3064
        %3068 = vset.pattern.permute.xlu0 0
        %3069 = vperm.xlu0 %3068, %v2811
        %v3070 = vpop.permute.xlu0 %3069
        %3073 = vset.pattern.permute.xlu0 0
        %3074 = vperm.xlu0 %3073, %v2812
        %v3075 = vpop.permute.xlu0 %3074
        %3078 = vset.pattern.permute.xlu0 0
        %3079 = vperm.xlu0 %3078, %v2813
        %v3080 = vpop.permute.xlu0 %3079
        %3083 = vset.pattern.permute.xlu0 0
        %3084 = vperm.xlu0 %3083, %v2814
        %v3085 = vpop.permute.xlu0 %3084
        %3088 = vset.pattern.permute.xlu0 0
        %3089 = vperm.xlu0 %3088, %v2815
        %v3090 = vpop.permute.xlu0 %3089
        %3093 = vset.pattern.permute.xlu0 0
        %3094 = vperm.xlu0 %3093, %v2816
        %v3095 = vpop.permute.xlu0 %3094
        %3098 = vset.pattern.permute.xlu0 0
        %3099 = vperm.xlu0 %3098, %v2817
        %v3100 = vpop.permute.xlu0 %3099
        %3103 = vset.pattern.permute.xlu0 0
        %3104 = vperm.xlu0 %3103, %v2818
        %v3105 = vpop.permute.xlu0 %3104
        %3108 = vset.pattern.permute.xlu0 0
        %3109 = vperm.xlu0 %3108, %v2819
        %v3110 = vpop.permute.xlu0 %3109
        %3113 = vset.pattern.permute.xlu0 0
        %3114 = vperm.xlu0 %3113, %v2820
        %v3115 = vpop.permute.xlu0 %3114
        %3118 = vset.pattern.permute.xlu0 0
        %3119 = vperm.xlu0 %3118, %v2821
        %v3120 = vpop.permute.xlu0 %3119
        %3123 = vset.pattern.permute.xlu0 0
        %3124 = vperm.xlu0 %3123, %v2822
        %v3125 = vpop.permute.xlu0 %3124
        %3128 = vset.pattern.permute.xlu0 0
        %3129 = vperm.xlu0 %3128, %v2823
        %v3130 = vpop.permute.xlu0 %3129
        %3133 = vset.pattern.permute.xlu0 0
        %3134 = vperm.xlu0 %3133, %v2824
        %v3135 = vpop.permute.xlu0 %3134
        %3138 = vset.pattern.permute.xlu0 0
        %3139 = vperm.xlu0 %3138, %v2825
        %v3140 = vpop.permute.xlu0 %3139
        %3143 = vset.pattern.permute.xlu0 0
        %3144 = vperm.xlu0 %3143, %v2826
        %v3145 = vpop.permute.xlu0 %3144
        %v3211 = vunpack.c.l.b16 %v2635
        %v3212 = vunpack.c.h.b16 %v2635
        %v3213 = vunpack.c.l.b16 %v2636
        %v3214 = vunpack.c.h.b16 %v2636
        %v3215 = vunpack.c.l.b16 %v2637
        %v3216 = vunpack.c.h.b16 %v2637
        %v3217 = vunpack.c.l.b16 %v2638
        %v3218 = vunpack.c.h.b16 %v2638
        %v3219 = vunpack.c.l.b16 %v2639
        %v3220 = vunpack.c.h.b16 %v2639
        %v3221 = vunpack.c.l.b16 %v2640
        %v3222 = vunpack.c.h.b16 %v2640
        %v3223 = vunpack.c.l.b16 %v2641
        %v3224 = vunpack.c.h.b16 %v2641
        %v3225 = vunpack.c.l.b16 %v2642
        %v3226 = vunpack.c.h.b16 %v2642
        %v3227 = vunpack.c.l.b16 %v2643
        %v3228 = vunpack.c.h.b16 %v2643
        %v3229 = vunpack.c.l.b16 %v2644
        %v3230 = vunpack.c.h.b16 %v2644
        %v3231 = vunpack.c.l.b16 %v2645
        %v3232 = vunpack.c.h.b16 %v2645
        %v3233 = vunpack.c.l.b16 %v2646
        %v3234 = vunpack.c.h.b16 %v2646
        %v3235 = vunpack.c.l.b16 %v2647
        %v3236 = vunpack.c.h.b16 %v2647
        %v3237 = vunpack.c.l.b16 %v2648
        %v3238 = vunpack.c.h.b16 %v2648
        %v3239 = vunpack.c.l.b16 %v2649
        %v3240 = vunpack.c.h.b16 %v2649
        %v3241 = vunpack.c.l.b16 %v2650
        %v3242 = vunpack.c.h.b16 %v2650
        %v3243 = vunpack.c.l.b16 %v2651
        %v3244 = vunpack.c.h.b16 %v2651
        %v3245 = vunpack.c.l.b16 %v2652
        %v3246 = vunpack.c.h.b16 %v2652
        %v3247 = vunpack.c.l.b16 %v2653
        %v3248 = vunpack.c.h.b16 %v2653
        %v3249 = vunpack.c.l.b16 %v2654
        %v3250 = vunpack.c.h.b16 %v2654
        %v3251 = vunpack.c.l.b16 %v2655
        %v3252 = vunpack.c.h.b16 %v2655
        %v3253 = vunpack.c.l.b16 %v2656
        %v3254 = vunpack.c.h.b16 %v2656
        %v3255 = vunpack.c.l.b16 %v2657
        %v3256 = vunpack.c.h.b16 %v2657
        %v3257 = vunpack.c.l.b16 %v2658
        %v3258 = vunpack.c.h.b16 %v2658
        %v3259 = vunpack.c.l.b16 %v2659
        %v3260 = vunpack.c.h.b16 %v2659
        %v3261 = vunpack.c.l.b16 %v2660
        %v3262 = vunpack.c.h.b16 %v2660
        %v3263 = vunpack.c.l.b16 %v2661
        %v3264 = vunpack.c.h.b16 %v2661
        %v3265 = vunpack.c.l.b16 %v2662
        %v3266 = vunpack.c.h.b16 %v2662
        %v3267 = vunpack.c.l.b16 %v2663
        %v3268 = vunpack.c.h.b16 %v2663
        %v3269 = vunpack.c.l.b16 %v2664
        %v3270 = vunpack.c.h.b16 %v2664
        %v3271 = vunpack.c.l.b16 %v2665
        %v3272 = vunpack.c.h.b16 %v2665
        %v3273 = vunpack.c.l.b16 %v2666
        %v3274 = vunpack.c.h.b16 %v2666
        %v3275 = vunpack.c.l.b16 %v2667
        %v3276 = vunpack.c.h.b16 %v2667
        %v3277 = vunpack.c.l.b16 %v2668
        %v3278 = vunpack.c.h.b16 %v2668
        %v3279 = vunpack.c.l.b16 %v2669
        %v3280 = vunpack.c.h.b16 %v2669
        %v3281 = vunpack.c.l.b16 %v2670
        %v3282 = vunpack.c.h.b16 %v2670
        %v3283 = vunpack.c.l.b16 %v2671
        %v3284 = vunpack.c.h.b16 %v2671
        %v3285 = vunpack.c.l.b16 %v2672
        %v3286 = vunpack.c.h.b16 %v2672
        %v3287 = vunpack.c.l.b16 %v2673
        %v3288 = vunpack.c.h.b16 %v2673
        %v3289 = vunpack.c.l.b16 %v2674
        %v3290 = vunpack.c.h.b16 %v2674
        %v3291 = vunpack.c.l.b16 %v2675
        %v3292 = vunpack.c.h.b16 %v2675
        %v3293 = vunpack.c.l.b16 %v2676
        %v3294 = vunpack.c.h.b16 %v2676
        %v3295 = vunpack.c.l.b16 %v2677
        %v3296 = vunpack.c.h.b16 %v2677
        %v3297 = vunpack.c.l.b16 %v2678
        %v3298 = vunpack.c.h.b16 %v2678
        %v3299 = vunpack.c.l.b16 %v2679
        %v3300 = vunpack.c.h.b16 %v2679
        %v3301 = vunpack.c.l.b16 %v2680
        %v3302 = vunpack.c.h.b16 %v2680
        %v3303 = vunpack.c.l.b16 %v2681
        %v3304 = vunpack.c.h.b16 %v2681
        %v3305 = vunpack.c.l.b16 %v2682
        %v3306 = vunpack.c.h.b16 %v2682
        %v3307 = vunpack.c.l.b16 %v2683
        %v3308 = vunpack.c.h.b16 %v2683
        %v3309 = vunpack.c.l.b16 %v2684
        %v3310 = vunpack.c.h.b16 %v2684
        %v3311 = vunpack.c.l.b16 %v2685
        %v3312 = vunpack.c.h.b16 %v2685
        %v3313 = vunpack.c.l.b16 %v2686
        %v3314 = vunpack.c.h.b16 %v2686
        %v3315 = vunpack.c.l.b16 %v2687
        %v3316 = vunpack.c.h.b16 %v2687
        %v3317 = vunpack.c.l.b16 %v2688
        %v3318 = vunpack.c.h.b16 %v2688
        %v3319 = vunpack.c.l.b16 %v2689
        %v3320 = vunpack.c.h.b16 %v2689
        %v3321 = vunpack.c.l.b16 %v2690
        %v3322 = vunpack.c.h.b16 %v2690
        %v3323 = vunpack.c.l.b16 %v2691
        %v3324 = vunpack.c.h.b16 %v2691
        %v3325 = vunpack.c.l.b16 %v2692
        %v3326 = vunpack.c.h.b16 %v2692
        %v3327 = vunpack.c.l.b16 %v2693
        %v3328 = vunpack.c.h.b16 %v2693
        %v3329 = vunpack.c.l.b16 %v2694
        %v3330 = vunpack.c.h.b16 %v2694
        %v3331 = vunpack.c.l.b16 %v2695
        %v3332 = vunpack.c.h.b16 %v2695
        %v3333 = vunpack.c.l.b16 %v2696
        %v3334 = vunpack.c.h.b16 %v2696
        %v3335 = vunpack.c.l.b16 %v2697
        %v3336 = vunpack.c.h.b16 %v2697
        %v3337 = vunpack.c.l.b16 %v2698
        %v3338 = vunpack.c.h.b16 %v2698
        %v3339 = vpack.c.b16 %v3213, %v3211
        %v3340 = vpack.c.b16 %v3214, %v3212
        %v3341 = vpack.c.b16 %v3217, %v3215
        %v3342 = vpack.c.b16 %v3218, %v3216
        %v3343 = vpack.c.b16 %v3221, %v3219
        %v3344 = vpack.c.b16 %v3222, %v3220
        %v3345 = vpack.c.b16 %v3225, %v3223
        %v3346 = vpack.c.b16 %v3226, %v3224
        %v3347 = vpack.c.b16 %v3229, %v3227
        %v3348 = vpack.c.b16 %v3230, %v3228
        %v3349 = vpack.c.b16 %v3233, %v3231
        %v3350 = vpack.c.b16 %v3234, %v3232
        %v3351 = vpack.c.b16 %v3237, %v3235
        %v3352 = vpack.c.b16 %v3238, %v3236
        %v3353 = vpack.c.b16 %v3241, %v3239
        %v3354 = vpack.c.b16 %v3242, %v3240
        %v3355 = vpack.c.b16 %v3245, %v3243
        %v3356 = vpack.c.b16 %v3246, %v3244
        %v3357 = vpack.c.b16 %v3249, %v3247
        %v3358 = vpack.c.b16 %v3250, %v3248
        %v3359 = vpack.c.b16 %v3253, %v3251
        %v3360 = vpack.c.b16 %v3254, %v3252
        %v3361 = vpack.c.b16 %v3257, %v3255
        %v3362 = vpack.c.b16 %v3258, %v3256
        %v3363 = vpack.c.b16 %v3261, %v3259
        %v3364 = vpack.c.b16 %v3262, %v3260
        %v3365 = vpack.c.b16 %v3265, %v3263
        %v3366 = vpack.c.b16 %v3266, %v3264
        %v3367 = vpack.c.b16 %v3269, %v3267
        %v3368 = vpack.c.b16 %v3270, %v3268
        %v3369 = vpack.c.b16 %v3273, %v3271
        %v3370 = vpack.c.b16 %v3274, %v3272
        %v3371 = vpack.c.b16 %v3277, %v3275
        %v3372 = vpack.c.b16 %v3278, %v3276
        %v3373 = vpack.c.b16 %v3281, %v3279
        %v3374 = vpack.c.b16 %v3282, %v3280
        %v3375 = vpack.c.b16 %v3285, %v3283
        %v3376 = vpack.c.b16 %v3286, %v3284
        %v3377 = vpack.c.b16 %v3289, %v3287
        %v3378 = vpack.c.b16 %v3290, %v3288
        %v3379 = vpack.c.b16 %v3293, %v3291
        %v3380 = vpack.c.b16 %v3294, %v3292
        %v3381 = vpack.c.b16 %v3297, %v3295
        %v3382 = vpack.c.b16 %v3298, %v3296
        %v3383 = vpack.c.b16 %v3301, %v3299
        %v3384 = vpack.c.b16 %v3302, %v3300
        %v3385 = vpack.c.b16 %v3305, %v3303
        %v3386 = vpack.c.b16 %v3306, %v3304
        %v3387 = vpack.c.b16 %v3309, %v3307
        %v3388 = vpack.c.b16 %v3310, %v3308
        %v3389 = vpack.c.b16 %v3313, %v3311
        %v3390 = vpack.c.b16 %v3314, %v3312
        %v3391 = vpack.c.b16 %v3317, %v3315
        %v3392 = vpack.c.b16 %v3318, %v3316
        %v3393 = vpack.c.b16 %v3321, %v3319
        %v3394 = vpack.c.b16 %v3322, %v3320
        %v3395 = vpack.c.b16 %v3325, %v3323
        %v3396 = vpack.c.b16 %v3326, %v3324
        %v3397 = vpack.c.b16 %v3329, %v3327
        %v3398 = vpack.c.b16 %v3330, %v3328
        %v3399 = vpack.c.b16 %v3333, %v3331
        %v3400 = vpack.c.b16 %v3334, %v3332
        %v3401 = vpack.c.b16 %v3337, %v3335
        %v3402 = vpack.c.b16 %v3338, %v3336
        %3467 = vmatprep.subr.bf16.mxu0 %v2728
        %3468 = vmatpush1.bf16.msra.mxu0 %v2727
        %3469 = vmatprep.subr.bf16.mxu0 %v2724
        %3470 = vmatpush1.bf16.msra.mxu0 %v2723
        %3471 = vmatprep.subr.bf16.mxu0 %v2720
        %3472 = vmatpush1.bf16.msra.mxu0 %v2719
        %3473 = vmatprep.subr.bf16.mxu0 %v2716
        %3474 = vmatpush1.bf16.msra.mxu0 %v2715
        %3475 = vmatprep.subr.bf16.mxu0 %v2712
        %3476 = vmatpush1.bf16.msra.mxu0 %v2711
        %3477 = vmatprep.subr.bf16.mxu0 %v2708
        %3478 = vmatpush1.bf16.msra.mxu0 %v2707
        %3479 = vmatprep.subr.bf16.mxu0 %v2704
        %3480 = vmatpush1.bf16.msra.mxu0 %v2703
        %3481 = vmatprep.subr.bf16.mxu0 %v2700
        %3482 = vmatpush1.bf16.msra.mxu0 %v2699
        %3483 = vmatprep.subr.bf16.mxu0 %v2760
        %3484 = vmatpush2.bf16.msra.mxu0 %v2759
        %3485 = vmatprep.subr.bf16.mxu0 %v2756
        %3486 = vmatpush2.bf16.msra.mxu0 %v2755
        %3487 = vmatprep.subr.bf16.mxu0 %v2752
        %3488 = vmatpush2.bf16.msra.mxu0 %v2751
        %3489 = vmatprep.subr.bf16.mxu0 %v2748
        %3490 = vmatpush2.bf16.msra.mxu0 %v2747
        %3491 = vmatprep.subr.bf16.mxu0 %v2744
        %3492 = vmatpush2.bf16.msra.mxu0 %v2743
        %3493 = vmatprep.subr.bf16.mxu0 %v2740
        %3494 = vmatpush2.bf16.msra.mxu0 %v2739
        %3495 = vmatprep.subr.bf16.mxu0 %v2736
        %3496 = vmatpush2.bf16.msra.mxu0 %v2735
        %3497 = vmatprep.subr.bf16.mxu0 %v2732
        %3498 = vmatpush2.bf16.msra.mxu0 %v2731
        %3499 = vmatprep.mubr.bf16.mxu0 %v3340
        %3500 = vmatmul.mubr.bf16.gmra.mxu0 %v3339
        %v3501 = vpop.f32.mrf.mxu0
        %v3502 = vadd.f32 %v2830, %v3501
        %v3503 = vpop.f32.mrf.mxu0
        %v3504 = vadd.f32 %v2830, %v3503
        %v3505 = vpop.f32.mrf.mxu0
        %v3506 = vadd.f32 %v2835, %v3505
        %v3507 = vpop.f32.mrf.mxu0
        %v3508 = vadd.f32 %v2835, %v3507
        %3509 = vmatprep.mubr.bf16.mxu0 %v3342
        %3510 = vmatmul.mubr.bf16.gmra.mxu0 %v3341
        %v3511 = vpop.f32.mrf.mxu0
        %v3512 = vadd.f32 %v2840, %v3511
        %v3513 = vpop.f32.mrf.mxu0
        %v3514 = vadd.f32 %v2840, %v3513
        %v3515 = vpop.f32.mrf.mxu0
        %v3516 = vadd.f32 %v2845, %v3515
        %v3517 = vpop.f32.mrf.mxu0
        %v3518 = vadd.f32 %v2845, %v3517
        %3519 = vmatprep.mubr.bf16.mxu0 %v3344
        %3520 = vmatmul.mubr.bf16.gmra.mxu0 %v3343
        %v3521 = vpop.f32.mrf.mxu0
        %v3522 = vadd.f32 %v2850, %v3521
        %v3523 = vpop.f32.mrf.mxu0
        %v3524 = vadd.f32 %v2850, %v3523
        %v3525 = vpop.f32.mrf.mxu0
        %v3526 = vadd.f32 %v2855, %v3525
        %v3527 = vpop.f32.mrf.mxu0
        %v3528 = vadd.f32 %v2855, %v3527
        %3529 = vmatprep.mubr.bf16.mxu0 %v3346
        %3530 = vmatmul.mubr.bf16.gmra.mxu0 %v3345
        %v3531 = vpop.f32.mrf.mxu0
        %v3532 = vadd.f32 %v2860, %v3531
        %v3533 = vpop.f32.mrf.mxu0
        %v3534 = vadd.f32 %v2860, %v3533
        %v3535 = vpop.f32.mrf.mxu0
        %v3536 = vadd.f32 %v2865, %v3535
        %v3537 = vpop.f32.mrf.mxu0
        %v3538 = vadd.f32 %v2865, %v3537
        %3539 = vmatprep.mubr.bf16.mxu0 %v3348
        %3540 = vmatmul.mubr.bf16.gmra.mxu0 %v3347
        %v3541 = vpop.f32.mrf.mxu0
        %v3542 = vadd.f32 %v2870, %v3541
        %v3543 = vpop.f32.mrf.mxu0
        %v3544 = vadd.f32 %v2870, %v3543
        %v3545 = vpop.f32.mrf.mxu0
        %v3546 = vadd.f32 %v2875, %v3545
        %v3547 = vpop.f32.mrf.mxu0
        %v3548 = vadd.f32 %v2875, %v3547
        %3549 = vmatprep.mubr.bf16.mxu0 %v3350
        %3550 = vmatmul.mubr.bf16.gmra.mxu0 %v3349
        %v3551 = vpop.f32.mrf.mxu0
        %v3552 = vadd.f32 %v2880, %v3551
        %v3553 = vpop.f32.mrf.mxu0
        %v3554 = vadd.f32 %v2880, %v3553
        %v3555 = vpop.f32.mrf.mxu0
        %v3556 = vadd.f32 %v2885, %v3555
        %v3557 = vpop.f32.mrf.mxu0
        %v3558 = vadd.f32 %v2885, %v3557
        %3559 = vmatprep.mubr.bf16.mxu0 %v3352
        %3560 = vmatmul.mubr.bf16.gmra.mxu0 %v3351
        %v3561 = vpop.f32.mrf.mxu0
        %v3562 = vadd.f32 %v2890, %v3561
        %v3563 = vpop.f32.mrf.mxu0
        %v3564 = vadd.f32 %v2890, %v3563
        %v3565 = vpop.f32.mrf.mxu0
        %v3566 = vadd.f32 %v2895, %v3565
        %v3567 = vpop.f32.mrf.mxu0
        %v3568 = vadd.f32 %v2895, %v3567
        %3569 = vmatprep.mubr.bf16.mxu0 %v3354
        %3570 = vmatmul.mubr.bf16.gmra.mxu0 %v3353
        %v3571 = vpop.f32.mrf.mxu0
        %v3572 = vadd.f32 %v2900, %v3571
        %v3573 = vpop.f32.mrf.mxu0
        %v3574 = vadd.f32 %v2900, %v3573
        %v3575 = vpop.f32.mrf.mxu0
        %v3576 = vadd.f32 %v2905, %v3575
        %v3577 = vpop.f32.mrf.mxu0
        %v3578 = vadd.f32 %v2905, %v3577
        %3579 = vmatprep.mubr.bf16.mxu0 %v3356
        %3580 = vmatmul.mubr.bf16.gmra.mxu0 %v3355
        %v3581 = vpop.f32.mrf.mxu0
        %v3582 = vadd.f32 %v2910, %v3581
        %v3583 = vpop.f32.mrf.mxu0
        %v3584 = vadd.f32 %v2910, %v3583
        %v3585 = vpop.f32.mrf.mxu0
        %v3586 = vadd.f32 %v2915, %v3585
        %v3587 = vpop.f32.mrf.mxu0
        %v3588 = vadd.f32 %v2915, %v3587
        %3589 = vmatprep.mubr.bf16.mxu0 %v3358
        %3590 = vmatmul.mubr.bf16.gmra.mxu0 %v3357
        %v3591 = vpop.f32.mrf.mxu0
        %v3592 = vadd.f32 %v2920, %v3591
        %v3593 = vpop.f32.mrf.mxu0
        %v3594 = vadd.f32 %v2920, %v3593
        %v3595 = vpop.f32.mrf.mxu0
        %v3596 = vadd.f32 %v2925, %v3595
        %v3597 = vpop.f32.mrf.mxu0
        %v3598 = vadd.f32 %v2925, %v3597
        %3599 = vmatprep.mubr.bf16.mxu0 %v3360
        %3600 = vmatmul.mubr.bf16.gmra.mxu0 %v3359
        %v3601 = vpop.f32.mrf.mxu0
        %v3602 = vadd.f32 %v2930, %v3601
        %v3603 = vpop.f32.mrf.mxu0
        %v3604 = vadd.f32 %v2930, %v3603
        %v3605 = vpop.f32.mrf.mxu0
        %v3606 = vadd.f32 %v2935, %v3605
        %v3607 = vpop.f32.mrf.mxu0
        %v3608 = vadd.f32 %v2935, %v3607
        %3609 = vmatprep.mubr.bf16.mxu0 %v3362
        %3610 = vmatmul.mubr.bf16.gmra.mxu0 %v3361
        %v3611 = vpop.f32.mrf.mxu0
        %v3612 = vadd.f32 %v2940, %v3611
        %v3613 = vpop.f32.mrf.mxu0
        %v3614 = vadd.f32 %v2940, %v3613
        %v3615 = vpop.f32.mrf.mxu0
        %v3616 = vadd.f32 %v2945, %v3615
        %v3617 = vpop.f32.mrf.mxu0
        %v3618 = vadd.f32 %v2945, %v3617
        %3619 = vmatprep.mubr.bf16.mxu0 %v3364
        %3620 = vmatmul.mubr.bf16.gmra.mxu0 %v3363
        %v3621 = vpop.f32.mrf.mxu0
        %v3622 = vadd.f32 %v2950, %v3621
        %v3623 = vpop.f32.mrf.mxu0
        %v3624 = vadd.f32 %v2950, %v3623
        %v3625 = vpop.f32.mrf.mxu0
        %v3626 = vadd.f32 %v2955, %v3625
        %v3627 = vpop.f32.mrf.mxu0
        %v3628 = vadd.f32 %v2955, %v3627
        %3629 = vmatprep.mubr.bf16.mxu0 %v3366
        %3630 = vmatmul.mubr.bf16.gmra.mxu0 %v3365
        %v3631 = vpop.f32.mrf.mxu0
        %v3632 = vadd.f32 %v2960, %v3631
        %v3633 = vpop.f32.mrf.mxu0
        %v3634 = vadd.f32 %v2960, %v3633
        %v3635 = vpop.f32.mrf.mxu0
        %v3636 = vadd.f32 %v2965, %v3635
        %v3637 = vpop.f32.mrf.mxu0
        %v3638 = vadd.f32 %v2965, %v3637
        %3639 = vmatprep.mubr.bf16.mxu0 %v3368
        %3640 = vmatmul.mubr.bf16.gmra.mxu0 %v3367
        %v3641 = vpop.f32.mrf.mxu0
        %v3642 = vadd.f32 %v2970, %v3641
        %v3643 = vpop.f32.mrf.mxu0
        %v3644 = vadd.f32 %v2970, %v3643
        %v3645 = vpop.f32.mrf.mxu0
        %v3646 = vadd.f32 %v2975, %v3645
        %v3647 = vpop.f32.mrf.mxu0
        %v3648 = vadd.f32 %v2975, %v3647
        %3649 = vmatprep.mubr.bf16.mxu0 %v3370
        %3650 = vmatmul.mubr.bf16.gmra.mxu0 %v3369
        %v3651 = vpop.f32.mrf.mxu0
        %v3652 = vadd.f32 %v2980, %v3651
        %v3653 = vpop.f32.mrf.mxu0
        %v3654 = vadd.f32 %v2980, %v3653
        %v3655 = vpop.f32.mrf.mxu0
        %v3656 = vadd.f32 %v2985, %v3655
        %v3657 = vpop.f32.mrf.mxu0
        %v3658 = vadd.f32 %v2985, %v3657
        %3659 = vmatprep.mubr.bf16.mxu0 %v3372
        %3660 = vmatmul.mubr.bf16.gmra.mxu0 %v3371
        %v3661 = vpop.f32.mrf.mxu0
        %v3662 = vadd.f32 %v2990, %v3661
        %v3663 = vpop.f32.mrf.mxu0
        %v3664 = vadd.f32 %v2990, %v3663
        %v3665 = vpop.f32.mrf.mxu0
        %v3666 = vadd.f32 %v2995, %v3665
        %v3667 = vpop.f32.mrf.mxu0
        %v3668 = vadd.f32 %v2995, %v3667
        %3669 = vmatprep.mubr.bf16.mxu0 %v3374
        %3670 = vmatmul.mubr.bf16.gmra.mxu0 %v3373
        %v3671 = vpop.f32.mrf.mxu0
        %v3672 = vadd.f32 %v3000, %v3671
        %v3673 = vpop.f32.mrf.mxu0
        %v3674 = vadd.f32 %v3000, %v3673
        %v3675 = vpop.f32.mrf.mxu0
        %v3676 = vadd.f32 %v3005, %v3675
        %v3677 = vpop.f32.mrf.mxu0
        %v3678 = vadd.f32 %v3005, %v3677
        %3679 = vmatprep.mubr.bf16.mxu0 %v3376
        %3680 = vmatmul.mubr.bf16.gmra.mxu0 %v3375
        %v3681 = vpop.f32.mrf.mxu0
        %v3682 = vadd.f32 %v3010, %v3681
        %v3683 = vpop.f32.mrf.mxu0
        %v3684 = vadd.f32 %v3010, %v3683
        %v3685 = vpop.f32.mrf.mxu0
        %v3686 = vadd.f32 %v3015, %v3685
        %v3687 = vpop.f32.mrf.mxu0
        %v3688 = vadd.f32 %v3015, %v3687
        %3689 = vmatprep.mubr.bf16.mxu0 %v3378
        %3690 = vmatmul.mubr.bf16.gmra.mxu0 %v3377
        %v3691 = vpop.f32.mrf.mxu0
        %v3692 = vadd.f32 %v3020, %v3691
        %v3693 = vpop.f32.mrf.mxu0
        %v3694 = vadd.f32 %v3020, %v3693
        %v3695 = vpop.f32.mrf.mxu0
        %v3696 = vadd.f32 %v3025, %v3695
        %v3697 = vpop.f32.mrf.mxu0
        %v3698 = vadd.f32 %v3025, %v3697
        %3699 = vmatprep.mubr.bf16.mxu0 %v3380
        %3700 = vmatmul.mubr.bf16.gmra.mxu0 %v3379
        %v3701 = vpop.f32.mrf.mxu0
        %v3702 = vadd.f32 %v3030, %v3701
        %v3703 = vpop.f32.mrf.mxu0
        %v3704 = vadd.f32 %v3030, %v3703
        %v3705 = vpop.f32.mrf.mxu0
        %v3706 = vadd.f32 %v3035, %v3705
        %v3707 = vpop.f32.mrf.mxu0
        %v3708 = vadd.f32 %v3035, %v3707
        %3709 = vmatprep.mubr.bf16.mxu0 %v3382
        %3710 = vmatmul.mubr.bf16.gmra.mxu0 %v3381
        %v3711 = vpop.f32.mrf.mxu0
        %v3712 = vadd.f32 %v3040, %v3711
        %v3713 = vpop.f32.mrf.mxu0
        %v3714 = vadd.f32 %v3040, %v3713
        %v3715 = vpop.f32.mrf.mxu0
        %v3716 = vadd.f32 %v3045, %v3715
        %v3717 = vpop.f32.mrf.mxu0
        %v3718 = vadd.f32 %v3045, %v3717
        %3719 = vmatprep.mubr.bf16.mxu0 %v3384
        %3720 = vmatmul.mubr.bf16.gmra.mxu0 %v3383
        %v3721 = vpop.f32.mrf.mxu0
        %v3722 = vadd.f32 %v3050, %v3721
        %v3723 = vpop.f32.mrf.mxu0
        %v3724 = vadd.f32 %v3050, %v3723
        %v3725 = vpop.f32.mrf.mxu0
        %v3726 = vadd.f32 %v3055, %v3725
        %v3727 = vpop.f32.mrf.mxu0
        %v3728 = vadd.f32 %v3055, %v3727
        %3729 = vmatprep.mubr.bf16.mxu0 %v3386
        %3730 = vmatmul.mubr.bf16.gmra.mxu0 %v3385
        %v3731 = vpop.f32.mrf.mxu0
        %v3732 = vadd.f32 %v3060, %v3731
        %v3733 = vpop.f32.mrf.mxu0
        %v3734 = vadd.f32 %v3060, %v3733
        %v3735 = vpop.f32.mrf.mxu0
        %v3736 = vadd.f32 %v3065, %v3735
        %v3737 = vpop.f32.mrf.mxu0
        %v3738 = vadd.f32 %v3065, %v3737
        %3739 = vmatprep.mubr.bf16.mxu0 %v3388
        %3740 = vmatmul.mubr.bf16.gmra.mxu0 %v3387
        %v3741 = vpop.f32.mrf.mxu0
        %v3742 = vadd.f32 %v3070, %v3741
        %v3743 = vpop.f32.mrf.mxu0
        %v3744 = vadd.f32 %v3070, %v3743
        %v3745 = vpop.f32.mrf.mxu0
        %v3746 = vadd.f32 %v3075, %v3745
        %v3747 = vpop.f32.mrf.mxu0
        %v3748 = vadd.f32 %v3075, %v3747
        %3749 = vmatprep.mubr.bf16.mxu0 %v3390
        %3750 = vmatmul.mubr.bf16.gmra.mxu0 %v3389
        %v3751 = vpop.f32.mrf.mxu0
        %v3752 = vadd.f32 %v3080, %v3751
        %v3753 = vpop.f32.mrf.mxu0
        %v3754 = vadd.f32 %v3080, %v3753
        %v3755 = vpop.f32.mrf.mxu0
        %v3756 = vadd.f32 %v3085, %v3755
        %v3757 = vpop.f32.mrf.mxu0
        %v3758 = vadd.f32 %v3085, %v3757
        %3759 = vmatprep.mubr.bf16.mxu0 %v3392
        %3760 = vmatmul.mubr.bf16.gmra.mxu0 %v3391
        %v3761 = vpop.f32.mrf.mxu0
        %v3762 = vadd.f32 %v3090, %v3761
        %v3763 = vpop.f32.mrf.mxu0
        %v3764 = vadd.f32 %v3090, %v3763
        %v3765 = vpop.f32.mrf.mxu0
        %v3766 = vadd.f32 %v3095, %v3765
        %v3767 = vpop.f32.mrf.mxu0
        %v3768 = vadd.f32 %v3095, %v3767
        %3769 = vmatprep.mubr.bf16.mxu0 %v3394
        %3770 = vmatmul.mubr.bf16.gmra.mxu0 %v3393
        %v3771 = vpop.f32.mrf.mxu0
        %v3772 = vadd.f32 %v3100, %v3771
        %v3773 = vpop.f32.mrf.mxu0
        %v3774 = vadd.f32 %v3100, %v3773
        %v3775 = vpop.f32.mrf.mxu0
        %v3776 = vadd.f32 %v3105, %v3775
        %v3777 = vpop.f32.mrf.mxu0
        %v3778 = vadd.f32 %v3105, %v3777
        %3779 = vmatprep.mubr.bf16.mxu0 %v3396
        %3780 = vmatmul.mubr.bf16.gmra.mxu0 %v3395
        %v3781 = vpop.f32.mrf.mxu0
        %v3782 = vadd.f32 %v3110, %v3781
        %v3783 = vpop.f32.mrf.mxu0
        %v3784 = vadd.f32 %v3110, %v3783
        %v3785 = vpop.f32.mrf.mxu0
        %v3786 = vadd.f32 %v3115, %v3785
        %v3787 = vpop.f32.mrf.mxu0
        %v3788 = vadd.f32 %v3115, %v3787
        %3789 = vmatprep.mubr.bf16.mxu0 %v3398
        %3790 = vmatmul.mubr.bf16.gmra.mxu0 %v3397
        %v3791 = vpop.f32.mrf.mxu0
        %v3792 = vadd.f32 %v3120, %v3791
        %v3793 = vpop.f32.mrf.mxu0
        %v3794 = vadd.f32 %v3120, %v3793
        %v3795 = vpop.f32.mrf.mxu0
        %v3796 = vadd.f32 %v3125, %v3795
        %v3797 = vpop.f32.mrf.mxu0
        %v3798 = vadd.f32 %v3125, %v3797
        %3799 = vmatprep.mubr.bf16.mxu0 %v3400
        %3800 = vmatmul.mubr.bf16.gmra.mxu0 %v3399
        %v3801 = vpop.f32.mrf.mxu0
        %v3802 = vadd.f32 %v3130, %v3801
        %v3803 = vpop.f32.mrf.mxu0
        %v3804 = vadd.f32 %v3130, %v3803
        %v3805 = vpop.f32.mrf.mxu0
        %v3806 = vadd.f32 %v3135, %v3805
        %v3807 = vpop.f32.mrf.mxu0
        %v3808 = vadd.f32 %v3135, %v3807
        %3809 = vmatprep.mubr.bf16.mxu0 %v3402
        %3810 = vmatmul.mubr.bf16.gmra.mxu0 %v3401
        %v3811 = vpop.f32.mrf.mxu0
        %v3812 = vadd.f32 %v3140, %v3811
        %v3813 = vpop.f32.mrf.mxu0
        %v3814 = vadd.f32 %v3140, %v3813
        %v3815 = vpop.f32.mrf.mxu0
        %v3816 = vadd.f32 %v3145, %v3815
        %v3817 = vpop.f32.mrf.mxu0
        %v3818 = vadd.f32 %v3145, %v3817
        %3819 = vdwg.mxu0
        %3820 = vmatprep.subr.bf16.mxu0 %v2730
        %3821 = vmatpush1.bf16.msra.mxu0 %v2729
        %3822 = vmatprep.subr.bf16.mxu0 %v2726
        %3823 = vmatpush1.bf16.msra.mxu0 %v2725
        %3824 = vmatprep.subr.bf16.mxu0 %v2722
        %3825 = vmatpush1.bf16.msra.mxu0 %v2721
        %3826 = vmatprep.subr.bf16.mxu0 %v2718
        %3827 = vmatpush1.bf16.msra.mxu0 %v2717
        %3828 = vmatprep.subr.bf16.mxu0 %v2714
        %3829 = vmatpush1.bf16.msra.mxu0 %v2713
        %3830 = vmatprep.subr.bf16.mxu0 %v2710
        %3831 = vmatpush1.bf16.msra.mxu0 %v2709
        %3832 = vmatprep.subr.bf16.mxu0 %v2706
        %3833 = vmatpush1.bf16.msra.mxu0 %v2705
        %3834 = vmatprep.subr.bf16.mxu0 %v2702
        %3835 = vmatpush1.bf16.msra.mxu0 %v2701
        %3836 = vmatprep.subr.bf16.mxu0 %v2762
        %3837 = vmatpush2.bf16.msra.mxu0 %v2761
        %3838 = vmatprep.subr.bf16.mxu0 %v2758
        %3839 = vmatpush2.bf16.msra.mxu0 %v2757
        %3840 = vmatprep.subr.bf16.mxu0 %v2754
        %3841 = vmatpush2.bf16.msra.mxu0 %v2753
        %3842 = vmatprep.subr.bf16.mxu0 %v2750
        %3843 = vmatpush2.bf16.msra.mxu0 %v2749
        %3844 = vmatprep.subr.bf16.mxu0 %v2746
        %3845 = vmatpush2.bf16.msra.mxu0 %v2745
        %3846 = vmatprep.subr.bf16.mxu0 %v2742
        %3847 = vmatpush2.bf16.msra.mxu0 %v2741
        %3848 = vmatprep.subr.bf16.mxu0 %v2738
        %3849 = vmatpush2.bf16.msra.mxu0 %v2737
        %3850 = vmatprep.subr.bf16.mxu0 %v2734
        %3851 = vmatpush2.bf16.msra.mxu0 %v2733
        %3852 = vmatprep.mubr.bf16.mxu0 %v3340
        %3853 = vmatmul.mubr.bf16.gmra.mxu0 %v3339
        %v3854 = vpop.f32.mrf.mxu0
        %v3855 = vadd.f32 %v2830, %v3854
        %v3856 = vpop.f32.mrf.mxu0
        %v3857 = vadd.f32 %v2830, %v3856
        %v3858 = vpop.f32.mrf.mxu0
        %v3859 = vadd.f32 %v2835, %v3858
        %v3860 = vpop.f32.mrf.mxu0
        %v3861 = vadd.f32 %v2835, %v3860
        %3862 = vmatprep.mubr.bf16.mxu0 %v3342
        %3863 = vmatmul.mubr.bf16.gmra.mxu0 %v3341
        %v3864 = vpop.f32.mrf.mxu0
        %v3865 = vadd.f32 %v2840, %v3864
        %v3866 = vpop.f32.mrf.mxu0
        %v3867 = vadd.f32 %v2840, %v3866
        %v3868 = vpop.f32.mrf.mxu0
        %v3869 = vadd.f32 %v2845, %v3868
        %v3870 = vpop.f32.mrf.mxu0
        %v3871 = vadd.f32 %v2845, %v3870
        %3872 = vmatprep.mubr.bf16.mxu0 %v3344
        %3873 = vmatmul.mubr.bf16.gmra.mxu0 %v3343
        %v3874 = vpop.f32.mrf.mxu0
        %v3875 = vadd.f32 %v2850, %v3874
        %v3876 = vpop.f32.mrf.mxu0
        %v3877 = vadd.f32 %v2850, %v3876
        %v3878 = vpop.f32.mrf.mxu0
        %v3879 = vadd.f32 %v2855, %v3878
        %v3880 = vpop.f32.mrf.mxu0
        %v3881 = vadd.f32 %v2855, %v3880
        %3882 = vmatprep.mubr.bf16.mxu0 %v3346
        %3883 = vmatmul.mubr.bf16.gmra.mxu0 %v3345
        %v3884 = vpop.f32.mrf.mxu0
        %v3885 = vadd.f32 %v2860, %v3884
        %v3886 = vpop.f32.mrf.mxu0
        %v3887 = vadd.f32 %v2860, %v3886
        %v3888 = vpop.f32.mrf.mxu0
        %v3889 = vadd.f32 %v2865, %v3888
        %v3890 = vpop.f32.mrf.mxu0
        %v3891 = vadd.f32 %v2865, %v3890
        %3892 = vmatprep.mubr.bf16.mxu0 %v3348
        %3893 = vmatmul.mubr.bf16.gmra.mxu0 %v3347
        %v3894 = vpop.f32.mrf.mxu0
        %v3895 = vadd.f32 %v2870, %v3894
        %v3896 = vpop.f32.mrf.mxu0
        %v3897 = vadd.f32 %v2870, %v3896
        %v3898 = vpop.f32.mrf.mxu0
        %v3899 = vadd.f32 %v2875, %v3898
        %v3900 = vpop.f32.mrf.mxu0
        %v3901 = vadd.f32 %v2875, %v3900
        %3902 = vmatprep.mubr.bf16.mxu0 %v3350
        %3903 = vmatmul.mubr.bf16.gmra.mxu0 %v3349
        %v3904 = vpop.f32.mrf.mxu0
        %v3905 = vadd.f32 %v2880, %v3904
        %v3906 = vpop.f32.mrf.mxu0
        %v3907 = vadd.f32 %v2880, %v3906
        %v3908 = vpop.f32.mrf.mxu0
        %v3909 = vadd.f32 %v2885, %v3908
        %v3910 = vpop.f32.mrf.mxu0
        %v3911 = vadd.f32 %v2885, %v3910
        %3912 = vmatprep.mubr.bf16.mxu0 %v3352
        %3913 = vmatmul.mubr.bf16.gmra.mxu0 %v3351
        %v3914 = vpop.f32.mrf.mxu0
        %v3915 = vadd.f32 %v2890, %v3914
        %v3916 = vpop.f32.mrf.mxu0
        %v3917 = vadd.f32 %v2890, %v3916
        %v3918 = vpop.f32.mrf.mxu0
        %v3919 = vadd.f32 %v2895, %v3918
        %v3920 = vpop.f32.mrf.mxu0
        %v3921 = vadd.f32 %v2895, %v3920
        %3922 = vmatprep.mubr.bf16.mxu0 %v3354
        %3923 = vmatmul.mubr.bf16.gmra.mxu0 %v3353
        %v3924 = vpop.f32.mrf.mxu0
        %v3925 = vadd.f32 %v2900, %v3924
        %v3926 = vpop.f32.mrf.mxu0
        %v3927 = vadd.f32 %v2900, %v3926
        %v3928 = vpop.f32.mrf.mxu0
        %v3929 = vadd.f32 %v2905, %v3928
        %v3930 = vpop.f32.mrf.mxu0
        %v3931 = vadd.f32 %v2905, %v3930
        %3932 = vmatprep.mubr.bf16.mxu0 %v3356
        %3933 = vmatmul.mubr.bf16.gmra.mxu0 %v3355
        %v3934 = vpop.f32.mrf.mxu0
        %v3935 = vadd.f32 %v2910, %v3934
        %v3936 = vpop.f32.mrf.mxu0
        %v3937 = vadd.f32 %v2910, %v3936
        %v3938 = vpop.f32.mrf.mxu0
        %v3939 = vadd.f32 %v2915, %v3938
        %v3940 = vpop.f32.mrf.mxu0
        %v3941 = vadd.f32 %v2915, %v3940
        %3942 = vmatprep.mubr.bf16.mxu0 %v3358
        %3943 = vmatmul.mubr.bf16.gmra.mxu0 %v3357
        %v3944 = vpop.f32.mrf.mxu0
        %v3945 = vadd.f32 %v2920, %v3944
        %v3946 = vpop.f32.mrf.mxu0
        %v3947 = vadd.f32 %v2920, %v3946
        %v3948 = vpop.f32.mrf.mxu0
        %v3949 = vadd.f32 %v2925, %v3948
        %v3950 = vpop.f32.mrf.mxu0
        %v3951 = vadd.f32 %v2925, %v3950
        %3952 = vmatprep.mubr.bf16.mxu0 %v3360
        %3953 = vmatmul.mubr.bf16.gmra.mxu0 %v3359
        %v3954 = vpop.f32.mrf.mxu0
        %v3955 = vadd.f32 %v2930, %v3954
        %v3956 = vpop.f32.mrf.mxu0
        %v3957 = vadd.f32 %v2930, %v3956
        %v3958 = vpop.f32.mrf.mxu0
        %v3959 = vadd.f32 %v2935, %v3958
        %v3960 = vpop.f32.mrf.mxu0
        %v3961 = vadd.f32 %v2935, %v3960
        %3962 = vmatprep.mubr.bf16.mxu0 %v3362
        %3963 = vmatmul.mubr.bf16.gmra.mxu0 %v3361
        %v3964 = vpop.f32.mrf.mxu0
        %v3965 = vadd.f32 %v2940, %v3964
        %v3966 = vpop.f32.mrf.mxu0
        %v3967 = vadd.f32 %v2940, %v3966
        %v3968 = vpop.f32.mrf.mxu0
        %v3969 = vadd.f32 %v2945, %v3968
        %v3970 = vpop.f32.mrf.mxu0
        %v3971 = vadd.f32 %v2945, %v3970
        %3972 = vmatprep.mubr.bf16.mxu0 %v3364
        %3973 = vmatmul.mubr.bf16.gmra.mxu0 %v3363
        %v3974 = vpop.f32.mrf.mxu0
        %v3975 = vadd.f32 %v2950, %v3974
        %v3976 = vpop.f32.mrf.mxu0
        %v3977 = vadd.f32 %v2950, %v3976
        %v3978 = vpop.f32.mrf.mxu0
        %v3979 = vadd.f32 %v2955, %v3978
        %v3980 = vpop.f32.mrf.mxu0
        %v3981 = vadd.f32 %v2955, %v3980
        %3982 = vmatprep.mubr.bf16.mxu0 %v3366
        %3983 = vmatmul.mubr.bf16.gmra.mxu0 %v3365
        %v3984 = vpop.f32.mrf.mxu0
        %v3985 = vadd.f32 %v2960, %v3984
        %v3986 = vpop.f32.mrf.mxu0
        %v3987 = vadd.f32 %v2960, %v3986
        %v3988 = vpop.f32.mrf.mxu0
        %v3989 = vadd.f32 %v2965, %v3988
        %v3990 = vpop.f32.mrf.mxu0
        %v3991 = vadd.f32 %v2965, %v3990
        %3992 = vmatprep.mubr.bf16.mxu0 %v3368
        %3993 = vmatmul.mubr.bf16.gmra.mxu0 %v3367
        %v3994 = vpop.f32.mrf.mxu0
        %v3995 = vadd.f32 %v2970, %v3994
        %v3996 = vpop.f32.mrf.mxu0
        %v3997 = vadd.f32 %v2970, %v3996
        %v3998 = vpop.f32.mrf.mxu0
        %v3999 = vadd.f32 %v2975, %v3998
        %v4000 = vpop.f32.mrf.mxu0
        %v4001 = vadd.f32 %v2975, %v4000
        %4002 = vmatprep.mubr.bf16.mxu0 %v3370
        %4003 = vmatmul.mubr.bf16.gmra.mxu0 %v3369
        %v4004 = vpop.f32.mrf.mxu0
        %v4005 = vadd.f32 %v2980, %v4004
        %v4006 = vpop.f32.mrf.mxu0
        %v4007 = vadd.f32 %v2980, %v4006
        %v4008 = vpop.f32.mrf.mxu0
        %v4009 = vadd.f32 %v2985, %v4008
        %v4010 = vpop.f32.mrf.mxu0
        %v4011 = vadd.f32 %v2985, %v4010
        %4012 = vmatprep.mubr.bf16.mxu0 %v3372
        %4013 = vmatmul.mubr.bf16.gmra.mxu0 %v3371
        %v4014 = vpop.f32.mrf.mxu0
        %v4015 = vadd.f32 %v2990, %v4014
        %v4016 = vpop.f32.mrf.mxu0
        %v4017 = vadd.f32 %v2990, %v4016
        %v4018 = vpop.f32.mrf.mxu0
        %v4019 = vadd.f32 %v2995, %v4018
        %v4020 = vpop.f32.mrf.mxu0
        %v4021 = vadd.f32 %v2995, %v4020
        %4022 = vmatprep.mubr.bf16.mxu0 %v3374
        %4023 = vmatmul.mubr.bf16.gmra.mxu0 %v3373
        %v4024 = vpop.f32.mrf.mxu0
        %v4025 = vadd.f32 %v3000, %v4024
        %v4026 = vpop.f32.mrf.mxu0
        %v4027 = vadd.f32 %v3000, %v4026
        %v4028 = vpop.f32.mrf.mxu0
        %v4029 = vadd.f32 %v3005, %v4028
        %v4030 = vpop.f32.mrf.mxu0
        %v4031 = vadd.f32 %v3005, %v4030
        %4032 = vmatprep.mubr.bf16.mxu0 %v3376
        %4033 = vmatmul.mubr.bf16.gmra.mxu0 %v3375
        %v4034 = vpop.f32.mrf.mxu0
        %v4035 = vadd.f32 %v3010, %v4034
        %v4036 = vpop.f32.mrf.mxu0
        %v4037 = vadd.f32 %v3010, %v4036
        %v4038 = vpop.f32.mrf.mxu0
        %v4039 = vadd.f32 %v3015, %v4038
        %v4040 = vpop.f32.mrf.mxu0
        %v4041 = vadd.f32 %v3015, %v4040
        %4042 = vmatprep.mubr.bf16.mxu0 %v3378
        %4043 = vmatmul.mubr.bf16.gmra.mxu0 %v3377
        %v4044 = vpop.f32.mrf.mxu0
        %v4045 = vadd.f32 %v3020, %v4044
        %v4046 = vpop.f32.mrf.mxu0
        %v4047 = vadd.f32 %v3020, %v4046
        %v4048 = vpop.f32.mrf.mxu0
        %v4049 = vadd.f32 %v3025, %v4048
        %v4050 = vpop.f32.mrf.mxu0
        %v4051 = vadd.f32 %v3025, %v4050
        %4052 = vmatprep.mubr.bf16.mxu0 %v3380
        %4053 = vmatmul.mubr.bf16.gmra.mxu0 %v3379
        %v4054 = vpop.f32.mrf.mxu0
        %v4055 = vadd.f32 %v3030, %v4054
        %v4056 = vpop.f32.mrf.mxu0
        %v4057 = vadd.f32 %v3030, %v4056
        %v4058 = vpop.f32.mrf.mxu0
        %v4059 = vadd.f32 %v3035, %v4058
        %v4060 = vpop.f32.mrf.mxu0
        %v4061 = vadd.f32 %v3035, %v4060
        %4062 = vmatprep.mubr.bf16.mxu0 %v3382
        %4063 = vmatmul.mubr.bf16.gmra.mxu0 %v3381
        %v4064 = vpop.f32.mrf.mxu0
        %v4065 = vadd.f32 %v3040, %v4064
        %v4066 = vpop.f32.mrf.mxu0
        %v4067 = vadd.f32 %v3040, %v4066
        %v4068 = vpop.f32.mrf.mxu0
        %v4069 = vadd.f32 %v3045, %v4068
        %v4070 = vpop.f32.mrf.mxu0
        %v4071 = vadd.f32 %v3045, %v4070
        %4072 = vmatprep.mubr.bf16.mxu0 %v3384
        %4073 = vmatmul.mubr.bf16.gmra.mxu0 %v3383
        %v4074 = vpop.f32.mrf.mxu0
        %v4075 = vadd.f32 %v3050, %v4074
        %v4076 = vpop.f32.mrf.mxu0
        %v4077 = vadd.f32 %v3050, %v4076
        %v4078 = vpop.f32.mrf.mxu0
        %v4079 = vadd.f32 %v3055, %v4078
        %v4080 = vpop.f32.mrf.mxu0
        %v4081 = vadd.f32 %v3055, %v4080
        %4082 = vmatprep.mubr.bf16.mxu0 %v3386
        %4083 = vmatmul.mubr.bf16.gmra.mxu0 %v3385
        %v4084 = vpop.f32.mrf.mxu0
        %v4085 = vadd.f32 %v3060, %v4084
        %v4086 = vpop.f32.mrf.mxu0
        %v4087 = vadd.f32 %v3060, %v4086
        %v4088 = vpop.f32.mrf.mxu0
        %v4089 = vadd.f32 %v3065, %v4088
        %v4090 = vpop.f32.mrf.mxu0
        %v4091 = vadd.f32 %v3065, %v4090
        %4092 = vmatprep.mubr.bf16.mxu0 %v3388
        %4093 = vmatmul.mubr.bf16.gmra.mxu0 %v3387
        %v4094 = vpop.f32.mrf.mxu0
        %v4095 = vadd.f32 %v3070, %v4094
        %v4096 = vpop.f32.mrf.mxu0
        %v4097 = vadd.f32 %v3070, %v4096
        %v4098 = vpop.f32.mrf.mxu0
        %v4099 = vadd.f32 %v3075, %v4098
        %v4100 = vpop.f32.mrf.mxu0
        %v4101 = vadd.f32 %v3075, %v4100
        %4102 = vmatprep.mubr.bf16.mxu0 %v3390
        %4103 = vmatmul.mubr.bf16.gmra.mxu0 %v3389
        %v4104 = vpop.f32.mrf.mxu0
        %v4105 = vadd.f32 %v3080, %v4104
        %v4106 = vpop.f32.mrf.mxu0
        %v4107 = vadd.f32 %v3080, %v4106
        %v4108 = vpop.f32.mrf.mxu0
        %v4109 = vadd.f32 %v3085, %v4108
        %v4110 = vpop.f32.mrf.mxu0
        %v4111 = vadd.f32 %v3085, %v4110
        %4112 = vmatprep.mubr.bf16.mxu0 %v3392
        %4113 = vmatmul.mubr.bf16.gmra.mxu0 %v3391
        %v4114 = vpop.f32.mrf.mxu0
        %v4115 = vadd.f32 %v3090, %v4114
        %v4116 = vpop.f32.mrf.mxu0
        %v4117 = vadd.f32 %v3090, %v4116
        %v4118 = vpop.f32.mrf.mxu0
        %v4119 = vadd.f32 %v3095, %v4118
        %v4120 = vpop.f32.mrf.mxu0
        %v4121 = vadd.f32 %v3095, %v4120
        %4122 = vmatprep.mubr.bf16.mxu0 %v3394
        %4123 = vmatmul.mubr.bf16.gmra.mxu0 %v3393
        %v4124 = vpop.f32.mrf.mxu0
        %v4125 = vadd.f32 %v3100, %v4124
        %v4126 = vpop.f32.mrf.mxu0
        %v4127 = vadd.f32 %v3100, %v4126
        %v4128 = vpop.f32.mrf.mxu0
        %v4129 = vadd.f32 %v3105, %v4128
        %v4130 = vpop.f32.mrf.mxu0
        %v4131 = vadd.f32 %v3105, %v4130
        %4132 = vmatprep.mubr.bf16.mxu0 %v3396
        %4133 = vmatmul.mubr.bf16.gmra.mxu0 %v3395
        %v4134 = vpop.f32.mrf.mxu0
        %v4135 = vadd.f32 %v3110, %v4134
        %v4136 = vpop.f32.mrf.mxu0
        %v4137 = vadd.f32 %v3110, %v4136
        %v4138 = vpop.f32.mrf.mxu0
        %v4139 = vadd.f32 %v3115, %v4138
        %v4140 = vpop.f32.mrf.mxu0
        %v4141 = vadd.f32 %v3115, %v4140
        %4142 = vmatprep.mubr.bf16.mxu0 %v3398
        %4143 = vmatmul.mubr.bf16.gmra.mxu0 %v3397
        %v4144 = vpop.f32.mrf.mxu0
        %v4145 = vadd.f32 %v3120, %v4144
        %v4146 = vpop.f32.mrf.mxu0
        %v4147 = vadd.f32 %v3120, %v4146
        %v4148 = vpop.f32.mrf.mxu0
        %v4149 = vadd.f32 %v3125, %v4148
        %v4150 = vpop.f32.mrf.mxu0
        %v4151 = vadd.f32 %v3125, %v4150
        %4152 = vmatprep.mubr.bf16.mxu0 %v3400
        %4153 = vmatmul.mubr.bf16.gmra.mxu0 %v3399
        %v4154 = vpop.f32.mrf.mxu0
        %v4155 = vadd.f32 %v3130, %v4154
        %v4156 = vpop.f32.mrf.mxu0
        %v4157 = vadd.f32 %v3130, %v4156
        %v4158 = vpop.f32.mrf.mxu0
        %v4159 = vadd.f32 %v3135, %v4158
        %v4160 = vpop.f32.mrf.mxu0
        %v4161 = vadd.f32 %v3135, %v4160
        %4162 = vmatprep.mubr.bf16.mxu0 %v3402
        %4163 = vmatmul.mubr.bf16.gmra.mxu0 %v3401
        %v4164 = vpop.f32.mrf.mxu0
        %v4165 = vadd.f32 %v3140, %v4164
        %v4166 = vpop.f32.mrf.mxu0
        %v4167 = vadd.f32 %v3140, %v4166
        %v4168 = vpop.f32.mrf.mxu0
        %v4169 = vadd.f32 %v3145, %v4168
        %v4170 = vpop.f32.mrf.mxu0
        %v4171 = vadd.f32 %v3145, %v4170
        %4172 = vdwg.mxu0
        %v4173 = vmax.f32 %v3502, 0.0
        %v4174 = vmax.f32 %v3504, 0.0
        %v4175 = vmax.f32 %v3855, 0.0
        %v4176 = vmax.f32 %v3857, 0.0
        %v4177 = vmax.f32 %v3506, 0.0
        %v4178 = vmax.f32 %v3508, 0.0
        %v4179 = vmax.f32 %v3859, 0.0
        %v4180 = vmax.f32 %v3861, 0.0
        %v4181 = vmax.f32 %v3512, 0.0
        %v4182 = vmax.f32 %v3514, 0.0
        %v4183 = vmax.f32 %v3865, 0.0
        %v4184 = vmax.f32 %v3867, 0.0
        %v4185 = vmax.f32 %v3516, 0.0
        %v4186 = vmax.f32 %v3518, 0.0
        %v4187 = vmax.f32 %v3869, 0.0
        %v4188 = vmax.f32 %v3871, 0.0
        %v4189 = vmax.f32 %v3522, 0.0
        %v4190 = vmax.f32 %v3524, 0.0
        %v4191 = vmax.f32 %v3875, 0.0
        %v4192 = vmax.f32 %v3877, 0.0
        %v4193 = vmax.f32 %v3526, 0.0
        %v4194 = vmax.f32 %v3528, 0.0
        %v4195 = vmax.f32 %v3879, 0.0
        %v4196 = vmax.f32 %v3881, 0.0
        %v4197 = vmax.f32 %v3532, 0.0
        %v4198 = vmax.f32 %v3534, 0.0
        %v4199 = vmax.f32 %v3885, 0.0
        %v4200 = vmax.f32 %v3887, 0.0
        %v4201 = vmax.f32 %v3536, 0.0
        %v4202 = vmax.f32 %v3538, 0.0
        %v4203 = vmax.f32 %v3889, 0.0
        %v4204 = vmax.f32 %v3891, 0.0
        %v4205 = vmax.f32 %v3542, 0.0
        %v4206 = vmax.f32 %v3544, 0.0
        %v4207 = vmax.f32 %v3895, 0.0
        %v4208 = vmax.f32 %v3897, 0.0
        %v4209 = vmax.f32 %v3546, 0.0
        %v4210 = vmax.f32 %v3548, 0.0
        %v4211 = vmax.f32 %v3899, 0.0
        %v4212 = vmax.f32 %v3901, 0.0
        %v4213 = vmax.f32 %v3552, 0.0
        %v4214 = vmax.f32 %v3554, 0.0
        %v4215 = vmax.f32 %v3905, 0.0
        %v4216 = vmax.f32 %v3907, 0.0
        %v4217 = vmax.f32 %v3556, 0.0
        %v4218 = vmax.f32 %v3558, 0.0
        %v4219 = vmax.f32 %v3909, 0.0
        %v4220 = vmax.f32 %v3911, 0.0
        %v4221 = vmax.f32 %v3562, 0.0
        %v4222 = vmax.f32 %v3564, 0.0
        %v4223 = vmax.f32 %v3915, 0.0
        %v4224 = vmax.f32 %v3917, 0.0
        %v4225 = vmax.f32 %v3566, 0.0
        %v4226 = vmax.f32 %v3568, 0.0
        %v4227 = vmax.f32 %v3919, 0.0
        %v4228 = vmax.f32 %v3921, 0.0
        %v4229 = vmax.f32 %v3572, 0.0
        %v4230 = vmax.f32 %v3574, 0.0
        %v4231 = vmax.f32 %v3925, 0.0
        %v4232 = vmax.f32 %v3927, 0.0
        %v4233 = vmax.f32 %v3576, 0.0
        %v4234 = vmax.f32 %v3578, 0.0
        %v4235 = vmax.f32 %v3929, 0.0
        %v4236 = vmax.f32 %v3931, 0.0
        %v4237 = vmax.f32 %v3582, 0.0
        %v4238 = vmax.f32 %v3584, 0.0
        %v4239 = vmax.f32 %v3935, 0.0
        %v4240 = vmax.f32 %v3937, 0.0
        %v4241 = vmax.f32 %v3586, 0.0
        %v4242 = vmax.f32 %v3588, 0.0
        %v4243 = vmax.f32 %v3939, 0.0
        %v4244 = vmax.f32 %v3941, 0.0
        %v4245 = vmax.f32 %v3592, 0.0
        %v4246 = vmax.f32 %v3594, 0.0
        %v4247 = vmax.f32 %v3945, 0.0
        %v4248 = vmax.f32 %v3947, 0.0
        %v4249 = vmax.f32 %v3596, 0.0
        %v4250 = vmax.f32 %v3598, 0.0
        %v4251 = vmax.f32 %v3949, 0.0
        %v4252 = vmax.f32 %v3951, 0.0
        %v4253 = vmax.f32 %v3602, 0.0
        %v4254 = vmax.f32 %v3604, 0.0
        %v4255 = vmax.f32 %v3955, 0.0
        %v4256 = vmax.f32 %v3957, 0.0
        %v4257 = vmax.f32 %v3606, 0.0
        %v4258 = vmax.f32 %v3608, 0.0
        %v4259 = vmax.f32 %v3959, 0.0
        %v4260 = vmax.f32 %v3961, 0.0
        %v4261 = vmax.f32 %v3612, 0.0
        %v4262 = vmax.f32 %v3614, 0.0
        %v4263 = vmax.f32 %v3965, 0.0
        %v4264 = vmax.f32 %v3967, 0.0
        %v4265 = vmax.f32 %v3616, 0.0
        %v4266 = vmax.f32 %v3618, 0.0
        %v4267 = vmax.f32 %v3969, 0.0
        %v4268 = vmax.f32 %v3971, 0.0
        %v4269 = vmax.f32 %v3622, 0.0
        %v4270 = vmax.f32 %v3624, 0.0
        %v4271 = vmax.f32 %v3975, 0.0
        %v4272 = vmax.f32 %v3977, 0.0
        %v4273 = vmax.f32 %v3626, 0.0
        %v4274 = vmax.f32 %v3628, 0.0
        %v4275 = vmax.f32 %v3979, 0.0
        %v4276 = vmax.f32 %v3981, 0.0
        %v4277 = vmax.f32 %v3632, 0.0
        %v4278 = vmax.f32 %v3634, 0.0
        %v4279 = vmax.f32 %v3985, 0.0
        %v4280 = vmax.f32 %v3987, 0.0
        %v4281 = vmax.f32 %v3636, 0.0
        %v4282 = vmax.f32 %v3638, 0.0
        %v4283 = vmax.f32 %v3989, 0.0
        %v4284 = vmax.f32 %v3991, 0.0
        %v4285 = vmax.f32 %v3642, 0.0
        %v4286 = vmax.f32 %v3644, 0.0
        %v4287 = vmax.f32 %v3995, 0.0
        %v4288 = vmax.f32 %v3997, 0.0
        %v4289 = vmax.f32 %v3646, 0.0
        %v4290 = vmax.f32 %v3648, 0.0
        %v4291 = vmax.f32 %v3999, 0.0
        %v4292 = vmax.f32 %v4001, 0.0
        %v4293 = vmax.f32 %v3652, 0.0
        %v4294 = vmax.f32 %v3654, 0.0
        %v4295 = vmax.f32 %v4005, 0.0
        %v4296 = vmax.f32 %v4007, 0.0
        %v4297 = vmax.f32 %v3656, 0.0
        %v4298 = vmax.f32 %v3658, 0.0
        %v4299 = vmax.f32 %v4009, 0.0
        %v4300 = vmax.f32 %v4011, 0.0
        %v4301 = vmax.f32 %v3662, 0.0
        %v4302 = vmax.f32 %v3664, 0.0
        %v4303 = vmax.f32 %v4015, 0.0
        %v4304 = vmax.f32 %v4017, 0.0
        %v4305 = vmax.f32 %v3666, 0.0
        %v4306 = vmax.f32 %v3668, 0.0
        %v4307 = vmax.f32 %v4019, 0.0
        %v4308 = vmax.f32 %v4021, 0.0
        %v4309 = vmax.f32 %v3672, 0.0
        %v4310 = vmax.f32 %v3674, 0.0
        %v4311 = vmax.f32 %v4025, 0.0
        %v4312 = vmax.f32 %v4027, 0.0
        %v4313 = vmax.f32 %v3676, 0.0
        %v4314 = vmax.f32 %v3678, 0.0
        %v4315 = vmax.f32 %v4029, 0.0
        %v4316 = vmax.f32 %v4031, 0.0
        %v4317 = vmax.f32 %v3682, 0.0
        %v4318 = vmax.f32 %v3684, 0.0
        %v4319 = vmax.f32 %v4035, 0.0
        %v4320 = vmax.f32 %v4037, 0.0
        %v4321 = vmax.f32 %v3686, 0.0
        %v4322 = vmax.f32 %v3688, 0.0
        %v4323 = vmax.f32 %v4039, 0.0
        %v4324 = vmax.f32 %v4041, 0.0
        %v4325 = vmax.f32 %v3692, 0.0
        %v4326 = vmax.f32 %v3694, 0.0
        %v4327 = vmax.f32 %v4045, 0.0
        %v4328 = vmax.f32 %v4047, 0.0
        %v4329 = vmax.f32 %v3696, 0.0
        %v4330 = vmax.f32 %v3698, 0.0
        %v4331 = vmax.f32 %v4049, 0.0
        %v4332 = vmax.f32 %v4051, 0.0
        %v4333 = vmax.f32 %v3702, 0.0
        %v4334 = vmax.f32 %v3704, 0.0
        %v4335 = vmax.f32 %v4055, 0.0
        %v4336 = vmax.f32 %v4057, 0.0
        %v4337 = vmax.f32 %v3706, 0.0
        %v4338 = vmax.f32 %v3708, 0.0
        %v4339 = vmax.f32 %v4059, 0.0
        %v4340 = vmax.f32 %v4061, 0.0
        %v4341 = vmax.f32 %v3712, 0.0
        %v4342 = vmax.f32 %v3714, 0.0
        %v4343 = vmax.f32 %v4065, 0.0
        %v4344 = vmax.f32 %v4067, 0.0
        %v4345 = vmax.f32 %v3716, 0.0
        %v4346 = vmax.f32 %v3718, 0.0
        %v4347 = vmax.f32 %v4069, 0.0
        %v4348 = vmax.f32 %v4071, 0.0
        %v4349 = vmax.f32 %v3722, 0.0
        %v4350 = vmax.f32 %v3724, 0.0
        %v4351 = vmax.f32 %v4075, 0.0
        %v4352 = vmax.f32 %v4077, 0.0
        %v4353 = vmax.f32 %v3726, 0.0
        %v4354 = vmax.f32 %v3728, 0.0
        %v4355 = vmax.f32 %v4079, 0.0
        %v4356 = vmax.f32 %v4081, 0.0
        %v4357 = vmax.f32 %v3732, 0.0
        %v4358 = vmax.f32 %v3734, 0.0
        %v4359 = vmax.f32 %v4085, 0.0
        %v4360 = vmax.f32 %v4087, 0.0
        %v4361 = vmax.f32 %v3736, 0.0
        %v4362 = vmax.f32 %v3738, 0.0
        %v4363 = vmax.f32 %v4089, 0.0
        %v4364 = vmax.f32 %v4091, 0.0
        %v4365 = vmax.f32 %v3742, 0.0
        %v4366 = vmax.f32 %v3744, 0.0
        %v4367 = vmax.f32 %v4095, 0.0
        %v4368 = vmax.f32 %v4097, 0.0
        %v4369 = vmax.f32 %v3746, 0.0
        %v4370 = vmax.f32 %v3748, 0.0
        %v4371 = vmax.f32 %v4099, 0.0
        %v4372 = vmax.f32 %v4101, 0.0
        %v4373 = vmax.f32 %v3752, 0.0
        %v4374 = vmax.f32 %v3754, 0.0
        %v4375 = vmax.f32 %v4105, 0.0
        %v4376 = vmax.f32 %v4107, 0.0
        %v4377 = vmax.f32 %v3756, 0.0
        %v4378 = vmax.f32 %v3758, 0.0
        %v4379 = vmax.f32 %v4109, 0.0
        %v4380 = vmax.f32 %v4111, 0.0
        %v4381 = vmax.f32 %v3762, 0.0
        %v4382 = vmax.f32 %v3764, 0.0
        %v4383 = vmax.f32 %v4115, 0.0
        %v4384 = vmax.f32 %v4117, 0.0
        %v4385 = vmax.f32 %v3766, 0.0
        %v4386 = vmax.f32 %v3768, 0.0
        %v4387 = vmax.f32 %v4119, 0.0
        %v4388 = vmax.f32 %v4121, 0.0
        %v4389 = vmax.f32 %v3772, 0.0
        %v4390 = vmax.f32 %v3774, 0.0
        %v4391 = vmax.f32 %v4125, 0.0
        %v4392 = vmax.f32 %v4127, 0.0
        %v4393 = vmax.f32 %v3776, 0.0
        %v4394 = vmax.f32 %v3778, 0.0
        %v4395 = vmax.f32 %v4129, 0.0
        %v4396 = vmax.f32 %v4131, 0.0
        %v4397 = vmax.f32 %v3782, 0.0
        %v4398 = vmax.f32 %v3784, 0.0
        %v4399 = vmax.f32 %v4135, 0.0
        %v4400 = vmax.f32 %v4137, 0.0
        %v4401 = vmax.f32 %v3786, 0.0
        %v4402 = vmax.f32 %v3788, 0.0
        %v4403 = vmax.f32 %v4139, 0.0
        %v4404 = vmax.f32 %v4141, 0.0
        %v4405 = vmax.f32 %v3792, 0.0
        %v4406 = vmax.f32 %v3794, 0.0
        %v4407 = vmax.f32 %v4145, 0.0
        %v4408 = vmax.f32 %v4147, 0.0
        %v4409 = vmax.f32 %v3796, 0.0
        %v4410 = vmax.f32 %v3798, 0.0
        %v4411 = vmax.f32 %v4149, 0.0
        %v4412 = vmax.f32 %v4151, 0.0
        %v4413 = vmax.f32 %v3802, 0.0
        %v4414 = vmax.f32 %v3804, 0.0
        %v4415 = vmax.f32 %v4155, 0.0
        %v4416 = vmax.f32 %v4157, 0.0
        %v4417 = vmax.f32 %v3806, 0.0
        %v4418 = vmax.f32 %v3808, 0.0
        %v4419 = vmax.f32 %v4159, 0.0
        %v4420 = vmax.f32 %v4161, 0.0
        %v4421 = vmax.f32 %v3812, 0.0
        %v4422 = vmax.f32 %v3814, 0.0
        %v4423 = vmax.f32 %v4165, 0.0
        %v4424 = vmax.f32 %v4167, 0.0
        %v4425 = vmax.f32 %v3816, 0.0
        %v4426 = vmax.f32 %v3818, 0.0
        %v4427 = vmax.f32 %v4169, 0.0
        %v4428 = vmax.f32 %v4171, 0.0
        %4429 = vst [vmem:[%s394] sm:$0xff] %v4173
        %4430 = vst [vmem:[%s394 + $0x8] sm:$0xff] %v4174
        %4431 = vst [vmem:[%s394 + $0x10] sm:$0xff] %v4175
        %4432 = vst [vmem:[%s394 + $0x18] sm:$0xff] %v4176
        %4433 = vst [vmem:[%s394 + $0x20] sm:$0xff] %v4177
        %4434 = vst [vmem:[%s394 + $0x28] sm:$0xff] %v4178
        %4435 = vst [vmem:[%s394 + $0x30] sm:$0xff] %v4179
        %4436 = vst [vmem:[%s394 + $0x38] sm:$0xff] %v4180
        %4437 = vst [vmem:[%s394 + $0x40] sm:$0xff] %v4181
        %4438 = vst [vmem:[%s394 + $0x48] sm:$0xff] %v4182
        %4439 = vst [vmem:[%s394 + $0x50] sm:$0xff] %v4183
        %4440 = vst [vmem:[%s394 + $0x58] sm:$0xff] %v4184
        %4441 = vst [vmem:[%s394 + $0x60] sm:$0xff] %v4185
        %4442 = vst [vmem:[%s394 + $0x68] sm:$0xff] %v4186
        %4443 = vst [vmem:[%s394 + $0x70] sm:$0xff] %v4187
        %4444 = vst [vmem:[%s394 + $0x78] sm:$0xff] %v4188
        %4445 = vst [vmem:[%s394 + $0x80] sm:$0xff] %v4189
        %4446 = vst [vmem:[%s394 + $0x88] sm:$0xff] %v4190
        %4447 = vst [vmem:[%s394 + $0x90] sm:$0xff] %v4191
        %4448 = vst [vmem:[%s394 + $0x98] sm:$0xff] %v4192
        %4449 = vst [vmem:[%s394 + $0xa0] sm:$0xff] %v4193
        %4450 = vst [vmem:[%s394 + $0xa8] sm:$0xff] %v4194
        %4451 = vst [vmem:[%s394 + $0xb0] sm:$0xff] %v4195
        %4452 = vst [vmem:[%s394 + $0xb8] sm:$0xff] %v4196
        %4453 = vst [vmem:[%s394 + $0xc0] sm:$0xff] %v4197
        %4454 = vst [vmem:[%s394 + $0xc8] sm:$0xff] %v4198
        %4455 = vst [vmem:[%s394 + $0xd0] sm:$0xff] %v4199
        %4456 = vst [vmem:[%s394 + $0xd8] sm:$0xff] %v4200
        %4457 = vst [vmem:[%s394 + $0xe0] sm:$0xff] %v4201
        %4458 = vst [vmem:[%s394 + $0xe8] sm:$0xff] %v4202
        %4459 = vst [vmem:[%s394 + $0xf0] sm:$0xff] %v4203
        %4460 = vst [vmem:[%s394 + $0xf8] sm:$0xff] %v4204
        %4461 = vst [vmem:[%s394 + $0x100] sm:$0xff] %v4205
        %4462 = vst [vmem:[%s394 + $0x108] sm:$0xff] %v4206
        %4463 = vst [vmem:[%s394 + $0x110] sm:$0xff] %v4207
        %4464 = vst [vmem:[%s394 + $0x118] sm:$0xff] %v4208
        %4465 = vst [vmem:[%s394 + $0x120] sm:$0xff] %v4209
        %4466 = vst [vmem:[%s394 + $0x128] sm:$0xff] %v4210
        %4467 = vst [vmem:[%s394 + $0x130] sm:$0xff] %v4211
        %4468 = vst [vmem:[%s394 + $0x138] sm:$0xff] %v4212
        %4469 = vst [vmem:[%s394 + $0x140] sm:$0xff] %v4213
        %4470 = vst [vmem:[%s394 + $0x148] sm:$0xff] %v4214
        %4471 = vst [vmem:[%s394 + $0x150] sm:$0xff] %v4215
        %4472 = vst [vmem:[%s394 + $0x158] sm:$0xff] %v4216
        %4473 = vst [vmem:[%s394 + $0x160] sm:$0xff] %v4217
        %4474 = vst [vmem:[%s394 + $0x168] sm:$0xff] %v4218
        %4475 = vst [vmem:[%s394 + $0x170] sm:$0xff] %v4219
        %4476 = vst [vmem:[%s394 + $0x178] sm:$0xff] %v4220
        %4477 = vst [vmem:[%s394 + $0x180] sm:$0xff] %v4221
        %4478 = vst [vmem:[%s394 + $0x188] sm:$0xff] %v4222
        %4479 = vst [vmem:[%s394 + $0x190] sm:$0xff] %v4223
        %4480 = vst [vmem:[%s394 + $0x198] sm:$0xff] %v4224
        %4481 = vst [vmem:[%s394 + $0x1a0] sm:$0xff] %v4225
        %4482 = vst [vmem:[%s394 + $0x1a8] sm:$0xff] %v4226
        %4483 = vst [vmem:[%s394 + $0x1b0] sm:$0xff] %v4227
        %4484 = vst [vmem:[%s394 + $0x1b8] sm:$0xff] %v4228
        %4485 = vst [vmem:[%s394 + $0x1c0] sm:$0xff] %v4229
        %4486 = vst [vmem:[%s394 + $0x1c8] sm:$0xff] %v4230
        %4487 = vst [vmem:[%s394 + $0x1d0] sm:$0xff] %v4231
        %4488 = vst [vmem:[%s394 + $0x1d8] sm:$0xff] %v4232
        %4489 = vst [vmem:[%s394 + $0x1e0] sm:$0xff] %v4233
        %4490 = vst [vmem:[%s394 + $0x1e8] sm:$0xff] %v4234
        %4491 = vst [vmem:[%s394 + $0x1f0] sm:$0xff] %v4235
        %4492 = vst [vmem:[%s394 + $0x1f8] sm:$0xff] %v4236
        %4493 = vst [vmem:[%s394 + $0x200] sm:$0xff] %v4237
        %4494 = vst [vmem:[%s394 + $0x208] sm:$0xff] %v4238
        %4495 = vst [vmem:[%s394 + $0x210] sm:$0xff] %v4239
        %4496 = vst [vmem:[%s394 + $0x218] sm:$0xff] %v4240
        %4497 = vst [vmem:[%s394 + $0x220] sm:$0xff] %v4241
        %4498 = vst [vmem:[%s394 + $0x228] sm:$0xff] %v4242
        %4499 = vst [vmem:[%s394 + $0x230] sm:$0xff] %v4243
        %4500 = vst [vmem:[%s394 + $0x238] sm:$0xff] %v4244
        %4501 = vst [vmem:[%s394 + $0x240] sm:$0xff] %v4245
        %4502 = vst [vmem:[%s394 + $0x248] sm:$0xff] %v4246
        %4503 = vst [vmem:[%s394 + $0x250] sm:$0xff] %v4247
        %4504 = vst [vmem:[%s394 + $0x258] sm:$0xff] %v4248
        %4505 = vst [vmem:[%s394 + $0x260] sm:$0xff] %v4249
        %4506 = vst [vmem:[%s394 + $0x268] sm:$0xff] %v4250
        %4507 = vst [vmem:[%s394 + $0x270] sm:$0xff] %v4251
        %4508 = vst [vmem:[%s394 + $0x278] sm:$0xff] %v4252
        %4509 = vst [vmem:[%s394 + $0x280] sm:$0xff] %v4253
        %4510 = vst [vmem:[%s394 + $0x288] sm:$0xff] %v4254
        %4511 = vst [vmem:[%s394 + $0x290] sm:$0xff] %v4255
        %4512 = vst [vmem:[%s394 + $0x298] sm:$0xff] %v4256
        %4513 = vst [vmem:[%s394 + $0x2a0] sm:$0xff] %v4257
        %4514 = vst [vmem:[%s394 + $0x2a8] sm:$0xff] %v4258
        %4515 = vst [vmem:[%s394 + $0x2b0] sm:$0xff] %v4259
        %4516 = vst [vmem:[%s394 + $0x2b8] sm:$0xff] %v4260
        %4517 = vst [vmem:[%s394 + $0x2c0] sm:$0xff] %v4261
        %4518 = vst [vmem:[%s394 + $0x2c8] sm:$0xff] %v4262
        %4519 = vst [vmem:[%s394 + $0x2d0] sm:$0xff] %v4263
        %4520 = vst [vmem:[%s394 + $0x2d8] sm:$0xff] %v4264
        %4521 = vst [vmem:[%s394 + $0x2e0] sm:$0xff] %v4265
        %4522 = vst [vmem:[%s394 + $0x2e8] sm:$0xff] %v4266
        %4523 = vst [vmem:[%s394 + $0x2f0] sm:$0xff] %v4267
        %4524 = vst [vmem:[%s394 + $0x2f8] sm:$0xff] %v4268
        %4525 = vst [vmem:[%s394 + $0x300] sm:$0xff] %v4269
        %4526 = vst [vmem:[%s394 + $0x308] sm:$0xff] %v4270
        %4527 = vst [vmem:[%s394 + $0x310] sm:$0xff] %v4271
        %4528 = vst [vmem:[%s394 + $0x318] sm:$0xff] %v4272
        %4529 = vst [vmem:[%s394 + $0x320] sm:$0xff] %v4273
        %4530 = vst [vmem:[%s394 + $0x328] sm:$0xff] %v4274
        %4531 = vst [vmem:[%s394 + $0x330] sm:$0xff] %v4275
        %4532 = vst [vmem:[%s394 + $0x338] sm:$0xff] %v4276
        %4533 = vst [vmem:[%s394 + $0x340] sm:$0xff] %v4277
        %4534 = vst [vmem:[%s394 + $0x348] sm:$0xff] %v4278
        %4535 = vst [vmem:[%s394 + $0x350] sm:$0xff] %v4279
        %4536 = vst [vmem:[%s394 + $0x358] sm:$0xff] %v4280
        %4537 = vst [vmem:[%s394 + $0x360] sm:$0xff] %v4281
        %4538 = vst [vmem:[%s394 + $0x368] sm:$0xff] %v4282
        %4539 = vst [vmem:[%s394 + $0x370] sm:$0xff] %v4283
        %4540 = vst [vmem:[%s394 + $0x378] sm:$0xff] %v4284
        %4541 = vst [vmem:[%s394 + $0x380] sm:$0xff] %v4285
        %4542 = vst [vmem:[%s394 + $0x388] sm:$0xff] %v4286
        %4543 = vst [vmem:[%s394 + $0x390] sm:$0xff] %v4287
        %4544 = vst [vmem:[%s394 + $0x398] sm:$0xff] %v4288
        %4545 = vst [vmem:[%s394 + $0x3a0] sm:$0xff] %v4289
        %4546 = vst [vmem:[%s394 + $0x3a8] sm:$0xff] %v4290
        %4547 = vst [vmem:[%s394 + $0x3b0] sm:$0xff] %v4291
        %4548 = vst [vmem:[%s394 + $0x3b8] sm:$0xff] %v4292
        %4549 = vst [vmem:[%s394 + $0x3c0] sm:$0xff] %v4293
        %4550 = vst [vmem:[%s394 + $0x3c8] sm:$0xff] %v4294
        %4551 = vst [vmem:[%s394 + $0x3d0] sm:$0xff] %v4295
        %4552 = vst [vmem:[%s394 + $0x3d8] sm:$0xff] %v4296
        %4553 = vst [vmem:[%s394 + $0x3e0] sm:$0xff] %v4297
        %4554 = vst [vmem:[%s394 + $0x3e8] sm:$0xff] %v4298
        %4555 = vst [vmem:[%s394 + $0x3f0] sm:$0xff] %v4299
        %4556 = vst [vmem:[%s394 + $0x3f8] sm:$0xff] %v4300
        %4557 = vst [vmem:[%s394 + $0x400] sm:$0xff] %v4301
        %4558 = vst [vmem:[%s394 + $0x408] sm:$0xff] %v4302
        %4559 = vst [vmem:[%s394 + $0x410] sm:$0xff] %v4303
        %4560 = vst [vmem:[%s394 + $0x418] sm:$0xff] %v4304
        %4561 = vst [vmem:[%s394 + $0x420] sm:$0xff] %v4305
        %4562 = vst [vmem:[%s394 + $0x428] sm:$0xff] %v4306
        %4563 = vst [vmem:[%s394 + $0x430] sm:$0xff] %v4307
        %4564 = vst [vmem:[%s394 + $0x438] sm:$0xff] %v4308
        %4565 = vst [vmem:[%s394 + $0x440] sm:$0xff] %v4309
        %4566 = vst [vmem:[%s394 + $0x448] sm:$0xff] %v4310
        %4567 = vst [vmem:[%s394 + $0x450] sm:$0xff] %v4311
        %4568 = vst [vmem:[%s394 + $0x458] sm:$0xff] %v4312
        %4569 = vst [vmem:[%s394 + $0x460] sm:$0xff] %v4313
        %4570 = vst [vmem:[%s394 + $0x468] sm:$0xff] %v4314
        %4571 = vst [vmem:[%s394 + $0x470] sm:$0xff] %v4315
        %4572 = vst [vmem:[%s394 + $0x478] sm:$0xff] %v4316
        %4573 = vst [vmem:[%s394 + $0x480] sm:$0xff] %v4317
        %4574 = vst [vmem:[%s394 + $0x488] sm:$0xff] %v4318
        %4575 = vst [vmem:[%s394 + $0x490] sm:$0xff] %v4319
        %4576 = vst [vmem:[%s394 + $0x498] sm:$0xff] %v4320
        %4577 = vst [vmem:[%s394 + $0x4a0] sm:$0xff] %v4321
        %4578 = vst [vmem:[%s394 + $0x4a8] sm:$0xff] %v4322
        %4579 = vst [vmem:[%s394 + $0x4b0] sm:$0xff] %v4323
        %4580 = vst [vmem:[%s394 + $0x4b8] sm:$0xff] %v4324
        %4581 = vst [vmem:[%s394 + $0x4c0] sm:$0xff] %v4325
        %4582 = vst [vmem:[%s394 + $0x4c8] sm:$0xff] %v4326
        %4583 = vst [vmem:[%s394 + $0x4d0] sm:$0xff] %v4327
        %4584 = vst [vmem:[%s394 + $0x4d8] sm:$0xff] %v4328
        %4585 = vst [vmem:[%s394 + $0x4e0] sm:$0xff] %v4329
        %4586 = vst [vmem:[%s394 + $0x4e8] sm:$0xff] %v4330
        %4587 = vst [vmem:[%s394 + $0x4f0] sm:$0xff] %v4331
        %4588 = vst [vmem:[%s394 + $0x4f8] sm:$0xff] %v4332
        %4589 = vst [vmem:[%s394 + $0x500] sm:$0xff] %v4333
        %4590 = vst [vmem:[%s394 + $0x508] sm:$0xff] %v4334
        %4591 = vst [vmem:[%s394 + $0x510] sm:$0xff] %v4335
        %4592 = vst [vmem:[%s394 + $0x518] sm:$0xff] %v4336
        %4593 = vst [vmem:[%s394 + $0x520] sm:$0xff] %v4337
        %4594 = vst [vmem:[%s394 + $0x528] sm:$0xff] %v4338
        %4595 = vst [vmem:[%s394 + $0x530] sm:$0xff] %v4339
        %4596 = vst [vmem:[%s394 + $0x538] sm:$0xff] %v4340
        %4597 = vst [vmem:[%s394 + $0x540] sm:$0xff] %v4341
        %4598 = vst [vmem:[%s394 + $0x548] sm:$0xff] %v4342
        %4599 = vst [vmem:[%s394 + $0x550] sm:$0xff] %v4343
        %4600 = vst [vmem:[%s394 + $0x558] sm:$0xff] %v4344
        %4601 = vst [vmem:[%s394 + $0x560] sm:$0xff] %v4345
        %4602 = vst [vmem:[%s394 + $0x568] sm:$0xff] %v4346
        %4603 = vst [vmem:[%s394 + $0x570] sm:$0xff] %v4347
        %4604 = vst [vmem:[%s394 + $0x578] sm:$0xff] %v4348
        %4605 = vst [vmem:[%s394 + $0x580] sm:$0xff] %v4349
        %4606 = vst [vmem:[%s394 + $0x588] sm:$0xff] %v4350
        %4607 = vst [vmem:[%s394 + $0x590] sm:$0xff] %v4351
        %4608 = vst [vmem:[%s394 + $0x598] sm:$0xff] %v4352
        %4609 = vst [vmem:[%s394 + $0x5a0] sm:$0xff] %v4353
        %4610 = vst [vmem:[%s394 + $0x5a8] sm:$0xff] %v4354
        %4611 = vst [vmem:[%s394 + $0x5b0] sm:$0xff] %v4355
        %4612 = vst [vmem:[%s394 + $0x5b8] sm:$0xff] %v4356
        %4613 = vst [vmem:[%s394 + $0x5c0] sm:$0xff] %v4357
        %4614 = vst [vmem:[%s394 + $0x5c8] sm:$0xff] %v4358
        %4615 = vst [vmem:[%s394 + $0x5d0] sm:$0xff] %v4359
        %4616 = vst [vmem:[%s394 + $0x5d8] sm:$0xff] %v4360
        %4617 = vst [vmem:[%s394 + $0x5e0] sm:$0xff] %v4361
        %4618 = vst [vmem:[%s394 + $0x5e8] sm:$0xff] %v4362
        %4619 = vst [vmem:[%s394 + $0x5f0] sm:$0xff] %v4363
        %4620 = vst [vmem:[%s394 + $0x5f8] sm:$0xff] %v4364
        %4621 = vst [vmem:[%s394 + $0x600] sm:$0xff] %v4365
        %4622 = vst [vmem:[%s394 + $0x608] sm:$0xff] %v4366
        %4623 = vst [vmem:[%s394 + $0x610] sm:$0xff] %v4367
        %4624 = vst [vmem:[%s394 + $0x618] sm:$0xff] %v4368
        %4625 = vst [vmem:[%s394 + $0x620] sm:$0xff] %v4369
        %4626 = vst [vmem:[%s394 + $0x628] sm:$0xff] %v4370
        %4627 = vst [vmem:[%s394 + $0x630] sm:$0xff] %v4371
        %4628 = vst [vmem:[%s394 + $0x638] sm:$0xff] %v4372
        %4629 = vst [vmem:[%s394 + $0x640] sm:$0xff] %v4373
        %4630 = vst [vmem:[%s394 + $0x648] sm:$0xff] %v4374
        %4631 = vst [vmem:[%s394 + $0x650] sm:$0xff] %v4375
        %4632 = vst [vmem:[%s394 + $0x658] sm:$0xff] %v4376
        %4633 = vst [vmem:[%s394 + $0x660] sm:$0xff] %v4377
        %4634 = vst [vmem:[%s394 + $0x668] sm:$0xff] %v4378
        %4635 = vst [vmem:[%s394 + $0x670] sm:$0xff] %v4379
        %4636 = vst [vmem:[%s394 + $0x678] sm:$0xff] %v4380
        %4637 = vst [vmem:[%s394 + $0x680] sm:$0xff] %v4381
        %4638 = vst [vmem:[%s394 + $0x688] sm:$0xff] %v4382
        %4639 = vst [vmem:[%s394 + $0x690] sm:$0xff] %v4383
        %4640 = vst [vmem:[%s394 + $0x698] sm:$0xff] %v4384
        %4641 = vst [vmem:[%s394 + $0x6a0] sm:$0xff] %v4385
        %4642 = vst [vmem:[%s394 + $0x6a8] sm:$0xff] %v4386
        %4643 = vst [vmem:[%s394 + $0x6b0] sm:$0xff] %v4387
        %4644 = vst [vmem:[%s394 + $0x6b8] sm:$0xff] %v4388
        %4645 = vst [vmem:[%s394 + $0x6c0] sm:$0xff] %v4389
        %4646 = vst [vmem:[%s394 + $0x6c8] sm:$0xff] %v4390
        %4647 = vst [vmem:[%s394 + $0x6d0] sm:$0xff] %v4391
        %4648 = vst [vmem:[%s394 + $0x6d8] sm:$0xff] %v4392
        %4649 = vst [vmem:[%s394 + $0x6e0] sm:$0xff] %v4393
        %4650 = vst [vmem:[%s394 + $0x6e8] sm:$0xff] %v4394
        %4651 = vst [vmem:[%s394 + $0x6f0] sm:$0xff] %v4395
        %4652 = vst [vmem:[%s394 + $0x6f8] sm:$0xff] %v4396
        %4653 = vst [vmem:[%s394 + $0x700] sm:$0xff] %v4397
        %4654 = vst [vmem:[%s394 + $0x708] sm:$0xff] %v4398
        %4655 = vst [vmem:[%s394 + $0x710] sm:$0xff] %v4399
        %4656 = vst [vmem:[%s394 + $0x718] sm:$0xff] %v4400
        %4657 = vst [vmem:[%s394 + $0x720] sm:$0xff] %v4401
        %4658 = vst [vmem:[%s394 + $0x728] sm:$0xff] %v4402
        %4659 = vst [vmem:[%s394 + $0x730] sm:$0xff] %v4403
        %4660 = vst [vmem:[%s394 + $0x738] sm:$0xff] %v4404
        %4661 = vst [vmem:[%s394 + $0x740] sm:$0xff] %v4405
        %4662 = vst [vmem:[%s394 + $0x748] sm:$0xff] %v4406
        %4663 = vst [vmem:[%s394 + $0x750] sm:$0xff] %v4407
        %4664 = vst [vmem:[%s394 + $0x758] sm:$0xff] %v4408
        %4665 = vst [vmem:[%s394 + $0x760] sm:$0xff] %v4409
        %4666 = vst [vmem:[%s394 + $0x768] sm:$0xff] %v4410
        %4667 = vst [vmem:[%s394 + $0x770] sm:$0xff] %v4411
        %4668 = vst [vmem:[%s394 + $0x778] sm:$0xff] %v4412
        %4669 = vst [vmem:[%s394 + $0x780] sm:$0xff] %v4413
        %4670 = vst [vmem:[%s394 + $0x788] sm:$0xff] %v4414
        %4671 = vst [vmem:[%s394 + $0x790] sm:$0xff] %v4415
        %4672 = vst [vmem:[%s394 + $0x798] sm:$0xff] %v4416
        %4673 = vst [vmem:[%s394 + $0x7a0] sm:$0xff] %v4417
        %4674 = vst [vmem:[%s394 + $0x7a8] sm:$0xff] %v4418
        %4675 = vst [vmem:[%s394 + $0x7b0] sm:$0xff] %v4419
        %4676 = vst [vmem:[%s394 + $0x7b8] sm:$0xff] %v4420
        %4677 = vst [vmem:[%s394 + $0x7c0] sm:$0xff] %v4421
        %4678 = vst [vmem:[%s394 + $0x7c8] sm:$0xff] %v4422
        %4679 = vst [vmem:[%s394 + $0x7d0] sm:$0xff] %v4423
        %4680 = vst [vmem:[%s394 + $0x7d8] sm:$0xff] %v4424
        %4681 = vst [vmem:[%s394 + $0x7e0] sm:$0xff] %v4425
        %4682 = vst [vmem:[%s394 + $0x7e8] sm:$0xff] %v4426
        %4683 = vst [vmem:[%s394 + $0x7f0] sm:$0xff] %v4427
        %4684 = vst [vmem:[%s394 + $0x7f8] sm:$0xff] %v4428
        %s4685 = sand.u32 %s243, 1
        %s4686 = scalar_lea.sflag [#allocation4], %s4685
        %s4687 = sand.u32 %s243, 1
        %s4688 = smul.addr %s4687, 2048
        %s4689 = scalar_lea.vmem [#allocation8], %s4688
        // Predicated region
        $region69: #{embeddings_forward.1} parent=55 // pred_check
          %p4690 = pneg %p253
        $region70: #{embeddings_forward.1} parent=55 // pred_check_branch
          %4692 = sbr.rel (%p4690) target = $region72
        $region71: #{embeddings_forward.1} parent=55 // pred_region
          %s4693 = smul.u32 4, %s30
          %s4695 = ssub.s32 32768, 32768
          %4696 = vsyncadd %s4686, %s4695
          %s4697 = smul.addr %s29, 512
          %s4698 = sadd.s32 %s4693, %s4697
          %s4699 = smul.addr %s4698, 128
          %s4700 = scalar_lea.hbm %s9, %s4699
          %s4701 = sshll.u32 %s4689, 4
          %s4702 = int_to_ptr.vmem [resolvable:$true] %s4701
          %4707 = dma.vmem_to_hbm [thread:$0]  %s4702, 32768, %s4700, %s4686, 512, 1024, 32
        $region72: #{embeddings_forward.1} parent=55 // pred_fallthru
          _
      $region56: #{embeddings_forward.1} parent=5 // pred_fallthru
        _
      %p4708 = scmp.le.s32.totalorder 2, %s20
      // Predicated region
      $region73: #{embeddings_forward.1} parent=5 // pred_check
        %p4709 = pneg %p4708
      $region74: #{embeddings_forward.1} parent=5 // pred_check_branch
        %4711 = sbr.rel (%p4709) target = $region76
      $region75: #{embeddings_forward.1} parent=5 // pred_region
        %s4712 = ssub.s32 %s20, 2
        // Predicated region
        $region77: #{embeddings_forward.1} parent=75 // pred_check
          %p4713 = pneg %p259
        $region78: #{embeddings_forward.1} parent=75 // pred_check_branch
          %4715 = sbr.rel (%p4713) target = $region80
        $region79: #{embeddings_forward.1} parent=75 // pred_region
          %s4716 = sand.u32 %s244, 1
          %s4717 = scalar_lea.sflag [#allocation4], %s4716
          %s4718 = sand.u32 %s244, 1
          %s4719 = smul.addr %s4718, 2048
          %s4720 = scalar_lea.vmem [#allocation8], %s4719
          %4721 = dma.done %s4717, 32768
        $region80: #{embeddings_forward.1} parent=75 // pred_fallthru
          _
      $region76: #{embeddings_forward.1} parent=5 // pred_fallthru
        _
    $region6: #{embeddings_forward.1} parent=1 // loop_footer
      %s24 = sadd.s32 1, %s20
    $region7: #{embeddings_forward.1} parent=1 // loop_footer_branch
      %19 = sbr.rel target = $region3
    $region8: #{embeddings_forward.1} parent=1 // loop_exit
      _
    %4722 = vsyncpa [#allocation3], 1
    %s4723 = scalar_lea.sflag [#allocation3], 1
    %4724 = vsyncpa %s4723, 1
    %4725 = vsyncpa [#allocation6], 1
    %4726 = vsyncpa [#allocation4], 1
    %s4727 = scalar_lea.sflag [#allocation4], 1
    %4728 = vsyncpa %s4727, 1

</llo_original>
